<compile_context>
chip_gen: v7x
topology: tpu7x:2x2x1
jax: 0.10.0
libtpu: 0.0.40
codegen_flags: <defaults>
</compile_context>

<pallas_src>
import jax
import jax.numpy as jnp
from jax import lax
from jax.experimental import pallas as pl
from jax.experimental.pallas import tpu as pltpu

EPS = 1e-6
HALO = 2  # radius of the (fused) 5x5 depthwise conv


def _gelu_exact(x):
    # matches torch.nn.GELU() default (erf-based, not tanh approx)
    return 0.5 * x * (1.0 + lax.erf(x * 0.7071067811865476))


def basic_layer_kernel(x_ref, ln_w_ref, ln_b_ref,
                       wcat_ref, bcat_ref,
                       wdw_ref, bdw_ref,
                       wo_ref, bo_ref,
                       o_ref,
                       act_ref, pad_ref):
    d = pl.program_id(1)            # block index within the BasicLayer
    depth = pl.num_programs(1)
    H, W, C = act_ref.shape

    @pl.when(d == 0)
    def _():
        # New image: load the activation carry and (re)zero the halo scratch.
        # Only the interior of pad_ref is written below, so the 2-wide zero
        # border survives across all blocks of this image.
        act_ref[...] = x_ref[0]
        pad_ref[...] = jnp.zeros(pad_ref.shape, pad_ref.dtype)

    x = act_ref[...]                                  # (H, W, C) current activation

    # --- LayerNorm2d: normalize across channels per pixel (rsqrt on EUP) ---
    mu = jnp.mean(x, axis=-1, keepdims=True)
    var = jnp.mean((x - mu) ** 2, axis=-1, keepdims=True)
    y = (x - mu) * lax.rsqrt(var + EPS)
    y = y * ln_w_ref[0] + ln_b_ref[0]                 # (1, C) broadcasts

    # --- fused input_conv + conv1x1: one (H*W, C) @ (C, 2C) MXU call ---
    z = jnp.dot(y.reshape(H * W, C), wcat_ref[0],
                preferred_element_type=jnp.float32) + bcat_ref[0]
    fea = z[:, :C].reshape(H, W, C)                   # input_conv output
    fea1 = z[:, C:].reshape(H, W, C)                  # conv1x1 branch

    # --- fused depthwise conv (3x3 folded into the 5x5 weights) ---
    pad_ref[HALO:HALO + H, HALO:HALO + W, :] = fea
    wd = wdw_ref[0]                                   # (25, C), hoisted once
    acc = jnp.broadcast_to(bdw_ref[0].reshape(1, 1, C), (H, W, C))
    for dx in range(5):                               # 5 sublane-shifted loads total
        col = pad_ref[:, dx:dx + W, :]                # (H + 2*HALO, W, C)
        for dy in range(5):                           # H shifts: free leading-dim slices
            k = dy * 5 + dx
            acc = acc + col[dy:dy + H] * wd[k:k + 1, :]
    # acc == fea2 + fea3 (3x3 + 5x5 depthwise, biases included)

    # --- gate, exact GELU, out_conv, residual ---
    g = _gelu_exact(fea1 * acc)
    out = jnp.dot(g.reshape(H * W, C), wo_ref[0],
                  preferred_element_type=jnp.float32) + bo_ref[0]
    res = out.reshape(H, W, C) + x

    act_ref[...] = res                                # carry to next block (stays in VMEM)

    @pl.when(d == depth - 1)
    def _():
        o_ref[0] = res.astype(o_ref.dtype)            # single HBM writeback per image


def _prep_params(params):
    """Stack per-block params over depth and apply the algebraic fusions."""
    C = params[0]["w_in"].shape[0]
    ln_w, ln_b, w_cat, b_cat, w_dw, b_dw, wo, bo = ([] for _ in range(8))
    for p in params:
        ln_w.append(p["ln_w"])
        ln_b.append(p["ln_b"])
        # fuse input_conv and conv1x1 into a single (C, 2C) matmul
        w_cat.append(jnp.concatenate([p["w_in"], p["w_in"] @ p["w1"]], axis=1))
        b_cat.append(jnp.concatenate([p["b_in"], p["b_in"] @ p["w1"] + p["b1"]],
                                     axis=1))
        # fold the 3x3 depthwise kernel into the center of the 5x5 one
        wd = p["w5"].reshape(5, 5, C).at[1:4, 1:4, :].add(p["w3"].reshape(3, 3, C))
        w_dw.append(wd.reshape(25, C))
        b_dw.append(p["b3"] + p["b5"])
        wo.append(p["wo"])
        bo.append(p["bo"])
    s = lambda xs: jnp.stack(xs, 0)
    return (s(ln_w), s(ln_b), s(w_cat), s(b_cat), s(w_dw), s(b_dw), s(wo), s(bo))


def basic_layer(x, params):
    """x: (N, H, W, C) float32; params: list of per-block parameter dicts.

    Runs the whole stack of Refine_Blocks in one pallas_call; the activation
    stays resident in VMEM across blocks.
    """
    N, H, W, C = x.shape
    depth = len(params)
    ln_w, ln_b, w_cat, b_cat, w_dw, b_dw, wo, bo = _prep_params(params)

    def per_block(shape):
        return pl.BlockSpec((1,) + shape, lambda n, d: (d,) + (0,) * len(shape))

    return pl.pallas_call(
        basic_layer_kernel,
        out_shape=jax.ShapeDtypeStruct((N, H, W, C), x.dtype),
        grid_spec=pltpu.PrefetchScalarGridSpec(
            num_scalar_prefetch=0,
            grid=(N, depth),                    # depth inner -> activation resident
            in_specs=[
                pl.BlockSpec((1, H, W, C), lambda n, d: (n, 0, 0, 0)),  # x (fetched once per n)
                per_block((1, C)),              # ln weight
                per_block((1, C)),              # ln bias
                per_block((C, 2 * C)),          # fused input_conv|conv1x1 weight
                per_block((1, 2 * C)),          # fused input_conv|conv1x1 bias
                per_block((25, C)),             # fused depthwise (5x5 + 3x3) weight
                per_block((1, C)),              # fused depthwise bias
                per_block((C, C)),              # out_conv weight
                per_block((1, C)),              # out_conv bias
            ],
            out_specs=pl.BlockSpec((1, H, W, C), lambda n, d: (n, 0, 0, 0)),
            scratch_shapes=[
                pltpu.VMEM((H, W, C), jnp.float32),                        # activation carry
                pltpu.VMEM((H + 2 * HALO, W + 2 * HALO, C), jnp.float32),  # halo pad scratch
            ],
        ),
        compiler_params=pltpu.CompilerParams(
            dimension_semantics=("parallel", "arbitrary"),
            vmem_limit_bytes=32 * 1024 * 1024,   # safe on v5e/v6e/v7x
        ),
    )(x, ln_w, ln_b, w_cat, b_cat, w_dw, b_dw, wo, bo)


# ---------------- pure-JAX reference (for correctness check) ----------------
def refine_block_ref(x, p):
    N, H, W, C = x.shape
    mu = x.mean(-1, keepdims=True)
    var = ((x - mu) ** 2).mean(-1, keepdims=True)
    y = (x - mu) / jnp.sqrt(var + EPS) * p["ln_w"] + p["ln_b"]
    fea = y @ p["w_in"] + p["b_in"]
    fea1 = fea @ p["w1"] + p["b1"]
    xp = jnp.pad(fea, ((0, 0), (2, 2), (2, 2), (0, 0)))
    fea2 = sum(xp[:, 1 + dy:1 + dy + H, 1 + dx:1 + dx + W, :] * p["w3"][dy * 3 + dx]
               for dy in range(3) for dx in range(3)) + p["b3"]
    fea3 = sum(xp[:, dy:dy + H, dx:dx + W, :] * p["w5"][dy * 5 + dx]
               for dy in range(5) for dx in range(5)) + p["b5"]
    g = _gelu_exact(fea1 * (fea2 + fea3))
    return g @ p["wo"] + p["bo"] + x


def basic_layer_ref(x, params):
    for p in params:
        x = refine_block_ref(x, p)
    return x


# ---------------- deterministic parameter init ----------------
def init_params(key, dim, depth):
    params = []
    for d in range(depth):
        ks = jax.random.split(jax.random.fold_in(key, d), 10)
        params.append(dict(
            ln_w=jnp.ones((1, dim), jnp.float32),
            ln_b=jnp.zeros((1, dim), jnp.float32),
            w_in=jax.random.normal(ks[0], (dim, dim), jnp.float32) * 0.2,
            b_in=jax.random.normal(ks[1], (1, dim), jnp.float32) * 0.05,
            w1=jax.random.normal(ks[2], (dim, dim), jnp.float32) * 0.2,
            b1=jax.random.normal(ks[3], (1, dim), jnp.float32) * 0.05,
            w3=jax.random.normal(ks[4], (9, dim), jnp.float32) * 0.2,
            b3=jax.random.normal(ks[5], (1, dim), jnp.float32) * 0.05,
            w5=jax.random.normal(ks[6], (25, dim), jnp.float32) * 0.1,
            b5=jax.random.normal(ks[7], (1, dim), jnp.float32) * 0.05,
            wo=jax.random.normal(ks[8], (dim, dim), jnp.float32) * 0.2,
            bo=jax.random.normal(ks[9], (1, dim), jnp.float32) * 0.05,
        ))
    return params


if __name__ == "__main__":
    key = jax.random.PRNGKey(0)
    N, C, H, W = 2, 8, 16, 16   # small shapes: batch=2, channels(dim)=8, spatial=16
    depth = 2
    k_x, k_p = jax.random.split(key)

    # module input is NCHW (PyTorch convention)
    x_nchw = jax.random.normal(k_x, (N, C, H, W), jnp.float32)
    params = init_params(k_p, C, depth)

    # layout: convert NCHW -> NHWC for the kernel, back afterwards
    x_nhwc = jnp.transpose(x_nchw, (0, 2, 3, 1))

    out_nhwc = jax.block_until_ready(basic_layer(x_nhwc, params))
    out_nchw = jnp.transpose(out_nhwc, (0, 3, 1, 2))

    ref_nhwc = basic_layer_ref(x_nhwc, params)
    err = float(jnp.max(jnp.abs(out_nhwc - ref_nhwc)))
    assert err < 1e-4, f"mismatch vs reference: {err}"

    print("KERNEL_OK")
</pallas_src>

<mosaic_0001>
module attributes {stable_mosaic.version = 11 : i64} {
  func.func @basic_layer_kernel(%arg0: i32, %arg1: i32, %arg2: memref<1x16x16x8xf32, #tpu.memory_space<vmem>>, %arg3: memref<1x1x8xf32, #tpu.memory_space<vmem>>, %arg4: memref<1x1x8xf32, #tpu.memory_space<vmem>>, %arg5: memref<1x8x16xf32, #tpu.memory_space<vmem>>, %arg6: memref<1x1x16xf32, #tpu.memory_space<vmem>>, %arg7: memref<1x25x8xf32, #tpu.memory_space<vmem>>, %arg8: memref<1x1x8xf32, #tpu.memory_space<vmem>>, %arg9: memref<1x8x8xf32, #tpu.memory_space<vmem>>, %arg10: memref<1x1x8xf32, #tpu.memory_space<vmem>>, %arg11: memref<1x16x16x8xf32, #tpu.memory_space<vmem>>, %arg12: memref<16x16x8xf32, #tpu.memory_space<vmem>>, %arg13: memref<20x20x8xf32, #tpu.memory_space<vmem>>) attributes {dimension_semantics = [#tpu.dimension_semantics<parallel>, #tpu.dimension_semantics<arbitrary>], iteration_bounds = array<i64: 2, 2>, scalar_prefetch = 0 : i64, scratch_operands = 2 : i64, tpu.core_type = #tpu.core_type<tc>, window_params = [{transform_indices = @transform_0, window_bounds = array<i64: 1, 16, 16, 8>}, {transform_indices = @transform_1, window_bounds = array<i64: 1, 1, 8>}, {transform_indices = @transform_2, window_bounds = array<i64: 1, 1, 8>}, {transform_indices = @transform_3, window_bounds = array<i64: 1, 8, 16>}, {transform_indices = @transform_4, window_bounds = array<i64: 1, 1, 16>}, {transform_indices = @transform_5, window_bounds = array<i64: 1, 25, 8>}, {transform_indices = @transform_6, window_bounds = array<i64: 1, 1, 8>}, {transform_indices = @transform_7, window_bounds = array<i64: 1, 8, 8>}, {transform_indices = @transform_8, window_bounds = array<i64: 1, 1, 8>}, {transform_indices = @transform_9, window_bounds = array<i64: 1, 16, 16, 8>}]} {
    %c0_i32 = arith.constant 0 : i32
    %0 = arith.cmpi eq, %arg1, %c0_i32 : i32
    %1 = arith.extui %0 : i1 to i32
    %c0_i32_0 = arith.constant 0 : i32
    %2 = arith.cmpi ne, %1, %c0_i32_0 : i32
    scf.if %2 {
      %c0_54 = arith.constant 0 : index
      %c0_55 = arith.constant 0 : index
      %c0_56 = arith.constant 0 : index
      %c0_57 = arith.constant 0 : index
      %230 = vector.load %arg2[%c0_54, %c0_55, %c0_56, %c0_57] : memref<1x16x16x8xf32, #tpu.memory_space<vmem>>, vector<1x16x16x8xf32>
      %231 = vector.shape_cast %230 : vector<1x16x16x8xf32> to vector<16x16x8xf32>
      %c0_58 = arith.constant 0 : index
      %c0_59 = arith.constant 0 : index
      %c0_60 = arith.constant 0 : index
      %232 = vector.load %arg12[%c0_58, %c0_59, %c0_60] : memref<16x16x8xf32, #tpu.memory_space<vmem>>, vector<16x16x8xf32>
      tpu.vector_store %arg12[%c0_58, %c0_59, %c0_60], %231 {strides = array<i32>} : memref<16x16x8xf32, #tpu.memory_space<vmem>>, vector<16x16x8xf32>,
      %cst_61 = arith.constant 0.000000e+00 : f32
      %233 = vector.broadcast %cst_61 : f32 to vector<20x20x8xf32>
      %c0_62 = arith.constant 0 : index
      %c0_63 = arith.constant 0 : index
      %c0_64 = arith.constant 0 : index
      %234 = vector.load %arg13[%c0_62, %c0_63, %c0_64] : memref<20x20x8xf32, #tpu.memory_space<vmem>>, vector<20x20x8xf32>
      tpu.vector_store %arg13[%c0_62, %c0_63, %c0_64], %233 {strides = array<i32>} : memref<20x20x8xf32, #tpu.memory_space<vmem>>, vector<20x20x8xf32>,
    } else {
    }
    %c0 = arith.constant 0 : index
    %c0_1 = arith.constant 0 : index
    %c0_2 = arith.constant 0 : index
    %3 = vector.load %arg12[%c0, %c0_1, %c0_2] : memref<16x16x8xf32, #tpu.memory_space<vmem>>, vector<16x16x8xf32>
    %cst = arith.constant dense<0.000000e+00> : vector<16x16xf32>
    %4 = vector.multi_reduction <add>, %3, %cst [2] : vector<16x16x8xf32> to vector<16x16xf32>
    %5 = vector.shape_cast %4 : vector<16x16xf32> to vector<16x16x1xf32>
    %cst_3 = arith.constant 8.000000e+00 : f32
    %6 = vector.broadcast %cst_3 : f32 to vector<16x16x1xf32>
    %7 = arith.divf %5, %6 : vector<16x16x1xf32>
    %8 = vector.broadcast %7 : vector<16x16x1xf32> to vector<16x16x8xf32>
    %9 = arith.subf %3, %8 : vector<16x16x8xf32>
    %10 = arith.mulf %9, %9 : vector<16x16x8xf32>
    %cst_4 = arith.constant dense<0.000000e+00> : vector<16x16xf32>
    %11 = vector.multi_reduction <add>, %10, %cst_4 [2] : vector<16x16x8xf32> to vector<16x16xf32>
    %12 = vector.shape_cast %11 : vector<16x16xf32> to vector<16x16x1xf32>
    %cst_5 = arith.constant 8.000000e+00 : f32
    %13 = vector.broadcast %cst_5 : f32 to vector<16x16x1xf32>
    %14 = arith.divf %12, %13 : vector<16x16x1xf32>
    %15 = vector.broadcast %7 : vector<16x16x1xf32> to vector<16x16x8xf32>
    %16 = arith.subf %3, %15 : vector<16x16x8xf32>
    %cst_6 = arith.constant 9.99999997E-7 : f32
    %17 = vector.broadcast %cst_6 : f32 to vector<16x16x1xf32>
    %18 = arith.addf %14, %17 : vector<16x16x1xf32>
    %19 = math.rsqrt %18 : vector<16x16x1xf32>
    %20 = vector.broadcast %19 : vector<16x16x1xf32> to vector<16x16x8xf32>
    %21 = arith.mulf %16, %20 : vector<16x16x8xf32>
    %c0_7 = arith.constant 0 : index
    %c0_8 = arith.constant 0 : index
    %c0_9 = arith.constant 0 : index
    %22 = vector.load %arg3[%c0_7, %c0_8, %c0_9] : memref<1x1x8xf32, #tpu.memory_space<vmem>>, vector<1x1x8xf32>
    %23 = vector.shape_cast %22 : vector<1x1x8xf32> to vector<1x8xf32>
    %24 = vector.shape_cast %23 : vector<1x8xf32> to vector<1x1x8xf32>
    %25 = vector.broadcast %24 : vector<1x1x8xf32> to vector<16x16x8xf32>
    %26 = arith.mulf %21, %25 : vector<16x16x8xf32>
    %c0_10 = arith.constant 0 : index
    %c0_11 = arith.constant 0 : index
    %c0_12 = arith.constant 0 : index
    %27 = vector.load %arg4[%c0_10, %c0_11, %c0_12] : memref<1x1x8xf32, #tpu.memory_space<vmem>>, vector<1x1x8xf32>
    %28 = vector.shape_cast %27 : vector<1x1x8xf32> to vector<1x8xf32>
    %29 = vector.shape_cast %28 : vector<1x8xf32> to vector<1x1x8xf32>
    %30 = vector.broadcast %29 : vector<1x1x8xf32> to vector<16x16x8xf32>
    %31 = arith.addf %26, %30 : vector<16x16x8xf32>
    %32 = vector.shape_cast %31 : vector<16x16x8xf32> to vector<256x8xf32>
    %c0_13 = arith.constant 0 : index
    %c0_14 = arith.constant 0 : index
    %c0_15 = arith.constant 0 : index
    %33 = vector.load %arg5[%c0_13, %c0_14, %c0_15] : memref<1x8x16xf32, #tpu.memory_space<vmem>>, vector<1x8x16xf32>
    %34 = vector.shape_cast %33 : vector<1x8x16xf32> to vector<8x16xf32>
    %cst_16 = arith.constant dense<0.000000e+00> : vector<256x16xf32>
    %35 = tpu.matmul %32, %34, %cst_16 {dimension_numbers = #tpu.dot_dimension_numbers<[1], [0], [0], [1], [0, 0, 1, 1], [], []>} : vector<256x8xf32>, vector<8x16xf32>, vector<256x16xf32> -> vector<256x16xf32>
    %c0_17 = arith.constant 0 : index
    %c0_18 = arith.constant 0 : index
    %c0_19 = arith.constant 0 : index
    %36 = vector.load %arg6[%c0_17, %c0_18, %c0_19] : memref<1x1x16xf32, #tpu.memory_space<vmem>>, vector<1x1x16xf32>
    %37 = vector.shape_cast %36 : vector<1x1x16xf32> to vector<1x16xf32>
    %38 = vector.broadcast %37 : vector<1x16xf32> to vector<256x16xf32>
    %39 = arith.addf %35, %38 : vector<256x16xf32>
    %40 = vector.extract_strided_slice %39 {offsets = [0, 0], sizes = [256, 8], strides = [1, 1]} : vector<256x16xf32> to vector<256x8xf32>
    %41 = vector.shape_cast %40 : vector<256x8xf32> to vector<16x16x8xf32>
    %42 = vector.extract_strided_slice %39 {offsets = [0, 8], sizes = [256, 8], strides = [1, 1]} : vector<256x16xf32> to vector<256x8xf32>
    %43 = vector.shape_cast %42 : vector<256x8xf32> to vector<16x16x8xf32>
    %c2 = arith.constant 2 : index
    %c2_20 = arith.constant 2 : index
    %c0_21 = arith.constant 0 : index
    %44 = vector.load %arg13[%c2, %c2_20, %c0_21] : memref<20x20x8xf32, #tpu.memory_space<vmem>>, vector<16x16x8xf32>
    tpu.vector_store %arg13[%c2, %c2_20, %c0_21], %41 {strides = array<i32>} : memref<20x20x8xf32, #tpu.memory_space<vmem>>, vector<16x16x8xf32>,
    %c0_22 = arith.constant 0 : index
    %c0_23 = arith.constant 0 : index
    %c0_24 = arith.constant 0 : index
    %45 = vector.load %arg7[%c0_22, %c0_23, %c0_24] : memref<1x25x8xf32, #tpu.memory_space<vmem>>, vector<1x25x8xf32>
    %46 = vector.shape_cast %45 : vector<1x25x8xf32> to vector<25x8xf32>
    %c0_25 = arith.constant 0 : index
    %c0_26 = arith.constant 0 : index
    %c0_27 = arith.constant 0 : index
    %47 = vector.load %arg8[%c0_25, %c0_26, %c0_27] : memref<1x1x8xf32, #tpu.memory_space<vmem>>, vector<1x1x8xf32>
    %48 = vector.shape_cast %47 : vector<1x1x8xf32> to vector<1x8xf32>
    %49 = vector.shape_cast %48 : vector<1x8xf32> to vector<1x1x8xf32>
    %50 = vector.shape_cast %49 : vector<1x1x8xf32> to vector<1x1x8xf32>
    %51 = vector.broadcast %50 : vector<1x1x8xf32> to vector<16x16x8xf32>
    %c0_28 = arith.constant 0 : index
    %c0_29 = arith.constant 0 : index
    %c0_30 = arith.constant 0 : index
    %52 = vector.load %arg13[%c0_28, %c0_29, %c0_30] : memref<20x20x8xf32, #tpu.memory_space<vmem>>, vector<20x16x8xf32>
    %53 = vector.extract_strided_slice %52 {offsets = [0, 0, 0], sizes = [16, 16, 8], strides = [1, 1, 1]} : vector<20x16x8xf32> to vector<16x16x8xf32>
    %54 = vector.extract_strided_slice %46 {offsets = [0, 0], sizes = [1, 8], strides = [1, 1]} : vector<25x8xf32> to vector<1x8xf32>
    %55 = vector.shape_cast %54 : vector<1x8xf32> to vector<1x1x8xf32>
    %56 = vector.broadcast %55 : vector<1x1x8xf32> to vector<16x16x8xf32>
    %57 = arith.mulf %53, %56 : vector<16x16x8xf32>
    %58 = arith.addf %51, %57 : vector<16x16x8xf32>
    %59 = vector.extract_strided_slice %52 {offsets = [1, 0, 0], sizes = [16, 16, 8], strides = [1, 1, 1]} : vector<20x16x8xf32> to vector<16x16x8xf32>
    %60 = vector.extract_strided_slice %46 {offsets = [5, 0], sizes = [1, 8], strides = [1, 1]} : vector<25x8xf32> to vector<1x8xf32>
    %61 = vector.shape_cast %60 : vector<1x8xf32> to vector<1x1x8xf32>
    %62 = vector.broadcast %61 : vector<1x1x8xf32> to vector<16x16x8xf32>
    %63 = arith.mulf %59, %62 : vector<16x16x8xf32>
    %64 = arith.addf %58, %63 : vector<16x16x8xf32>
    %65 = vector.extract_strided_slice %52 {offsets = [2, 0, 0], sizes = [16, 16, 8], strides = [1, 1, 1]} : vector<20x16x8xf32> to vector<16x16x8xf32>
    %66 = vector.extract_strided_slice %46 {offsets = [10, 0], sizes = [1, 8], strides = [1, 1]} : vector<25x8xf32> to vector<1x8xf32>
    %67 = vector.shape_cast %66 : vector<1x8xf32> to vector<1x1x8xf32>
    %68 = vector.broadcast %67 : vector<1x1x8xf32> to vector<16x16x8xf32>
    %69 = arith.mulf %65, %68 : vector<16x16x8xf32>
    %70 = arith.addf %64, %69 : vector<16x16x8xf32>
    %71 = vector.extract_strided_slice %52 {offsets = [3, 0, 0], sizes = [16, 16, 8], strides = [1, 1, 1]} : vector<20x16x8xf32> to vector<16x16x8xf32>
    %72 = vector.extract_strided_slice %46 {offsets = [15, 0], sizes = [1, 8], strides = [1, 1]} : vector<25x8xf32> to vector<1x8xf32>
    %73 = vector.shape_cast %72 : vector<1x8xf32> to vector<1x1x8xf32>
    %74 = vector.broadcast %73 : vector<1x1x8xf32> to vector<16x16x8xf32>
    %75 = arith.mulf %71, %74 : vector<16x16x8xf32>
    %76 = arith.addf %70, %75 : vector<16x16x8xf32>
    %77 = vector.extract_strided_slice %52 {offsets = [4, 0, 0], sizes = [16, 16, 8], strides = [1, 1, 1]} : vector<20x16x8xf32> to vector<16x16x8xf32>
    %78 = vector.extract_strided_slice %46 {offsets = [20, 0], sizes = [1, 8], strides = [1, 1]} : vector<25x8xf32> to vector<1x8xf32>
    %79 = vector.shape_cast %78 : vector<1x8xf32> to vector<1x1x8xf32>
    %80 = vector.broadcast %79 : vector<1x1x8xf32> to vector<16x16x8xf32>
    %81 = arith.mulf %77, %80 : vector<16x16x8xf32>
    %82 = arith.addf %76, %81 : vector<16x16x8xf32>
    %c0_31 = arith.constant 0 : index
    %c1 = arith.constant 1 : index
    %c0_32 = arith.constant 0 : index
    %83 = vector.load %arg13[%c0_31, %c1, %c0_32] : memref<20x20x8xf32, #tpu.memory_space<vmem>>, vector<20x16x8xf32>
    %84 = vector.extract_strided_slice %83 {offsets = [0, 0, 0], sizes = [16, 16, 8], strides = [1, 1, 1]} : vector<20x16x8xf32> to vector<16x16x8xf32>
    %85 = vector.extract_strided_slice %46 {offsets = [1, 0], sizes = [1, 8], strides = [1, 1]} : vector<25x8xf32> to vector<1x8xf32>
    %86 = vector.shape_cast %85 : vector<1x8xf32> to vector<1x1x8xf32>
    %87 = vector.broadcast %86 : vector<1x1x8xf32> to vector<16x16x8xf32>
    %88 = arith.mulf %84, %87 : vector<16x16x8xf32>
    %89 = arith.addf %82, %88 : vector<16x16x8xf32>
    %90 = vector.extract_strided_slice %83 {offsets = [1, 0, 0], sizes = [16, 16, 8], strides = [1, 1, 1]} : vector<20x16x8xf32> to vector<16x16x8xf32>
    %91 = vector.extract_strided_slice %46 {offsets = [6, 0], sizes = [1, 8], strides = [1, 1]} : vector<25x8xf32> to vector<1x8xf32>
    %92 = vector.shape_cast %91 : vector<1x8xf32> to vector<1x1x8xf32>
    %93 = vector.broadcast %92 : vector<1x1x8xf32> to vector<16x16x8xf32>
    %94 = arith.mulf %90, %93 : vector<16x16x8xf32>
    %95 = arith.addf %89, %94 : vector<16x16x8xf32>
    %96 = vector.extract_strided_slice %83 {offsets = [2, 0, 0], sizes = [16, 16, 8], strides = [1, 1, 1]} : vector<20x16x8xf32> to vector<16x16x8xf32>
    %97 = vector.extract_strided_slice %46 {offsets = [11, 0], sizes = [1, 8], strides = [1, 1]} : vector<25x8xf32> to vector<1x8xf32>
    %98 = vector.shape_cast %97 : vector<1x8xf32> to vector<1x1x8xf32>
    %99 = vector.broadcast %98 : vector<1x1x8xf32> to vector<16x16x8xf32>
    %100 = arith.mulf %96, %99 : vector<16x16x8xf32>
    %101 = arith.addf %95, %100 : vector<16x16x8xf32>
    %102 = vector.extract_strided_slice %83 {offsets = [3, 0, 0], sizes = [16, 16, 8], strides = [1, 1, 1]} : vector<20x16x8xf32> to vector<16x16x8xf32>
    %103 = vector.extract_strided_slice %46 {offsets = [16, 0], sizes = [1, 8], strides = [1, 1]} : vector<25x8xf32> to vector<1x8xf32>
    %104 = vector.shape_cast %103 : vector<1x8xf32> to vector<1x1x8xf32>
    %105 = vector.broadcast %104 : vector<1x1x8xf32> to vector<16x16x8xf32>
    %106 = arith.mulf %102, %105 : vector<16x16x8xf32>
    %107 = arith.addf %101, %106 : vector<16x16x8xf32>
    %108 = vector.extract_strided_slice %83 {offsets = [4, 0, 0], sizes = [16, 16, 8], strides = [1, 1, 1]} : vector<20x16x8xf32> to vector<16x16x8xf32>
    %109 = vector.extract_strided_slice %46 {offsets = [21, 0], sizes = [1, 8], strides = [1, 1]} : vector<25x8xf32> to vector<1x8xf32>
    %110 = vector.shape_cast %109 : vector<1x8xf32> to vector<1x1x8xf32>
    %111 = vector.broadcast %110 : vector<1x1x8xf32> to vector<16x16x8xf32>
    %112 = arith.mulf %108, %111 : vector<16x16x8xf32>
    %113 = arith.addf %107, %112 : vector<16x16x8xf32>
    %c0_33 = arith.constant 0 : index
    %c2_34 = arith.constant 2 : index
    %c0_35 = arith.constant 0 : index
    %114 = vector.load %arg13[%c0_33, %c2_34, %c0_35] : memref<20x20x8xf32, #tpu.memory_space<vmem>>, vector<20x16x8xf32>
    %115 = vector.extract_strided_slice %114 {offsets = [0, 0, 0], sizes = [16, 16, 8], strides = [1, 1, 1]} : vector<20x16x8xf32> to vector<16x16x8xf32>
    %116 = vector.extract_strided_slice %46 {offsets = [2, 0], sizes = [1, 8], strides = [1, 1]} : vector<25x8xf32> to vector<1x8xf32>
    %117 = vector.shape_cast %116 : vector<1x8xf32> to vector<1x1x8xf32>
    %118 = vector.broadcast %117 : vector<1x1x8xf32> to vector<16x16x8xf32>
    %119 = arith.mulf %115, %118 : vector<16x16x8xf32>
    %120 = arith.addf %113, %119 : vector<16x16x8xf32>
    %121 = vector.extract_strided_slice %114 {offsets = [1, 0, 0], sizes = [16, 16, 8], strides = [1, 1, 1]} : vector<20x16x8xf32> to vector<16x16x8xf32>
    %122 = vector.extract_strided_slice %46 {offsets = [7, 0], sizes = [1, 8], strides = [1, 1]} : vector<25x8xf32> to vector<1x8xf32>
    %123 = vector.shape_cast %122 : vector<1x8xf32> to vector<1x1x8xf32>
    %124 = vector.broadcast %123 : vector<1x1x8xf32> to vector<16x16x8xf32>
    %125 = arith.mulf %121, %124 : vector<16x16x8xf32>
    %126 = arith.addf %120, %125 : vector<16x16x8xf32>
    %127 = vector.extract_strided_slice %114 {offsets = [2, 0, 0], sizes = [16, 16, 8], strides = [1, 1, 1]} : vector<20x16x8xf32> to vector<16x16x8xf32>
    %128 = vector.extract_strided_slice %46 {offsets = [12, 0], sizes = [1, 8], strides = [1, 1]} : vector<25x8xf32> to vector<1x8xf32>
    %129 = vector.shape_cast %128 : vector<1x8xf32> to vector<1x1x8xf32>
    %130 = vector.broadcast %129 : vector<1x1x8xf32> to vector<16x16x8xf32>
    %131 = arith.mulf %127, %130 : vector<16x16x8xf32>
    %132 = arith.addf %126, %131 : vector<16x16x8xf32>
    %133 = vector.extract_strided_slice %114 {offsets = [3, 0, 0], sizes = [16, 16, 8], strides = [1, 1, 1]} : vector<20x16x8xf32> to vector<16x16x8xf32>
    %134 = vector.extract_strided_slice %46 {offsets = [17, 0], sizes = [1, 8], strides = [1, 1]} : vector<25x8xf32> to vector<1x8xf32>
    %135 = vector.shape_cast %134 : vector<1x8xf32> to vector<1x1x8xf32>
    %136 = vector.broadcast %135 : vector<1x1x8xf32> to vector<16x16x8xf32>
    %137 = arith.mulf %133, %136 : vector<16x16x8xf32>
    %138 = arith.addf %132, %137 : vector<16x16x8xf32>
    %139 = vector.extract_strided_slice %114 {offsets = [4, 0, 0], sizes = [16, 16, 8], strides = [1, 1, 1]} : vector<20x16x8xf32> to vector<16x16x8xf32>
    %140 = vector.extract_strided_slice %46 {offsets = [22, 0], sizes = [1, 8], strides = [1, 1]} : vector<25x8xf32> to vector<1x8xf32>
    %141 = vector.shape_cast %140 : vector<1x8xf32> to vector<1x1x8xf32>
    %142 = vector.broadcast %141 : vector<1x1x8xf32> to vector<16x16x8xf32>
    %143 = arith.mulf %139, %142 : vector<16x16x8xf32>
    %144 = arith.addf %138, %143 : vector<16x16x8xf32>
    %c0_36 = arith.constant 0 : index
    %c3 = arith.constant 3 : index
    %c0_37 = arith.constant 0 : index
    %145 = vector.load %arg13[%c0_36, %c3, %c0_37] : memref<20x20x8xf32, #tpu.memory_space<vmem>>, vector<20x16x8xf32>
    %146 = vector.extract_strided_slice %145 {offsets = [0, 0, 0], sizes = [16, 16, 8], strides = [1, 1, 1]} : vector<20x16x8xf32> to vector<16x16x8xf32>
    %147 = vector.extract_strided_slice %46 {offsets = [3, 0], sizes = [1, 8], strides = [1, 1]} : vector<25x8xf32> to vector<1x8xf32>
    %148 = vector.shape_cast %147 : vector<1x8xf32> to vector<1x1x8xf32>
    %149 = vector.broadcast %148 : vector<1x1x8xf32> to vector<16x16x8xf32>
    %150 = arith.mulf %146, %149 : vector<16x16x8xf32>
    %151 = arith.addf %144, %150 : vector<16x16x8xf32>
    %152 = vector.extract_strided_slice %145 {offsets = [1, 0, 0], sizes = [16, 16, 8], strides = [1, 1, 1]} : vector<20x16x8xf32> to vector<16x16x8xf32>
    %153 = vector.extract_strided_slice %46 {offsets = [8, 0], sizes = [1, 8], strides = [1, 1]} : vector<25x8xf32> to vector<1x8xf32>
    %154 = vector.shape_cast %153 : vector<1x8xf32> to vector<1x1x8xf32>
    %155 = vector.broadcast %154 : vector<1x1x8xf32> to vector<16x16x8xf32>
    %156 = arith.mulf %152, %155 : vector<16x16x8xf32>
    %157 = arith.addf %151, %156 : vector<16x16x8xf32>
    %158 = vector.extract_strided_slice %145 {offsets = [2, 0, 0], sizes = [16, 16, 8], strides = [1, 1, 1]} : vector<20x16x8xf32> to vector<16x16x8xf32>
    %159 = vector.extract_strided_slice %46 {offsets = [13, 0], sizes = [1, 8], strides = [1, 1]} : vector<25x8xf32> to vector<1x8xf32>
    %160 = vector.shape_cast %159 : vector<1x8xf32> to vector<1x1x8xf32>
    %161 = vector.broadcast %160 : vector<1x1x8xf32> to vector<16x16x8xf32>
    %162 = arith.mulf %158, %161 : vector<16x16x8xf32>
    %163 = arith.addf %157, %162 : vector<16x16x8xf32>
    %164 = vector.extract_strided_slice %145 {offsets = [3, 0, 0], sizes = [16, 16, 8], strides = [1, 1, 1]} : vector<20x16x8xf32> to vector<16x16x8xf32>
    %165 = vector.extract_strided_slice %46 {offsets = [18, 0], sizes = [1, 8], strides = [1, 1]} : vector<25x8xf32> to vector<1x8xf32>
    %166 = vector.shape_cast %165 : vector<1x8xf32> to vector<1x1x8xf32>
    %167 = vector.broadcast %166 : vector<1x1x8xf32> to vector<16x16x8xf32>
    %168 = arith.mulf %164, %167 : vector<16x16x8xf32>
    %169 = arith.addf %163, %168 : vector<16x16x8xf32>
    %170 = vector.extract_strided_slice %145 {offsets = [4, 0, 0], sizes = [16, 16, 8], strides = [1, 1, 1]} : vector<20x16x8xf32> to vector<16x16x8xf32>
    %171 = vector.extract_strided_slice %46 {offsets = [23, 0], sizes = [1, 8], strides = [1, 1]} : vector<25x8xf32> to vector<1x8xf32>
    %172 = vector.shape_cast %171 : vector<1x8xf32> to vector<1x1x8xf32>
    %173 = vector.broadcast %172 : vector<1x1x8xf32> to vector<16x16x8xf32>
    %174 = arith.mulf %170, %173 : vector<16x16x8xf32>
    %175 = arith.addf %169, %174 : vector<16x16x8xf32>
    %c0_38 = arith.constant 0 : index
    %c4 = arith.constant 4 : index
    %c0_39 = arith.constant 0 : index
    %176 = vector.load %arg13[%c0_38, %c4, %c0_39] : memref<20x20x8xf32, #tpu.memory_space<vmem>>, vector<20x16x8xf32>
    %177 = vector.extract_strided_slice %176 {offsets = [0, 0, 0], sizes = [16, 16, 8], strides = [1, 1, 1]} : vector<20x16x8xf32> to vector<16x16x8xf32>
    %178 = vector.extract_strided_slice %46 {offsets = [4, 0], sizes = [1, 8], strides = [1, 1]} : vector<25x8xf32> to vector<1x8xf32>
    %179 = vector.shape_cast %178 : vector<1x8xf32> to vector<1x1x8xf32>
    %180 = vector.broadcast %179 : vector<1x1x8xf32> to vector<16x16x8xf32>
    %181 = arith.mulf %177, %180 : vector<16x16x8xf32>
    %182 = arith.addf %175, %181 : vector<16x16x8xf32>
    %183 = vector.extract_strided_slice %176 {offsets = [1, 0, 0], sizes = [16, 16, 8], strides = [1, 1, 1]} : vector<20x16x8xf32> to vector<16x16x8xf32>
    %184 = vector.extract_strided_slice %46 {offsets = [9, 0], sizes = [1, 8], strides = [1, 1]} : vector<25x8xf32> to vector<1x8xf32>
    %185 = vector.shape_cast %184 : vector<1x8xf32> to vector<1x1x8xf32>
    %186 = vector.broadcast %185 : vector<1x1x8xf32> to vector<16x16x8xf32>
    %187 = arith.mulf %183, %186 : vector<16x16x8xf32>
    %188 = arith.addf %182, %187 : vector<16x16x8xf32>
    %189 = vector.extract_strided_slice %176 {offsets = [2, 0, 0], sizes = [16, 16, 8], strides = [1, 1, 1]} : vector<20x16x8xf32> to vector<16x16x8xf32>
    %190 = vector.extract_strided_slice %46 {offsets = [14, 0], sizes = [1, 8], strides = [1, 1]} : vector<25x8xf32> to vector<1x8xf32>
    %191 = vector.shape_cast %190 : vector<1x8xf32> to vector<1x1x8xf32>
    %192 = vector.broadcast %191 : vector<1x1x8xf32> to vector<16x16x8xf32>
    %193 = arith.mulf %189, %192 : vector<16x16x8xf32>
    %194 = arith.addf %188, %193 : vector<16x16x8xf32>
    %195 = vector.extract_strided_slice %176 {offsets = [3, 0, 0], sizes = [16, 16, 8], strides = [1, 1, 1]} : vector<20x16x8xf32> to vector<16x16x8xf32>
    %196 = vector.extract_strided_slice %46 {offsets = [19, 0], sizes = [1, 8], strides = [1, 1]} : vector<25x8xf32> to vector<1x8xf32>
    %197 = vector.shape_cast %196 : vector<1x8xf32> to vector<1x1x8xf32>
    %198 = vector.broadcast %197 : vector<1x1x8xf32> to vector<16x16x8xf32>
    %199 = arith.mulf %195, %198 : vector<16x16x8xf32>
    %200 = arith.addf %194, %199 : vector<16x16x8xf32>
    %201 = vector.extract_strided_slice %176 {offsets = [4, 0, 0], sizes = [16, 16, 8], strides = [1, 1, 1]} : vector<20x16x8xf32> to vector<16x16x8xf32>
    %202 = vector.extract_strided_slice %46 {offsets = [24, 0], sizes = [1, 8], strides = [1, 1]} : vector<25x8xf32> to vector<1x8xf32>
    %203 = vector.shape_cast %202 : vector<1x8xf32> to vector<1x1x8xf32>
    %204 = vector.broadcast %203 : vector<1x1x8xf32> to vector<16x16x8xf32>
    %205 = arith.mulf %201, %204 : vector<16x16x8xf32>
    %206 = arith.addf %200, %205 : vector<16x16x8xf32>
    %207 = arith.mulf %43, %206 : vector<16x16x8xf32>
    %cst_40 = arith.constant 5.000000e-01 : f32
    %208 = vector.broadcast %cst_40 : f32 to vector<16x16x8xf32>
    %209 = arith.mulf %208, %207 : vector<16x16x8xf32>
    %cst_41 = arith.constant 0.707106769 : f32
    %210 = vector.broadcast %cst_41 : f32 to vector<16x16x8xf32>
    %211 = arith.mulf %207, %210 : vector<16x16x8xf32>
    %212 = math.erf %211 : vector<16x16x8xf32>
    %cst_42 = arith.constant 1.000000e+00 : f32
    %213 = vector.broadcast %cst_42 : f32 to vector<16x16x8xf32>
    %214 = arith.addf %213, %212 : vector<16x16x8xf32>
    %215 = arith.mulf %209, %214 : vector<16x16x8xf32>
    %216 = vector.shape_cast %215 : vector<16x16x8xf32> to vector<256x8xf32>
    %c0_43 = arith.constant 0 : index
    %c0_44 = arith.constant 0 : index
    %c0_45 = arith.constant 0 : index
    %217 = vector.load %arg9[%c0_43, %c0_44, %c0_45] : memref<1x8x8xf32, #tpu.memory_space<vmem>>, vector<1x8x8xf32>
    %218 = vector.shape_cast %217 : vector<1x8x8xf32> to vector<8x8xf32>
    %cst_46 = arith.constant dense<0.000000e+00> : vector<256x8xf32>
    %219 = tpu.matmul %216, %218, %cst_46 {dimension_numbers = #tpu.dot_dimension_numbers<[1], [0], [0], [1], [0, 0, 1, 1], [], []>} : vector<256x8xf32>, vector<8x8xf32>, vector<256x8xf32> -> vector<256x8xf32>
    %c0_47 = arith.constant 0 : index
    %c0_48 = arith.constant 0 : index
    %c0_49 = arith.constant 0 : index
    %220 = vector.load %arg10[%c0_47, %c0_48, %c0_49] : memref<1x1x8xf32, #tpu.memory_space<vmem>>, vector<1x1x8xf32>
    %221 = vector.shape_cast %220 : vector<1x1x8xf32> to vector<1x8xf32>
    %222 = vector.broadcast %221 : vector<1x8xf32> to vector<256x8xf32>
    %223 = arith.addf %219, %222 : vector<256x8xf32>
    %224 = vector.shape_cast %223 : vector<256x8xf32> to vector<16x16x8xf32>
    %225 = arith.addf %224, %3 : vector<16x16x8xf32>
    %c0_50 = arith.constant 0 : index
    %c0_51 = arith.constant 0 : index
    %c0_52 = arith.constant 0 : index
    %226 = vector.load %arg12[%c0_50, %c0_51, %c0_52] : memref<16x16x8xf32, #tpu.memory_space<vmem>>, vector<16x16x8xf32>
    tpu.vector_store %arg12[%c0_50, %c0_51, %c0_52], %225 {strides = array<i32>} : memref<16x16x8xf32, #tpu.memory_space<vmem>>, vector<16x16x8xf32>,
    %c1_i32 = arith.constant 1 : i32
    %227 = arith.cmpi eq, %arg1, %c1_i32 : i32
    %228 = arith.extui %227 : i1 to i32
    %c0_i32_53 = arith.constant 0 : i32
    %229 = arith.cmpi ne, %228, %c0_i32_53 : i32
    scf.if %229 {
      %c0_54 = arith.constant 0 : index
      %c0_55 = arith.constant 0 : index
      %c0_56 = arith.constant 0 : index
      %c0_57 = arith.constant 0 : index
      %230 = vector.load %arg11[%c0_54, %c0_55, %c0_56, %c0_57] : memref<1x16x16x8xf32, #tpu.memory_space<vmem>>, vector<1x16x16x8xf32>
      %231 = vector.shape_cast %230 : vector<1x16x16x8xf32> to vector<16x16x8xf32>
      %232 = vector.shape_cast %225 : vector<16x16x8xf32> to vector<1x16x16x8xf32>
      tpu.vector_store %arg11[%c0_54, %c0_55, %c0_56, %c0_57], %232 {strides = array<i32>} : memref<1x16x16x8xf32, #tpu.memory_space<vmem>>, vector<1x16x16x8xf32>,
    } else {
    }
    return
  }
  func.func @transform_0(%arg0: i32, %arg1: i32) -> (i32, i32, i32, i32) {
    %c0_i32 = arith.constant 0 : i32
    %c0_i32_0 = arith.constant 0 : i32
    %c0_i32_1 = arith.constant 0 : i32
    %c0_i32_2 = arith.constant 0 : i32
    return %arg0, %c0_i32, %c0_i32_0, %c0_i32_1 : i32, i32, i32, i32
  }
  func.func @transform_1(%arg0: i32, %arg1: i32) -> (i32, i32, i32) {
    %c0_i32 = arith.constant 0 : i32
    %c0_i32_0 = arith.constant 0 : i32
    %c0_i32_1 = arith.constant 0 : i32
    return %arg1, %c0_i32, %c0_i32_0 : i32, i32, i32
  }
  func.func @transform_2(%arg0: i32, %arg1: i32) -> (i32, i32, i32) {
    %c0_i32 = arith.constant 0 : i32
    %c0_i32_0 = arith.constant 0 : i32
    %c0_i32_1 = arith.constant 0 : i32
    return %arg1, %c0_i32, %c0_i32_0 : i32, i32, i32
  }
  func.func @transform_3(%arg0: i32, %arg1: i32) -> (i32, i32, i32) {
    %c0_i32 = arith.constant 0 : i32
    %c0_i32_0 = arith.constant 0 : i32
    %c0_i32_1 = arith.constant 0 : i32
    return %arg1, %c0_i32, %c0_i32_0 : i32, i32, i32
  }
  func.func @transform_4(%arg0: i32, %arg1: i32) -> (i32, i32, i32) {
    %c0_i32 = arith.constant 0 : i32
    %c0_i32_0 = arith.constant 0 : i32
    %c0_i32_1 = arith.constant 0 : i32
    return %arg1, %c0_i32, %c0_i32_0 : i32, i32, i32
  }
  func.func @transform_5(%arg0: i32, %arg1: i32) -> (i32, i32, i32) {
    %c0_i32 = arith.constant 0 : i32
    %c0_i32_0 = arith.constant 0 : i32
    %c0_i32_1 = arith.constant 0 : i32
    return %arg1, %c0_i32, %c0_i32_0 : i32, i32, i32
  }
  func.func @transform_6(%arg0: i32, %arg1: i32) -> (i32, i32, i32) {
    %c0_i32 = arith.constant 0 : i32
    %c0_i32_0 = arith.constant 0 : i32
    %c0_i32_1 = arith.constant 0 : i32
    return %arg1, %c0_i32, %c0_i32_0 : i32, i32, i32
  }
  func.func @transform_7(%arg0: i32, %arg1: i32) -> (i32, i32, i32) {
    %c0_i32 = arith.constant 0 : i32
    %c0_i32_0 = arith.constant 0 : i32
    %c0_i32_1 = arith.constant 0 : i32
    return %arg1, %c0_i32, %c0_i32_0 : i32, i32, i32
  }
  func.func @transform_8(%arg0: i32, %arg1: i32) -> (i32, i32, i32) {
    %c0_i32 = arith.constant 0 : i32
    %c0_i32_0 = arith.constant 0 : i32
    %c0_i32_1 = arith.constant 0 : i32
    return %arg1, %c0_i32, %c0_i32_0 : i32, i32, i32
  }
  func.func @transform_9(%arg0: i32, %arg1: i32) -> (i32, i32, i32, i32) {
    %c0_i32 = arith.constant 0 : i32
    %c0_i32_0 = arith.constant 0 : i32
    %c0_i32_1 = arith.constant 0 : i32
    %c0_i32_2 = arith.constant 0 : i32
    return %arg0, %c0_i32, %c0_i32_0, %c0_i32_1 : i32, i32, i32, i32
  }
}

</mosaic_0001>

<llo_original>
// kernel: tpu_custom_call.1
$region0: #{tpu_custom_call.1}
  #allocation0 [shape = 'u32[]', space=smem, size = 0x4, offset = 0x4, fixed_abs, tag = 'smem constant byte address 0x4 - core index']
  #allocation1 [shape = 'u32[144,128]{1,0:T(1,128)}', space=vmem, size = 0x12000, scoped, tag = 'internal scratch']
  #allocation2 [shape = 'f32[16,16,8]{2,1,0:T(8,128)}', space=vmem, size = 0x20000, scoped, tag = 'scratch operand']
  #allocation3 [shape = 'f32[20,20,8]{2,1,0:T(8,128)}', space=vmem, size = 0x3c000, scoped, tag = 'scratch operand']
  %s0 = inlined_call_operand.vmem [shape: f32[2,16,16,8], index: 0, kind: input, shape index: {}]
  %s1 = inlined_call_operand.vmem [shape: f32[2,1,8], index: 1, kind: input, shape index: {}]
  %s2 = inlined_call_operand.vmem [shape: f32[2,1,8], index: 2, kind: input, shape index: {}]
  %s3 = inlined_call_operand.vmem [shape: f32[2,8,16], index: 3, kind: input, shape index: {}]
  %s4 = inlined_call_operand.vmem [shape: f32[2,1,16], index: 4, kind: input, shape index: {}]
  %s5 = inlined_call_operand.vmem [shape: f32[2,25,8], index: 5, kind: input, shape index: {}]
  %s6 = inlined_call_operand.vmem [shape: f32[2,1,8], index: 6, kind: input, shape index: {}]
  %s7 = inlined_call_operand.vmem [shape: f32[2,8,8], index: 7, kind: input, shape index: {}]
  %s8 = inlined_call_operand.vmem [shape: f32[2,1,8], index: 8, kind: input, shape index: {}]
  %s9 = inlined_call_operand.vmem [shape: f32[2,16,16,8], index: 9, kind: output, shape index: {}]
  %s10 = sld [smem:[#allocation0]]
  $region77: #{tpu_custom_call.1} parent=0
    _
  %s12 = ssub.s32 1, %s10
  %s13 = scalar_select 0, %s12, %s10
  loop: start=0, step=1, limit=6
  $region2: #{tpu_custom_call.1} parent=0 // loop_pre_header
    _
  $region3: #{tpu_custom_call.1} parent=0 // loop_header
    %s15 = sphi 0, %s19
    %p16 = scmp.ge.s32.totalorder %s15, 6
    %s22 = sphi 0, %s34
    %s23 = sphi 0, %s30
    %s24 = sphi 0, %s22
    %s25 = sphi 0, %s23
    %s26 = sphi 0, %s24
    %s27 = sphi 0, %s25
    %s37 = sphi 0, %s39
    %s40 = sphi 0, %s37
    %s41 = sphi 0, %s40
    %s57 = sphi 0, %s41
    %s63 = sphi 0, %s65
    %s66 = sphi 0, %s63
    %s67 = sphi 0, %s66
    %s83 = sphi 0, %s67
    %s89 = sphi 0, %s91
    %s92 = sphi 0, %s89
    %s93 = sphi 0, %s92
    %s109 = sphi 0, %s93
    %s115 = sphi 0, %s117
    %s118 = sphi 0, %s115
    %s119 = sphi 0, %s118
    %s135 = sphi 0, %s119
    %s141 = sphi 0, %s143
    %s144 = sphi 0, %s141
    %s145 = sphi 0, %s144
    %s161 = sphi 0, %s145
    %s167 = sphi 0, %s169
    %s170 = sphi 0, %s167
    %s171 = sphi 0, %s170
    %s187 = sphi 0, %s171
    %s193 = sphi 0, %s195
    %s196 = sphi 0, %s193
    %s197 = sphi 0, %s196
    %s213 = sphi 0, %s197
    %s219 = sphi 0, %s221
    %s222 = sphi 0, %s219
    %s223 = sphi 0, %s222
    %s239 = sphi 0, %s223
    %s245 = sphi 0, %s247
    %s248 = sphi 0, %s245
    %s249 = sphi 0, %s248
    %s265 = sphi 0, %s249
    %s271 = sphi 0, %s273
    %s274 = sphi 0, %s271
    %s275 = sphi 0, %s274
    %s291 = sphi 0, %s275
  $region4: #{tpu_custom_call.1} parent=0 // loop_header_branch
    %18 = sbr.rel (%p16) target = $region8
  $region5: #{tpu_custom_call.1} parent=0 // loop_body
    %s20 = ssub.s32 %s15, 1
    %s21 = ssub.s32 %s15, 2
    %s28 = sadd.s32 1, %s23
    %p29 = scmp.ge.s32.totalorder %s28, 2
    %s30 = scalar_select %p29, 0, %s28
    %s31 = sadd.s32 1, %s22
    %s32 = scalar_select %p29, %s31, %s22
    %p33 = scmp.ge.s32.totalorder %s32, 2
    %s34 = scalar_select %p33, 0, %s32
    %s35 = ssub.s32 %s22, %s34
    %p36 = scmp.eq.s32.totalorder %s35, 0
    %s38 = sadd.s32 %s37, 1
    %s39 = scalar_select %p36, %s37, %s38
    %p42 = pneg %p36
    %p43 = scmp.eq.s32.totalorder %s15, 3
    %p44 = por %p42, %p43
    %p45 = scmp.ne.s32.totalorder %s37, %s40
    %p46 = scmp.eq.s32.totalorder %s15, 0
    %p47 = por %p45, %p46
    %p48 = scmp.ne.s32.totalorder %s37, %s40
    %p49 = scmp.eq.s32.totalorder %s20, 3
    %p50 = por %p48, %p49
    %p51 = scmp.ne.s32.totalorder %s40, %s41
    %p52 = scmp.eq.s32.totalorder %s20, 0
    %p53 = por %p51, %p52
    %p54 = scmp.ne.s32.totalorder %s40, %s41
    %p55 = scmp.eq.s32.totalorder %s21, 3
    %p56 = por %p54, %p55
    %p58 = scmp.ne.s32.totalorder %s41, %s57
    %p59 = scmp.eq.s32.totalorder %s21, 0
    %p60 = por %p58, %p59
    %s61 = ssub.s32 %s23, %s30
    %p62 = scmp.eq.s32.totalorder %s61, 0
    %s64 = sadd.s32 %s63, 1
    %s65 = scalar_select %p62, %s63, %s64
    %p68 = pneg %p62
    %p69 = scmp.eq.s32.totalorder %s15, 3
    %p70 = por %p68, %p69
    %p71 = scmp.ne.s32.totalorder %s63, %s66
    %p72 = scmp.eq.s32.totalorder %s15, 0
    %p73 = por %p71, %p72
    %p74 = scmp.ne.s32.totalorder %s63, %s66
    %p75 = scmp.eq.s32.totalorder %s20, 3
    %p76 = por %p74, %p75
    %p77 = scmp.ne.s32.totalorder %s66, %s67
    %p78 = scmp.eq.s32.totalorder %s20, 0
    %p79 = por %p77, %p78
    %p80 = scmp.ne.s32.totalorder %s66, %s67
    %p81 = scmp.eq.s32.totalorder %s21, 3
    %p82 = por %p80, %p81
    %p84 = scmp.ne.s32.totalorder %s67, %s83
    %p85 = scmp.eq.s32.totalorder %s21, 0
    %p86 = por %p84, %p85
    %s87 = ssub.s32 %s23, %s30
    %p88 = scmp.eq.s32.totalorder %s87, 0
    %s90 = sadd.s32 %s89, 1
    %s91 = scalar_select %p88, %s89, %s90
    %p94 = pneg %p88
    %p95 = scmp.eq.s32.totalorder %s15, 3
    %p96 = por %p94, %p95
    %p97 = scmp.ne.s32.totalorder %s89, %s92
    %p98 = scmp.eq.s32.totalorder %s15, 0
    %p99 = por %p97, %p98
    %p100 = scmp.ne.s32.totalorder %s89, %s92
    %p101 = scmp.eq.s32.totalorder %s20, 3
    %p102 = por %p100, %p101
    %p103 = scmp.ne.s32.totalorder %s92, %s93
    %p104 = scmp.eq.s32.totalorder %s20, 0
    %p105 = por %p103, %p104
    %p106 = scmp.ne.s32.totalorder %s92, %s93
    %p107 = scmp.eq.s32.totalorder %s21, 3
    %p108 = por %p106, %p107
    %p110 = scmp.ne.s32.totalorder %s93, %s109
    %p111 = scmp.eq.s32.totalorder %s21, 0
    %p112 = por %p110, %p111
    %s113 = ssub.s32 %s23, %s30
    %p114 = scmp.eq.s32.totalorder %s113, 0
    %s116 = sadd.s32 %s115, 1
    %s117 = scalar_select %p114, %s115, %s116
    %p120 = pneg %p114
    %p121 = scmp.eq.s32.totalorder %s15, 3
    %p122 = por %p120, %p121
    %p123 = scmp.ne.s32.totalorder %s115, %s118
    %p124 = scmp.eq.s32.totalorder %s15, 0
    %p125 = por %p123, %p124
    %p126 = scmp.ne.s32.totalorder %s115, %s118
    %p127 = scmp.eq.s32.totalorder %s20, 3
    %p128 = por %p126, %p127
    %p129 = scmp.ne.s32.totalorder %s118, %s119
    %p130 = scmp.eq.s32.totalorder %s20, 0
    %p131 = por %p129, %p130
    %p132 = scmp.ne.s32.totalorder %s118, %s119
    %p133 = scmp.eq.s32.totalorder %s21, 3
    %p134 = por %p132, %p133
    %p136 = scmp.ne.s32.totalorder %s119, %s135
    %p137 = scmp.eq.s32.totalorder %s21, 0
    %p138 = por %p136, %p137
    %s139 = ssub.s32 %s23, %s30
    %p140 = scmp.eq.s32.totalorder %s139, 0
    %s142 = sadd.s32 %s141, 1
    %s143 = scalar_select %p140, %s141, %s142
    %p146 = pneg %p140
    %p147 = scmp.eq.s32.totalorder %s15, 3
    %p148 = por %p146, %p147
    %p149 = scmp.ne.s32.totalorder %s141, %s144
    %p150 = scmp.eq.s32.totalorder %s15, 0
    %p151 = por %p149, %p150
    %p152 = scmp.ne.s32.totalorder %s141, %s144
    %p153 = scmp.eq.s32.totalorder %s20, 3
    %p154 = por %p152, %p153
    %p155 = scmp.ne.s32.totalorder %s144, %s145
    %p156 = scmp.eq.s32.totalorder %s20, 0
    %p157 = por %p155, %p156
    %p158 = scmp.ne.s32.totalorder %s144, %s145
    %p159 = scmp.eq.s32.totalorder %s21, 3
    %p160 = por %p158, %p159
    %p162 = scmp.ne.s32.totalorder %s145, %s161
    %p163 = scmp.eq.s32.totalorder %s21, 0
    %p164 = por %p162, %p163
    %s165 = ssub.s32 %s23, %s30
    %p166 = scmp.eq.s32.totalorder %s165, 0
    %s168 = sadd.s32 %s167, 1
    %s169 = scalar_select %p166, %s167, %s168
    %p172 = pneg %p166
    %p173 = scmp.eq.s32.totalorder %s15, 3
    %p174 = por %p172, %p173
    %p175 = scmp.ne.s32.totalorder %s167, %s170
    %p176 = scmp.eq.s32.totalorder %s15, 0
    %p177 = por %p175, %p176
    %p178 = scmp.ne.s32.totalorder %s167, %s170
    %p179 = scmp.eq.s32.totalorder %s20, 3
    %p180 = por %p178, %p179
    %p181 = scmp.ne.s32.totalorder %s170, %s171
    %p182 = scmp.eq.s32.totalorder %s20, 0
    %p183 = por %p181, %p182
    %p184 = scmp.ne.s32.totalorder %s170, %s171
    %p185 = scmp.eq.s32.totalorder %s21, 3
    %p186 = por %p184, %p185
    %p188 = scmp.ne.s32.totalorder %s171, %s187
    %p189 = scmp.eq.s32.totalorder %s21, 0
    %p190 = por %p188, %p189
    %s191 = ssub.s32 %s23, %s30
    %p192 = scmp.eq.s32.totalorder %s191, 0
    %s194 = sadd.s32 %s193, 1
    %s195 = scalar_select %p192, %s193, %s194
    %p198 = pneg %p192
    %p199 = scmp.eq.s32.totalorder %s15, 3
    %p200 = por %p198, %p199
    %p201 = scmp.ne.s32.totalorder %s193, %s196
    %p202 = scmp.eq.s32.totalorder %s15, 0
    %p203 = por %p201, %p202
    %p204 = scmp.ne.s32.totalorder %s193, %s196
    %p205 = scmp.eq.s32.totalorder %s20, 3
    %p206 = por %p204, %p205
    %p207 = scmp.ne.s32.totalorder %s196, %s197
    %p208 = scmp.eq.s32.totalorder %s20, 0
    %p209 = por %p207, %p208
    %p210 = scmp.ne.s32.totalorder %s196, %s197
    %p211 = scmp.eq.s32.totalorder %s21, 3
    %p212 = por %p210, %p211
    %p214 = scmp.ne.s32.totalorder %s197, %s213
    %p215 = scmp.eq.s32.totalorder %s21, 0
    %p216 = por %p214, %p215
    %s217 = ssub.s32 %s23, %s30
    %p218 = scmp.eq.s32.totalorder %s217, 0
    %s220 = sadd.s32 %s219, 1
    %s221 = scalar_select %p218, %s219, %s220
    %p224 = pneg %p218
    %p225 = scmp.eq.s32.totalorder %s15, 3
    %p226 = por %p224, %p225
    %p227 = scmp.ne.s32.totalorder %s219, %s222
    %p228 = scmp.eq.s32.totalorder %s15, 0
    %p229 = por %p227, %p228
    %p230 = scmp.ne.s32.totalorder %s219, %s222
    %p231 = scmp.eq.s32.totalorder %s20, 3
    %p232 = por %p230, %p231
    %p233 = scmp.ne.s32.totalorder %s222, %s223
    %p234 = scmp.eq.s32.totalorder %s20, 0
    %p235 = por %p233, %p234
    %p236 = scmp.ne.s32.totalorder %s222, %s223
    %p237 = scmp.eq.s32.totalorder %s21, 3
    %p238 = por %p236, %p237
    %p240 = scmp.ne.s32.totalorder %s223, %s239
    %p241 = scmp.eq.s32.totalorder %s21, 0
    %p242 = por %p240, %p241
    %s243 = ssub.s32 %s23, %s30
    %p244 = scmp.eq.s32.totalorder %s243, 0
    %s246 = sadd.s32 %s245, 1
    %s247 = scalar_select %p244, %s245, %s246
    %p250 = pneg %p244
    %p251 = scmp.eq.s32.totalorder %s15, 3
    %p252 = por %p250, %p251
    %p253 = scmp.ne.s32.totalorder %s245, %s248
    %p254 = scmp.eq.s32.totalorder %s15, 0
    %p255 = por %p253, %p254
    %p256 = scmp.ne.s32.totalorder %s245, %s248
    %p257 = scmp.eq.s32.totalorder %s20, 3
    %p258 = por %p256, %p257
    %p259 = scmp.ne.s32.totalorder %s248, %s249
    %p260 = scmp.eq.s32.totalorder %s20, 0
    %p261 = por %p259, %p260
    %p262 = scmp.ne.s32.totalorder %s248, %s249
    %p263 = scmp.eq.s32.totalorder %s21, 3
    %p264 = por %p262, %p263
    %p266 = scmp.ne.s32.totalorder %s249, %s265
    %p267 = scmp.eq.s32.totalorder %s21, 0
    %p268 = por %p266, %p267
    %s269 = ssub.s32 %s22, %s34
    %p270 = scmp.eq.s32.totalorder %s269, 0
    %s272 = sadd.s32 %s271, 1
    %s273 = scalar_select %p270, %s271, %s272
    %p276 = pneg %p270
    %p277 = scmp.eq.s32.totalorder %s15, 3
    %p278 = por %p276, %p277
    %p279 = scmp.ne.s32.totalorder %s271, %s274
    %p280 = scmp.eq.s32.totalorder %s15, 0
    %p281 = por %p279, %p280
    %p282 = scmp.ne.s32.totalorder %s271, %s274
    %p283 = scmp.eq.s32.totalorder %s20, 3
    %p284 = por %p282, %p283
    %p285 = scmp.ne.s32.totalorder %s274, %s275
    %p286 = scmp.eq.s32.totalorder %s20, 0
    %p287 = por %p285, %p286
    %p288 = scmp.ne.s32.totalorder %s274, %s275
    %p289 = scmp.eq.s32.totalorder %s21, 3
    %p290 = por %p288, %p289
    %p292 = scmp.ne.s32.totalorder %s275, %s291
    %p293 = scmp.eq.s32.totalorder %s21, 0
    %p294 = por %p292, %p293
    %p295 = scmp.le.s32.totalorder 1, %s15
    %p296 = scmp.lt.s32.totalorder %s15, 5
    %p297 = pnand %p295, %p296
    %p298 = pneg %p297
    // Predicated region
    $region9: #{tpu_custom_call.1} parent=5 // pred_check
      _
    $region10: #{tpu_custom_call.1} parent=5 // pred_check_branch
      %300 = sbr.rel (%p297) target = $region12
    $region11: #{tpu_custom_call.1} parent=5 // pred_region
      %s301 = ssub.s32 %s15, 1
    $region12: #{tpu_custom_call.1} parent=5 // pred_fallthru
      _
    %p302 = scmp.lt.s32.totalorder %s15, 4
    // Predicated region
    $region13: #{tpu_custom_call.1} parent=5 // pred_check
      %p303 = pneg %p302
    $region14: #{tpu_custom_call.1} parent=5 // pred_check_branch
      %305 = sbr.rel (%p303) target = $region16
    $region15: #{tpu_custom_call.1} parent=5 // pred_region
      // Predicated region
      $region17: #{tpu_custom_call.1} parent=15 // pred_check
        %p306 = pneg %p47
      $region18: #{tpu_custom_call.1} parent=15 // pred_check_branch
        %308 = sbr.rel (%p306) target = $region20
      $region19: #{tpu_custom_call.1} parent=15 // pred_region
        %p309 = scmp.lt.s32.totalorder %s22, 1
        %s310 = scalar_select %p309, %s22, 1
        %s311 = smul.addr %s310, 32
        %s312 = smul.addr %s311, 8
        %s313 = scalar_lea.vmem %s0, %s312
      $region20: #{tpu_custom_call.1} parent=15 // pred_fallthru
        _
      // Predicated region
      $region21: #{tpu_custom_call.1} parent=15 // pred_check
        %p314 = pneg %p73
      $region22: #{tpu_custom_call.1} parent=15 // pred_check_branch
        %316 = sbr.rel (%p314) target = $region24
      $region23: #{tpu_custom_call.1} parent=15 // pred_region
        %p317 = scmp.lt.s32.totalorder %s23, 1
        %s318 = scalar_select %p317, %s23, 1
        %s319 = scalar_lea.vmem %s1, %s318
      $region24: #{tpu_custom_call.1} parent=15 // pred_fallthru
        _
      // Predicated region
      $region25: #{tpu_custom_call.1} parent=15 // pred_check
        %p320 = pneg %p99
      $region26: #{tpu_custom_call.1} parent=15 // pred_check_branch
        %322 = sbr.rel (%p320) target = $region28
      $region27: #{tpu_custom_call.1} parent=15 // pred_region
        %p323 = scmp.lt.s32.totalorder %s23, 1
        %s324 = scalar_select %p323, %s23, 1
        %s325 = scalar_lea.vmem %s2, %s324
      $region28: #{tpu_custom_call.1} parent=15 // pred_fallthru
        _
      // Predicated region
      $region29: #{tpu_custom_call.1} parent=15 // pred_check
        %p326 = pneg %p125
      $region30: #{tpu_custom_call.1} parent=15 // pred_check_branch
        %328 = sbr.rel (%p326) target = $region32
      $region31: #{tpu_custom_call.1} parent=15 // pred_region
        %p329 = scmp.lt.s32.totalorder %s23, 1
        %s330 = scalar_select %p329, %s23, 1
        %s331 = smul.addr %s330, 8
        %s332 = scalar_lea.vmem %s3, %s331
      $region32: #{tpu_custom_call.1} parent=15 // pred_fallthru
        _
      // Predicated region
      $region33: #{tpu_custom_call.1} parent=15 // pred_check
        %p333 = pneg %p151
      $region34: #{tpu_custom_call.1} parent=15 // pred_check_branch
        %335 = sbr.rel (%p333) target = $region36
      $region35: #{tpu_custom_call.1} parent=15 // pred_region
        %p336 = scmp.lt.s32.totalorder %s23, 1
        %s337 = scalar_select %p336, %s23, 1
        %s338 = scalar_lea.vmem %s4, %s337
      $region36: #{tpu_custom_call.1} parent=15 // pred_fallthru
        _
      // Predicated region
      $region37: #{tpu_custom_call.1} parent=15 // pred_check
        %p339 = pneg %p177
      $region38: #{tpu_custom_call.1} parent=15 // pred_check_branch
        %341 = sbr.rel (%p339) target = $region40
      $region39: #{tpu_custom_call.1} parent=15 // pred_region
        %p342 = scmp.lt.s32.totalorder %s23, 1
        %s343 = scalar_select %p342, %s23, 1
        %s344 = smul.addr %s343, 4
        %s345 = smul.addr %s344, 8
        %s346 = scalar_lea.vmem %s5, %s345
      $region40: #{tpu_custom_call.1} parent=15 // pred_fallthru
        _
      // Predicated region
      $region41: #{tpu_custom_call.1} parent=15 // pred_check
        %p347 = pneg %p203
      $region42: #{tpu_custom_call.1} parent=15 // pred_check_branch
        %349 = sbr.rel (%p347) target = $region44
      $region43: #{tpu_custom_call.1} parent=15 // pred_region
        %p350 = scmp.lt.s32.totalorder %s23, 1
        %s351 = scalar_select %p350, %s23, 1
        %s352 = scalar_lea.vmem %s6, %s351
      $region44: #{tpu_custom_call.1} parent=15 // pred_fallthru
        _
      // Predicated region
      $region45: #{tpu_custom_call.1} parent=15 // pred_check
        %p353 = pneg %p229
      $region46: #{tpu_custom_call.1} parent=15 // pred_check_branch
        %355 = sbr.rel (%p353) target = $region48
      $region47: #{tpu_custom_call.1} parent=15 // pred_region
        %p356 = scmp.lt.s32.totalorder %s23, 1
        %s357 = scalar_select %p356, %s23, 1
        %s358 = smul.addr %s357, 8
        %s359 = scalar_lea.vmem %s7, %s358
      $region48: #{tpu_custom_call.1} parent=15 // pred_fallthru
        _
      // Predicated region
      $region49: #{tpu_custom_call.1} parent=15 // pred_check
        %p360 = pneg %p255
      $region50: #{tpu_custom_call.1} parent=15 // pred_check_branch
        %362 = sbr.rel (%p360) target = $region52
      $region51: #{tpu_custom_call.1} parent=15 // pred_region
        %p363 = scmp.lt.s32.totalorder %s23, 1
        %s364 = scalar_select %p363, %s23, 1
        %s365 = scalar_lea.vmem %s8, %s364
      $region52: #{tpu_custom_call.1} parent=15 // pred_fallthru
        _
    $region16: #{tpu_custom_call.1} parent=5 // pred_fallthru
      _
    %p366 = scmp.le.s32.totalorder 1, %s15
    %p367 = scmp.lt.s32.totalorder %s15, 5
    %p368 = pnand %p366, %p367
    %p369 = pneg %p368
    // Predicated region
    $region53: #{tpu_custom_call.1} parent=5 // pred_check
      _
    $region54: #{tpu_custom_call.1} parent=5 // pred_check_branch
      %371 = sbr.rel (%p368) target = $region56
    $region55: #{tpu_custom_call.1} parent=5 // pred_region
      %s372 = ssub.s32 %s15, 1
      %p373 = scmp.lt.s32.totalorder %s24, 1
      %s374 = scalar_select %p373, %s24, 1
      %s375 = smul.addr %s374, 32
      %s376 = smul.addr %s375, 8
      %s377 = scalar_lea.vmem %s0, %s376
      %p378 = pneg %p53
      %p379 = pneg %p50
      %p380 = scmp.lt.s32.totalorder %s25, 1
      %s381 = scalar_select %p380, %s25, 1
      %s382 = scalar_lea.vmem %s1, %s381
      %p383 = pneg %p79
      %p384 = pneg %p76
      %p385 = scmp.lt.s32.totalorder %s25, 1
      %s386 = scalar_select %p385, %s25, 1
      %s387 = scalar_lea.vmem %s2, %s386
      %p388 = pneg %p105
      %p389 = pneg %p102
      %p390 = scmp.lt.s32.totalorder %s25, 1
      %s391 = scalar_select %p390, %s25, 1
      %s392 = smul.addr %s391, 8
      %s393 = scalar_lea.vmem %s3, %s392
      %p394 = pneg %p131
      %p395 = pneg %p128
      %p396 = scmp.lt.s32.totalorder %s25, 1
      %s397 = scalar_select %p396, %s25, 1
      %s398 = scalar_lea.vmem %s4, %s397
      %p399 = pneg %p157
      %p400 = pneg %p154
      %p401 = scmp.lt.s32.totalorder %s25, 1
      %s402 = scalar_select %p401, %s25, 1
      %s403 = smul.addr %s402, 4
      %s404 = smul.addr %s403, 8
      %s405 = scalar_lea.vmem %s5, %s404
      %p406 = pneg %p183
      %p407 = pneg %p180
      %p408 = scmp.lt.s32.totalorder %s25, 1
      %s409 = scalar_select %p408, %s25, 1
      %s410 = scalar_lea.vmem %s6, %s409
      %p411 = pneg %p209
      %p412 = pneg %p206
      %p413 = scmp.lt.s32.totalorder %s25, 1
      %s414 = scalar_select %p413, %s25, 1
      %s415 = smul.addr %s414, 8
      %s416 = scalar_lea.vmem %s7, %s415
      %p417 = pneg %p235
      %p418 = pneg %p232
      %p419 = scmp.lt.s32.totalorder %s25, 1
      %s420 = scalar_select %p419, %s25, 1
      %s421 = scalar_lea.vmem %s8, %s420
      %p422 = pneg %p261
      %p423 = pneg %p258
      %p424 = pneg %p287
      %p425 = pneg %p284
      %p426 = scmp.lt.s32.totalorder %s24, 1
      %s427 = scalar_select %p426, %s24, 1
      %s428 = smul.addr %s427, 32
      %s429 = smul.addr %s428, 8
      %s430 = scalar_lea.vmem %s9, %s429
      %p431 = scmp.lt.s32.totalorder %s24, 1
      %s432 = scalar_select %p431, %s24, 1
      %s433 = smul.addr %s432, 32
      %s434 = smul.addr %s433, 8
      %s435 = scalar_lea.vmem %s0, %s434
      %p436 = scmp.lt.s32.totalorder %s25, 1
      %s437 = scalar_select %p436, %s25, 1
      %s438 = scalar_lea.vmem %s1, %s437
      %p439 = scmp.lt.s32.totalorder %s25, 1
      %s440 = scalar_select %p439, %s25, 1
      %s441 = scalar_lea.vmem %s2, %s440
      %p442 = scmp.lt.s32.totalorder %s25, 1
      %s443 = scalar_select %p442, %s25, 1
      %s444 = smul.addr %s443, 8
      %s445 = scalar_lea.vmem %s3, %s444
      %p446 = scmp.lt.s32.totalorder %s25, 1
      %s447 = scalar_select %p446, %s25, 1
      %s448 = scalar_lea.vmem %s4, %s447
      %p449 = scmp.lt.s32.totalorder %s25, 1
      %s450 = scalar_select %p449, %s25, 1
      %s451 = smul.addr %s450, 4
      %s452 = smul.addr %s451, 8
      %s453 = scalar_lea.vmem %s5, %s452
      %p454 = scmp.lt.s32.totalorder %s25, 1
      %s455 = scalar_select %p454, %s25, 1
      %s456 = scalar_lea.vmem %s6, %s455
      %p457 = scmp.lt.s32.totalorder %s25, 1
      %s458 = scalar_select %p457, %s25, 1
      %s459 = smul.addr %s458, 8
      %s460 = scalar_lea.vmem %s7, %s459
      %p461 = scmp.lt.s32.totalorder %s25, 1
      %s462 = scalar_select %p461, %s25, 1
      %s463 = scalar_lea.vmem %s8, %s462
      %p464 = scmp.lt.s32.totalorder %s24, 1
      %s465 = scalar_select %p464, %s24, 1
      %s466 = smul.addr %s465, 32
      %s467 = smul.addr %s466, 8
      %s468 = scalar_lea.vmem %s9, %s467
      %p469 = scmp.eq.s32.totalorder %s25, 0
      // Predicated region
      $region57: #{tpu_custom_call.1} parent=55 // pred_check
        %p470 = pneg %p469
      $region58: #{tpu_custom_call.1} parent=55 // pred_check_branch
        %472 = sbr.rel (%p470) target = $region60
      $region59: #{tpu_custom_call.1} parent=55 // pred_region
        %v473 = vld [vmem:[%s435] sm:$0xff]
        %v474 = vld [vmem:[%s435 + $0x8] sm:$0xff]
        %v475 = vld [vmem:[%s435 + $0x10] sm:$0xff]
        %v476 = vld [vmem:[%s435 + $0x18] sm:$0xff]
        %v477 = vld [vmem:[%s435 + $0x20] sm:$0xff]
        %v478 = vld [vmem:[%s435 + $0x28] sm:$0xff]
        %v479 = vld [vmem:[%s435 + $0x30] sm:$0xff]
        %v480 = vld [vmem:[%s435 + $0x38] sm:$0xff]
        %v481 = vld [vmem:[%s435 + $0x40] sm:$0xff]
        %v482 = vld [vmem:[%s435 + $0x48] sm:$0xff]
        %v483 = vld [vmem:[%s435 + $0x50] sm:$0xff]
        %v484 = vld [vmem:[%s435 + $0x58] sm:$0xff]
        %v485 = vld [vmem:[%s435 + $0x60] sm:$0xff]
        %v486 = vld [vmem:[%s435 + $0x68] sm:$0xff]
        %v487 = vld [vmem:[%s435 + $0x70] sm:$0xff]
        %v488 = vld [vmem:[%s435 + $0x78] sm:$0xff]
        %v489 = vld [vmem:[%s435 + $0x80] sm:$0xff]
        %v490 = vld [vmem:[%s435 + $0x88] sm:$0xff]
        %v491 = vld [vmem:[%s435 + $0x90] sm:$0xff]
        %v492 = vld [vmem:[%s435 + $0x98] sm:$0xff]
        %v493 = vld [vmem:[%s435 + $0xa0] sm:$0xff]
        %v494 = vld [vmem:[%s435 + $0xa8] sm:$0xff]
        %v495 = vld [vmem:[%s435 + $0xb0] sm:$0xff]
        %v496 = vld [vmem:[%s435 + $0xb8] sm:$0xff]
        %v497 = vld [vmem:[%s435 + $0xc0] sm:$0xff]
        %v498 = vld [vmem:[%s435 + $0xc8] sm:$0xff]
        %v499 = vld [vmem:[%s435 + $0xd0] sm:$0xff]
        %v500 = vld [vmem:[%s435 + $0xd8] sm:$0xff]
        %v501 = vld [vmem:[%s435 + $0xe0] sm:$0xff]
        %v502 = vld [vmem:[%s435 + $0xe8] sm:$0xff]
        %v503 = vld [vmem:[%s435 + $0xf0] sm:$0xff]
        %v504 = vld [vmem:[%s435 + $0xf8] sm:$0xff]
        %vm505 = vcmask 64512
        %506 = vst.msk [vmem:[#allocation2] sm:$0xff] %vm505, %v473
        %507 = vst.msk [vmem:[#allocation2 + $0x8] sm:$0xff] %vm505, %v474
        %508 = vst.msk [vmem:[#allocation2 + $0x10] sm:$0xff] %vm505, %v475
        %509 = vst.msk [vmem:[#allocation2 + $0x18] sm:$0xff] %vm505, %v476
        %510 = vst.msk [vmem:[#allocation2 + $0x20] sm:$0xff] %vm505, %v477
        %511 = vst.msk [vmem:[#allocation2 + $0x28] sm:$0xff] %vm505, %v478
        %512 = vst.msk [vmem:[#allocation2 + $0x30] sm:$0xff] %vm505, %v479
        %513 = vst.msk [vmem:[#allocation2 + $0x38] sm:$0xff] %vm505, %v480
        %514 = vst.msk [vmem:[#allocation2 + $0x40] sm:$0xff] %vm505, %v481
        %515 = vst.msk [vmem:[#allocation2 + $0x48] sm:$0xff] %vm505, %v482
        %516 = vst.msk [vmem:[#allocation2 + $0x50] sm:$0xff] %vm505, %v483
        %517 = vst.msk [vmem:[#allocation2 + $0x58] sm:$0xff] %vm505, %v484
        %518 = vst.msk [vmem:[#allocation2 + $0x60] sm:$0xff] %vm505, %v485
        %519 = vst.msk [vmem:[#allocation2 + $0x68] sm:$0xff] %vm505, %v486
        %520 = vst.msk [vmem:[#allocation2 + $0x70] sm:$0xff] %vm505, %v487
        %521 = vst.msk [vmem:[#allocation2 + $0x78] sm:$0xff] %vm505, %v488
        %522 = vst.msk [vmem:[#allocation2 + $0x80] sm:$0xff] %vm505, %v489
        %523 = vst.msk [vmem:[#allocation2 + $0x88] sm:$0xff] %vm505, %v490
        %524 = vst.msk [vmem:[#allocation2 + $0x90] sm:$0xff] %vm505, %v491
        %525 = vst.msk [vmem:[#allocation2 + $0x98] sm:$0xff] %vm505, %v492
        %526 = vst.msk [vmem:[#allocation2 + $0xa0] sm:$0xff] %vm505, %v493
        %527 = vst.msk [vmem:[#allocation2 + $0xa8] sm:$0xff] %vm505, %v494
        %528 = vst.msk [vmem:[#allocation2 + $0xb0] sm:$0xff] %vm505, %v495
        %529 = vst.msk [vmem:[#allocation2 + $0xb8] sm:$0xff] %vm505, %v496
        %530 = vst.msk [vmem:[#allocation2 + $0xc0] sm:$0xff] %vm505, %v497
        %531 = vst.msk [vmem:[#allocation2 + $0xc8] sm:$0xff] %vm505, %v498
        %532 = vst.msk [vmem:[#allocation2 + $0xd0] sm:$0xff] %vm505, %v499
        %533 = vst.msk [vmem:[#allocation2 + $0xd8] sm:$0xff] %vm505, %v500
        %534 = vst.msk [vmem:[#allocation2 + $0xe0] sm:$0xff] %vm505, %v501
        %535 = vst.msk [vmem:[#allocation2 + $0xe8] sm:$0xff] %vm505, %v502
        %536 = vst.msk [vmem:[#allocation2 + $0xf0] sm:$0xff] %vm505, %v503
        %537 = vst.msk [vmem:[#allocation2 + $0xf8] sm:$0xff] %vm505, %v504
        %538 = vst.msk [vmem:[#allocation3] sm:$0xff] %vm505, 0.0
        %539 = vst.msk [vmem:[#allocation3 + $0x8] sm:$0xff] %vm505, 0.0
        %vm540 = vcmask 60416
        %541 = vst.msk [vmem:[#allocation3 + $0x10] sm:$0xf] %vm540, 0.0
        %542 = vst.msk [vmem:[#allocation3 + $0x18] sm:$0xff] %vm505, 0.0
        %543 = vst.msk [vmem:[#allocation3 + $0x20] sm:$0xff] %vm505, 0.0
        %544 = vst.msk [vmem:[#allocation3 + $0x28] sm:$0xf] %vm540, 0.0
        %545 = vst.msk [vmem:[#allocation3 + $0x30] sm:$0xff] %vm505, 0.0
        %546 = vst.msk [vmem:[#allocation3 + $0x38] sm:$0xff] %vm505, 0.0
        %547 = vst.msk [vmem:[#allocation3 + $0x40] sm:$0xf] %vm540, 0.0
        %548 = vst.msk [vmem:[#allocation3 + $0x48] sm:$0xff] %vm505, 0.0
        %549 = vst.msk [vmem:[#allocation3 + $0x50] sm:$0xff] %vm505, 0.0
        %550 = vst.msk [vmem:[#allocation3 + $0x58] sm:$0xf] %vm540, 0.0
        %551 = vst.msk [vmem:[#allocation3 + $0x60] sm:$0xff] %vm505, 0.0
        %552 = vst.msk [vmem:[#allocation3 + $0x68] sm:$0xff] %vm505, 0.0
        %553 = vst.msk [vmem:[#allocation3 + $0x70] sm:$0xf] %vm540, 0.0
        %554 = vst.msk [vmem:[#allocation3 + $0x78] sm:$0xff] %vm505, 0.0
        %555 = vst.msk [vmem:[#allocation3 + $0x80] sm:$0xff] %vm505, 0.0
        %556 = vst.msk [vmem:[#allocation3 + $0x88] sm:$0xf] %vm540, 0.0
        %557 = vst.msk [vmem:[#allocation3 + $0x90] sm:$0xff] %vm505, 0.0
        %558 = vst.msk [vmem:[#allocation3 + $0x98] sm:$0xff] %vm505, 0.0
        %559 = vst.msk [vmem:[#allocation3 + $0xa0] sm:$0xf] %vm540, 0.0
        %560 = vst.msk [vmem:[#allocation3 + $0xa8] sm:$0xff] %vm505, 0.0
        %561 = vst.msk [vmem:[#allocation3 + $0xb0] sm:$0xff] %vm505, 0.0
        %562 = vst.msk [vmem:[#allocation3 + $0xb8] sm:$0xf] %vm540, 0.0
        %563 = vst.msk [vmem:[#allocation3 + $0xc0] sm:$0xff] %vm505, 0.0
        %564 = vst.msk [vmem:[#allocation3 + $0xc8] sm:$0xff] %vm505, 0.0
        %565 = vst.msk [vmem:[#allocation3 + $0xd0] sm:$0xf] %vm540, 0.0
        %566 = vst.msk [vmem:[#allocation3 + $0xd8] sm:$0xff] %vm505, 0.0
        %567 = vst.msk [vmem:[#allocation3 + $0xe0] sm:$0xff] %vm505, 0.0
        %568 = vst.msk [vmem:[#allocation3 + $0xe8] sm:$0xf] %vm540, 0.0
        %569 = vst.msk [vmem:[#allocation3 + $0xf0] sm:$0xff] %vm505, 0.0
        %570 = vst.msk [vmem:[#allocation3 + $0xf8] sm:$0xff] %vm505, 0.0
        %571 = vst.msk [vmem:[#allocation3 + $0x100] sm:$0xf] %vm540, 0.0
        %572 = vst.msk [vmem:[#allocation3 + $0x108] sm:$0xff] %vm505, 0.0
        %573 = vst.msk [vmem:[#allocation3 + $0x110] sm:$0xff] %vm505, 0.0
        %574 = vst.msk [vmem:[#allocation3 + $0x118] sm:$0xf] %vm540, 0.0
        %575 = vst.msk [vmem:[#allocation3 + $0x120] sm:$0xff] %vm505, 0.0
        %576 = vst.msk [vmem:[#allocation3 + $0x128] sm:$0xff] %vm505, 0.0
        %577 = vst.msk [vmem:[#allocation3 + $0x130] sm:$0xf] %vm540, 0.0
        %578 = vst.msk [vmem:[#allocation3 + $0x138] sm:$0xff] %vm505, 0.0
        %579 = vst.msk [vmem:[#allocation3 + $0x140] sm:$0xff] %vm505, 0.0
        %580 = vst.msk [vmem:[#allocation3 + $0x148] sm:$0xf] %vm540, 0.0
        %581 = vst.msk [vmem:[#allocation3 + $0x150] sm:$0xff] %vm505, 0.0
        %582 = vst.msk [vmem:[#allocation3 + $0x158] sm:$0xff] %vm505, 0.0
        %583 = vst.msk [vmem:[#allocation3 + $0x160] sm:$0xf] %vm540, 0.0
        %584 = vst.msk [vmem:[#allocation3 + $0x168] sm:$0xff] %vm505, 0.0
        %585 = vst.msk [vmem:[#allocation3 + $0x170] sm:$0xff] %vm505, 0.0
        %586 = vst.msk [vmem:[#allocation3 + $0x178] sm:$0xf] %vm540, 0.0
        %587 = vst.msk [vmem:[#allocation3 + $0x180] sm:$0xff] %vm505, 0.0
        %588 = vst.msk [vmem:[#allocation3 + $0x188] sm:$0xff] %vm505, 0.0
        %589 = vst.msk [vmem:[#allocation3 + $0x190] sm:$0xf] %vm540, 0.0
        %590 = vst.msk [vmem:[#allocation3 + $0x198] sm:$0xff] %vm505, 0.0
        %591 = vst.msk [vmem:[#allocation3 + $0x1a0] sm:$0xff] %vm505, 0.0
        %592 = vst.msk [vmem:[#allocation3 + $0x1a8] sm:$0xf] %vm540, 0.0
        %593 = vst.msk [vmem:[#allocation3 + $0x1b0] sm:$0xff] %vm505, 0.0
        %594 = vst.msk [vmem:[#allocation3 + $0x1b8] sm:$0xff] %vm505, 0.0
        %595 = vst.msk [vmem:[#allocation3 + $0x1c0] sm:$0xf] %vm540, 0.0
        %596 = vst.msk [vmem:[#allocation3 + $0x1c8] sm:$0xff] %vm505, 0.0
        %597 = vst.msk [vmem:[#allocation3 + $0x1d0] sm:$0xff] %vm505, 0.0
        %598 = vst.msk [vmem:[#allocation3 + $0x1d8] sm:$0xf] %vm540, 0.0
      $region60: #{tpu_custom_call.1} parent=55 // pred_fallthru
        _
      %v599 = vld [vmem:[#allocation2] sm:$0xff]
      %v600 = vld [vmem:[#allocation2 + $0x8] sm:$0xff]
      %v601 = vld [vmem:[#allocation2 + $0x10] sm:$0xff]
      %v602 = vld [vmem:[#allocation2 + $0x18] sm:$0xff]
      %v603 = vld [vmem:[#allocation2 + $0x20] sm:$0xff]
      %v604 = vld [vmem:[#allocation2 + $0x28] sm:$0xff]
      %v605 = vld [vmem:[#allocation2 + $0x30] sm:$0xff]
      %v606 = vld [vmem:[#allocation2 + $0x38] sm:$0xff]
      %v607 = vld [vmem:[#allocation2 + $0x40] sm:$0xff]
      %v608 = vld [vmem:[#allocation2 + $0x48] sm:$0xff]
      %v609 = vld [vmem:[#allocation2 + $0x50] sm:$0xff]
      %v610 = vld [vmem:[#allocation2 + $0x58] sm:$0xff]
      %v611 = vld [vmem:[#allocation2 + $0x60] sm:$0xff]
      %v612 = vld [vmem:[#allocation2 + $0x68] sm:$0xff]
      %v613 = vld [vmem:[#allocation2 + $0x70] sm:$0xff]
      %v614 = vld [vmem:[#allocation2 + $0x78] sm:$0xff]
      %v615 = vld [vmem:[#allocation2 + $0x80] sm:$0xff]
      %v616 = vld [vmem:[#allocation2 + $0x88] sm:$0xff]
      %v617 = vld [vmem:[#allocation2 + $0x90] sm:$0xff]
      %v618 = vld [vmem:[#allocation2 + $0x98] sm:$0xff]
      %v619 = vld [vmem:[#allocation2 + $0xa0] sm:$0xff]
      %v620 = vld [vmem:[#allocation2 + $0xa8] sm:$0xff]
      %v621 = vld [vmem:[#allocation2 + $0xb0] sm:$0xff]
      %v622 = vld [vmem:[#allocation2 + $0xb8] sm:$0xff]
      %v623 = vld [vmem:[#allocation2 + $0xc0] sm:$0xff]
      %v624 = vld [vmem:[#allocation2 + $0xc8] sm:$0xff]
      %v625 = vld [vmem:[#allocation2 + $0xd0] sm:$0xff]
      %v626 = vld [vmem:[#allocation2 + $0xd8] sm:$0xff]
      %v627 = vld [vmem:[#allocation2 + $0xe0] sm:$0xff]
      %v628 = vld [vmem:[#allocation2 + $0xe8] sm:$0xff]
      %v629 = vld [vmem:[#allocation2 + $0xf0] sm:$0xff]
      %v630 = vld [vmem:[#allocation2 + $0xf8] sm:$0xff]
      %vm631 = vcmask 64512
      %v632 = vsel %vm631, %v599, 0.0
      %633 = vadd.xlane.f32.xlu0 %v632
      %v634 = vpop.xlane.xlu0 %633
      %v635 = vsel %vm631, %v600, 0.0
      %636 = vadd.xlane.f32.xlu0 %v635
      %v637 = vpop.xlane.xlu0 %636
      %v638 = vsel %vm631, %v601, 0.0
      %639 = vadd.xlane.f32.xlu0 %v638
      %v640 = vpop.xlane.xlu0 %639
      %v641 = vsel %vm631, %v602, 0.0
      %642 = vadd.xlane.f32.xlu0 %v641
      %v643 = vpop.xlane.xlu0 %642
      %v644 = vsel %vm631, %v603, 0.0
      %645 = vadd.xlane.f32.xlu0 %v644
      %v646 = vpop.xlane.xlu0 %645
      %v647 = vsel %vm631, %v604, 0.0
      %648 = vadd.xlane.f32.xlu0 %v647
      %v649 = vpop.xlane.xlu0 %648
      %v650 = vsel %vm631, %v605, 0.0
      %651 = vadd.xlane.f32.xlu0 %v650
      %v652 = vpop.xlane.xlu0 %651
      %v653 = vsel %vm631, %v606, 0.0
      %654 = vadd.xlane.f32.xlu0 %v653
      %v655 = vpop.xlane.xlu0 %654
      %v656 = vsel %vm631, %v607, 0.0
      %657 = vadd.xlane.f32.xlu0 %v656
      %v658 = vpop.xlane.xlu0 %657
      %v659 = vsel %vm631, %v608, 0.0
      %660 = vadd.xlane.f32.xlu0 %v659
      %v661 = vpop.xlane.xlu0 %660
      %v662 = vsel %vm631, %v609, 0.0
      %663 = vadd.xlane.f32.xlu0 %v662
      %v664 = vpop.xlane.xlu0 %663
      %v665 = vsel %vm631, %v610, 0.0
      %666 = vadd.xlane.f32.xlu0 %v665
      %v667 = vpop.xlane.xlu0 %666
      %v668 = vsel %vm631, %v611, 0.0
      %669 = vadd.xlane.f32.xlu0 %v668
      %v670 = vpop.xlane.xlu0 %669
      %v671 = vsel %vm631, %v612, 0.0
      %672 = vadd.xlane.f32.xlu0 %v671
      %v673 = vpop.xlane.xlu0 %672
      %v674 = vsel %vm631, %v613, 0.0
      %675 = vadd.xlane.f32.xlu0 %v674
      %v676 = vpop.xlane.xlu0 %675
      %v677 = vsel %vm631, %v614, 0.0
      %678 = vadd.xlane.f32.xlu0 %v677
      %v679 = vpop.xlane.xlu0 %678
      %v680 = vsel %vm631, %v615, 0.0
      %681 = vadd.xlane.f32.xlu0 %v680
      %v682 = vpop.xlane.xlu0 %681
      %v683 = vsel %vm631, %v616, 0.0
      %684 = vadd.xlane.f32.xlu0 %v683
      %v685 = vpop.xlane.xlu0 %684
      %v686 = vsel %vm631, %v617, 0.0
      %687 = vadd.xlane.f32.xlu0 %v686
      %v688 = vpop.xlane.xlu0 %687
      %v689 = vsel %vm631, %v618, 0.0
      %690 = vadd.xlane.f32.xlu0 %v689
      %v691 = vpop.xlane.xlu0 %690
      %v692 = vsel %vm631, %v619, 0.0
      %693 = vadd.xlane.f32.xlu0 %v692
      %v694 = vpop.xlane.xlu0 %693
      %v695 = vsel %vm631, %v620, 0.0
      %696 = vadd.xlane.f32.xlu0 %v695
      %v697 = vpop.xlane.xlu0 %696
      %v698 = vsel %vm631, %v621, 0.0
      %699 = vadd.xlane.f32.xlu0 %v698
      %v700 = vpop.xlane.xlu0 %699
      %v701 = vsel %vm631, %v622, 0.0
      %702 = vadd.xlane.f32.xlu0 %v701
      %v703 = vpop.xlane.xlu0 %702
      %v704 = vsel %vm631, %v623, 0.0
      %705 = vadd.xlane.f32.xlu0 %v704
      %v706 = vpop.xlane.xlu0 %705
      %v707 = vsel %vm631, %v624, 0.0
      %708 = vadd.xlane.f32.xlu0 %v707
      %v709 = vpop.xlane.xlu0 %708
      %v710 = vsel %vm631, %v625, 0.0
      %711 = vadd.xlane.f32.xlu0 %v710
      %v712 = vpop.xlane.xlu0 %711
      %v713 = vsel %vm631, %v626, 0.0
      %714 = vadd.xlane.f32.xlu0 %v713
      %v715 = vpop.xlane.xlu0 %714
      %v716 = vsel %vm631, %v627, 0.0
      %717 = vadd.xlane.f32.xlu0 %v716
      %v718 = vpop.xlane.xlu0 %717
      %v719 = vsel %vm631, %v628, 0.0
      %720 = vadd.xlane.f32.xlu0 %v719
      %v721 = vpop.xlane.xlu0 %720
      %v722 = vsel %vm631, %v629, 0.0
      %723 = vadd.xlane.f32.xlu0 %v722
      %v724 = vpop.xlane.xlu0 %723
      %v725 = vsel %vm631, %v630, 0.0
      %726 = vadd.xlane.f32.xlu0 %v725
      %v727 = vpop.xlane.xlu0 %726
      %v728 = vrcp.pop 8.0
      %v729 = vmul.f32 %v634, %v728
      %v730 = vmul.f32 %v637, %v728
      %v731 = vmul.f32 %v640, %v728
      %v732 = vmul.f32 %v643, %v728
      %v733 = vmul.f32 %v646, %v728
      %v734 = vmul.f32 %v649, %v728
      %v735 = vmul.f32 %v652, %v728
      %v736 = vmul.f32 %v655, %v728
      %v737 = vmul.f32 %v658, %v728
      %v738 = vmul.f32 %v661, %v728
      %v739 = vmul.f32 %v664, %v728
      %v740 = vmul.f32 %v667, %v728
      %v741 = vmul.f32 %v670, %v728
      %v742 = vmul.f32 %v673, %v728
      %v743 = vmul.f32 %v676, %v728
      %v744 = vmul.f32 %v679, %v728
      %v745 = vmul.f32 %v682, %v728
      %v746 = vmul.f32 %v685, %v728
      %v747 = vmul.f32 %v688, %v728
      %v748 = vmul.f32 %v691, %v728
      %v749 = vmul.f32 %v694, %v728
      %v750 = vmul.f32 %v697, %v728
      %v751 = vmul.f32 %v700, %v728
      %v752 = vmul.f32 %v703, %v728
      %v753 = vmul.f32 %v706, %v728
      %v754 = vmul.f32 %v709, %v728
      %v755 = vmul.f32 %v712, %v728
      %v756 = vmul.f32 %v715, %v728
      %v757 = vmul.f32 %v718, %v728
      %v758 = vmul.f32 %v721, %v728
      %v759 = vmul.f32 %v724, %v728
      %v760 = vmul.f32 %v727, %v728
      %v761 = vsub.f32 %v599, %v729
      %v762 = vsub.f32 %v600, %v730
      %v763 = vsub.f32 %v601, %v731
      %v764 = vsub.f32 %v602, %v732
      %v765 = vsub.f32 %v603, %v733
      %v766 = vsub.f32 %v604, %v734
      %v767 = vsub.f32 %v605, %v735
      %v768 = vsub.f32 %v606, %v736
      %v769 = vsub.f32 %v607, %v737
      %v770 = vsub.f32 %v608, %v738
      %v771 = vsub.f32 %v609, %v739
      %v772 = vsub.f32 %v610, %v740
      %v773 = vsub.f32 %v611, %v741
      %v774 = vsub.f32 %v612, %v742
      %v775 = vsub.f32 %v613, %v743
      %v776 = vsub.f32 %v614, %v744
      %v777 = vsub.f32 %v615, %v745
      %v778 = vsub.f32 %v616, %v746
      %v779 = vsub.f32 %v617, %v747
      %v780 = vsub.f32 %v618, %v748
      %v781 = vsub.f32 %v619, %v749
      %v782 = vsub.f32 %v620, %v750
      %v783 = vsub.f32 %v621, %v751
      %v784 = vsub.f32 %v622, %v752
      %v785 = vsub.f32 %v623, %v753
      %v786 = vsub.f32 %v624, %v754
      %v787 = vsub.f32 %v625, %v755
      %v788 = vsub.f32 %v626, %v756
      %v789 = vsub.f32 %v627, %v757
      %v790 = vsub.f32 %v628, %v758
      %v791 = vsub.f32 %v629, %v759
      %v792 = vsub.f32 %v630, %v760
      %v793 = vmul.f32 %v761, %v761
      %v794 = vmul.f32 %v762, %v762
      %v795 = vmul.f32 %v763, %v763
      %v796 = vmul.f32 %v764, %v764
      %v797 = vmul.f32 %v765, %v765
      %v798 = vmul.f32 %v766, %v766
      %v799 = vmul.f32 %v767, %v767
      %v800 = vmul.f32 %v768, %v768
      %v801 = vmul.f32 %v769, %v769
      %v802 = vmul.f32 %v770, %v770
      %v803 = vmul.f32 %v771, %v771
      %v804 = vmul.f32 %v772, %v772
      %v805 = vmul.f32 %v773, %v773
      %v806 = vmul.f32 %v774, %v774
      %v807 = vmul.f32 %v775, %v775
      %v808 = vmul.f32 %v776, %v776
      %v809 = vmul.f32 %v777, %v777
      %v810 = vmul.f32 %v778, %v778
      %v811 = vmul.f32 %v779, %v779
      %v812 = vmul.f32 %v780, %v780
      %v813 = vmul.f32 %v781, %v781
      %v814 = vmul.f32 %v782, %v782
      %v815 = vmul.f32 %v783, %v783
      %v816 = vmul.f32 %v784, %v784
      %v817 = vmul.f32 %v785, %v785
      %v818 = vmul.f32 %v786, %v786
      %v819 = vmul.f32 %v787, %v787
      %v820 = vmul.f32 %v788, %v788
      %v821 = vmul.f32 %v789, %v789
      %v822 = vmul.f32 %v790, %v790
      %v823 = vmul.f32 %v791, %v791
      %v824 = vmul.f32 %v792, %v792
      %v825 = vsel %vm631, %v793, 0.0
      %826 = vadd.xlane.f32.xlu0 %v825
      %v827 = vpop.xlane.xlu0 %826
      %v828 = vsel %vm631, %v794, 0.0
      %829 = vadd.xlane.f32.xlu0 %v828
      %v830 = vpop.xlane.xlu0 %829
      %v831 = vsel %vm631, %v795, 0.0
      %832 = vadd.xlane.f32.xlu0 %v831
      %v833 = vpop.xlane.xlu0 %832
      %v834 = vsel %vm631, %v796, 0.0
      %835 = vadd.xlane.f32.xlu0 %v834
      %v836 = vpop.xlane.xlu0 %835
      %v837 = vsel %vm631, %v797, 0.0
      %838 = vadd.xlane.f32.xlu0 %v837
      %v839 = vpop.xlane.xlu0 %838
      %v840 = vsel %vm631, %v798, 0.0
      %841 = vadd.xlane.f32.xlu0 %v840
      %v842 = vpop.xlane.xlu0 %841
      %v843 = vsel %vm631, %v799, 0.0
      %844 = vadd.xlane.f32.xlu0 %v843
      %v845 = vpop.xlane.xlu0 %844
      %v846 = vsel %vm631, %v800, 0.0
      %847 = vadd.xlane.f32.xlu0 %v846
      %v848 = vpop.xlane.xlu0 %847
      %v849 = vsel %vm631, %v801, 0.0
      %850 = vadd.xlane.f32.xlu0 %v849
      %v851 = vpop.xlane.xlu0 %850
      %v852 = vsel %vm631, %v802, 0.0
      %853 = vadd.xlane.f32.xlu0 %v852
      %v854 = vpop.xlane.xlu0 %853
      %v855 = vsel %vm631, %v803, 0.0
      %856 = vadd.xlane.f32.xlu0 %v855
      %v857 = vpop.xlane.xlu0 %856
      %v858 = vsel %vm631, %v804, 0.0
      %859 = vadd.xlane.f32.xlu0 %v858
      %v860 = vpop.xlane.xlu0 %859
      %v861 = vsel %vm631, %v805, 0.0
      %862 = vadd.xlane.f32.xlu0 %v861
      %v863 = vpop.xlane.xlu0 %862
      %v864 = vsel %vm631, %v806, 0.0
      %865 = vadd.xlane.f32.xlu0 %v864
      %v866 = vpop.xlane.xlu0 %865
      %v867 = vsel %vm631, %v807, 0.0
      %868 = vadd.xlane.f32.xlu0 %v867
      %v869 = vpop.xlane.xlu0 %868
      %v870 = vsel %vm631, %v808, 0.0
      %871 = vadd.xlane.f32.xlu0 %v870
      %v872 = vpop.xlane.xlu0 %871
      %v873 = vsel %vm631, %v809, 0.0
      %874 = vadd.xlane.f32.xlu0 %v873
      %v875 = vpop.xlane.xlu0 %874
      %v876 = vsel %vm631, %v810, 0.0
      %877 = vadd.xlane.f32.xlu0 %v876
      %v878 = vpop.xlane.xlu0 %877
      %v879 = vsel %vm631, %v811, 0.0
      %880 = vadd.xlane.f32.xlu0 %v879
      %v881 = vpop.xlane.xlu0 %880
      %v882 = vsel %vm631, %v812, 0.0
      %883 = vadd.xlane.f32.xlu0 %v882
      %v884 = vpop.xlane.xlu0 %883
      %v885 = vsel %vm631, %v813, 0.0
      %886 = vadd.xlane.f32.xlu0 %v885
      %v887 = vpop.xlane.xlu0 %886
      %v888 = vsel %vm631, %v814, 0.0
      %889 = vadd.xlane.f32.xlu0 %v888
      %v890 = vpop.xlane.xlu0 %889
      %v891 = vsel %vm631, %v815, 0.0
      %892 = vadd.xlane.f32.xlu0 %v891
      %v893 = vpop.xlane.xlu0 %892
      %v894 = vsel %vm631, %v816, 0.0
      %895 = vadd.xlane.f32.xlu0 %v894
      %v896 = vpop.xlane.xlu0 %895
      %v897 = vsel %vm631, %v817, 0.0
      %898 = vadd.xlane.f32.xlu0 %v897
      %v899 = vpop.xlane.xlu0 %898
      %v900 = vsel %vm631, %v818, 0.0
      %901 = vadd.xlane.f32.xlu0 %v900
      %v902 = vpop.xlane.xlu0 %901
      %v903 = vsel %vm631, %v819, 0.0
      %904 = vadd.xlane.f32.xlu0 %v903
      %v905 = vpop.xlane.xlu0 %904
      %v906 = vsel %vm631, %v820, 0.0
      %907 = vadd.xlane.f32.xlu0 %v906
      %v908 = vpop.xlane.xlu0 %907
      %v909 = vsel %vm631, %v821, 0.0
      %910 = vadd.xlane.f32.xlu0 %v909
      %v911 = vpop.xlane.xlu0 %910
      %v912 = vsel %vm631, %v822, 0.0
      %913 = vadd.xlane.f32.xlu0 %v912
      %v914 = vpop.xlane.xlu0 %913
      %v915 = vsel %vm631, %v823, 0.0
      %916 = vadd.xlane.f32.xlu0 %v915
      %v917 = vpop.xlane.xlu0 %916
      %v918 = vsel %vm631, %v824, 0.0
      %919 = vadd.xlane.f32.xlu0 %v918
      %v920 = vpop.xlane.xlu0 %919
      %v921 = vmul.f32 %v827, %v728
      %v922 = vmul.f32 %v830, %v728
      %v923 = vmul.f32 %v833, %v728
      %v924 = vmul.f32 %v836, %v728
      %v925 = vmul.f32 %v839, %v728
      %v926 = vmul.f32 %v842, %v728
      %v927 = vmul.f32 %v845, %v728
      %v928 = vmul.f32 %v848, %v728
      %v929 = vmul.f32 %v851, %v728
      %v930 = vmul.f32 %v854, %v728
      %v931 = vmul.f32 %v857, %v728
      %v932 = vmul.f32 %v860, %v728
      %v933 = vmul.f32 %v863, %v728
      %v934 = vmul.f32 %v866, %v728
      %v935 = vmul.f32 %v869, %v728
      %v936 = vmul.f32 %v872, %v728
      %v937 = vmul.f32 %v875, %v728
      %v938 = vmul.f32 %v878, %v728
      %v939 = vmul.f32 %v881, %v728
      %v940 = vmul.f32 %v884, %v728
      %v941 = vmul.f32 %v887, %v728
      %v942 = vmul.f32 %v890, %v728
      %v943 = vmul.f32 %v893, %v728
      %v944 = vmul.f32 %v896, %v728
      %v945 = vmul.f32 %v899, %v728
      %v946 = vmul.f32 %v902, %v728
      %v947 = vmul.f32 %v905, %v728
      %v948 = vmul.f32 %v908, %v728
      %v949 = vmul.f32 %v911, %v728
      %v950 = vmul.f32 %v914, %v728
      %v951 = vmul.f32 %v917, %v728
      %v952 = vmul.f32 %v920, %v728
      %v953 = vadd.f32 %v921, 1e-06
      %v954 = vadd.f32 %v922, 1e-06
      %v955 = vadd.f32 %v923, 1e-06
      %v956 = vadd.f32 %v924, 1e-06
      %v957 = vadd.f32 %v925, 1e-06
      %v958 = vadd.f32 %v926, 1e-06
      %v959 = vadd.f32 %v927, 1e-06
      %v960 = vadd.f32 %v928, 1e-06
      %v961 = vadd.f32 %v929, 1e-06
      %v962 = vadd.f32 %v930, 1e-06
      %v963 = vadd.f32 %v931, 1e-06
      %v964 = vadd.f32 %v932, 1e-06
      %v965 = vadd.f32 %v933, 1e-06
      %v966 = vadd.f32 %v934, 1e-06
      %v967 = vadd.f32 %v935, 1e-06
      %v968 = vadd.f32 %v936, 1e-06
      %v969 = vadd.f32 %v937, 1e-06
      %v970 = vadd.f32 %v938, 1e-06
      %v971 = vadd.f32 %v939, 1e-06
      %v972 = vadd.f32 %v940, 1e-06
      %v973 = vadd.f32 %v941, 1e-06
      %v974 = vadd.f32 %v942, 1e-06
      %v975 = vadd.f32 %v943, 1e-06
      %v976 = vadd.f32 %v944, 1e-06
      %v977 = vadd.f32 %v945, 1e-06
      %v978 = vadd.f32 %v946, 1e-06
      %v979 = vadd.f32 %v947, 1e-06
      %v980 = vadd.f32 %v948, 1e-06
      %v981 = vadd.f32 %v949, 1e-06
      %v982 = vadd.f32 %v950, 1e-06
      %v983 = vadd.f32 %v951, 1e-06
      %v984 = vadd.f32 %v952, 1e-06
      %v985 = vrsqrt.pop %v953
      %v986 = vrsqrt.pop %v954
      %v987 = vrsqrt.pop %v955
      %v988 = vrsqrt.pop %v956
      %v989 = vrsqrt.pop %v957
      %v990 = vrsqrt.pop %v958
      %v991 = vrsqrt.pop %v959
      %v992 = vrsqrt.pop %v960
      %v993 = vrsqrt.pop %v961
      %v994 = vrsqrt.pop %v962
      %v995 = vrsqrt.pop %v963
      %v996 = vrsqrt.pop %v964
      %v997 = vrsqrt.pop %v965
      %v998 = vrsqrt.pop %v966
      %v999 = vrsqrt.pop %v967
      %v1000 = vrsqrt.pop %v968
      %v1001 = vrsqrt.pop %v969
      %v1002 = vrsqrt.pop %v970
      %v1003 = vrsqrt.pop %v971
      %v1004 = vrsqrt.pop %v972
      %v1005 = vrsqrt.pop %v973
      %v1006 = vrsqrt.pop %v974
      %v1007 = vrsqrt.pop %v975
      %v1008 = vrsqrt.pop %v976
      %v1009 = vrsqrt.pop %v977
      %v1010 = vrsqrt.pop %v978
      %v1011 = vrsqrt.pop %v979
      %v1012 = vrsqrt.pop %v980
      %v1013 = vrsqrt.pop %v981
      %v1014 = vrsqrt.pop %v982
      %v1015 = vrsqrt.pop %v983
      %v1016 = vrsqrt.pop %v984
      %v1017 = vmul.f32 %v761, %v985
      %v1018 = vmul.f32 %v762, %v986
      %v1019 = vmul.f32 %v763, %v987
      %v1020 = vmul.f32 %v764, %v988
      %v1021 = vmul.f32 %v765, %v989
      %v1022 = vmul.f32 %v766, %v990
      %v1023 = vmul.f32 %v767, %v991
      %v1024 = vmul.f32 %v768, %v992
      %v1025 = vmul.f32 %v769, %v993
      %v1026 = vmul.f32 %v770, %v994
      %v1027 = vmul.f32 %v771, %v995
      %v1028 = vmul.f32 %v772, %v996
      %v1029 = vmul.f32 %v773, %v997
      %v1030 = vmul.f32 %v774, %v998
      %v1031 = vmul.f32 %v775, %v999
      %v1032 = vmul.f32 %v776, %v1000
      %v1033 = vmul.f32 %v777, %v1001
      %v1034 = vmul.f32 %v778, %v1002
      %v1035 = vmul.f32 %v779, %v1003
      %v1036 = vmul.f32 %v780, %v1004
      %v1037 = vmul.f32 %v781, %v1005
      %v1038 = vmul.f32 %v782, %v1006
      %v1039 = vmul.f32 %v783, %v1007
      %v1040 = vmul.f32 %v784, %v1008
      %v1041 = vmul.f32 %v785, %v1009
      %v1042 = vmul.f32 %v786, %v1010
      %v1043 = vmul.f32 %v787, %v1011
      %v1044 = vmul.f32 %v788, %v1012
      %v1045 = vmul.f32 %v789, %v1013
      %v1046 = vmul.f32 %v790, %v1014
      %v1047 = vmul.f32 %v791, %v1015
      %v1048 = vmul.f32 %v792, %v1016
      %v1049 = vld [vmem:[%s438] sm:$0x1]
      %v1051 = vlaneseq
      %v1052 = vshrl.u32 %v1051, 7
      %v1053 = vsub.s32 0, %v1052
      %v1054 = vrot.slane %v1049, %v1053
      %v1056 = vmul.f32 %v1017, %v1054
      %v1057 = vmul.f32 %v1018, %v1054
      %v1058 = vmul.f32 %v1019, %v1054
      %v1059 = vmul.f32 %v1020, %v1054
      %v1060 = vmul.f32 %v1021, %v1054
      %v1061 = vmul.f32 %v1022, %v1054
      %v1062 = vmul.f32 %v1023, %v1054
      %v1063 = vmul.f32 %v1024, %v1054
      %v1064 = vmul.f32 %v1025, %v1054
      %v1065 = vmul.f32 %v1026, %v1054
      %v1066 = vmul.f32 %v1027, %v1054
      %v1067 = vmul.f32 %v1028, %v1054
      %v1068 = vmul.f32 %v1029, %v1054
      %v1069 = vmul.f32 %v1030, %v1054
      %v1070 = vmul.f32 %v1031, %v1054
      %v1071 = vmul.f32 %v1032, %v1054
      %v1072 = vmul.f32 %v1033, %v1054
      %v1073 = vmul.f32 %v1034, %v1054
      %v1074 = vmul.f32 %v1035, %v1054
      %v1075 = vmul.f32 %v1036, %v1054
      %v1076 = vmul.f32 %v1037, %v1054
      %v1077 = vmul.f32 %v1038, %v1054
      %v1078 = vmul.f32 %v1039, %v1054
      %v1079 = vmul.f32 %v1040, %v1054
      %v1080 = vmul.f32 %v1041, %v1054
      %v1081 = vmul.f32 %v1042, %v1054
      %v1082 = vmul.f32 %v1043, %v1054
      %v1083 = vmul.f32 %v1044, %v1054
      %v1084 = vmul.f32 %v1045, %v1054
      %v1085 = vmul.f32 %v1046, %v1054
      %v1086 = vmul.f32 %v1047, %v1054
      %v1087 = vmul.f32 %v1048, %v1054
      %v1088 = vld [vmem:[%s441] sm:$0x1]
      %v1090 = vlaneseq
      %v1091 = vshrl.u32 %v1090, 7
      %v1092 = vsub.s32 0, %v1091
      %v1093 = vrot.slane %v1088, %v1092
      %v1095 = vadd.f32 %v1056, %v1093
      %v1096 = vadd.f32 %v1057, %v1093
      %v1097 = vadd.f32 %v1058, %v1093
      %v1098 = vadd.f32 %v1059, %v1093
      %v1099 = vadd.f32 %v1060, %v1093
      %v1100 = vadd.f32 %v1061, %v1093
      %v1101 = vadd.f32 %v1062, %v1093
      %v1102 = vadd.f32 %v1063, %v1093
      %v1103 = vadd.f32 %v1064, %v1093
      %v1104 = vadd.f32 %v1065, %v1093
      %v1105 = vadd.f32 %v1066, %v1093
      %v1106 = vadd.f32 %v1067, %v1093
      %v1107 = vadd.f32 %v1068, %v1093
      %v1108 = vadd.f32 %v1069, %v1093
      %v1109 = vadd.f32 %v1070, %v1093
      %v1110 = vadd.f32 %v1071, %v1093
      %v1111 = vadd.f32 %v1072, %v1093
      %v1112 = vadd.f32 %v1073, %v1093
      %v1113 = vadd.f32 %v1074, %v1093
      %v1114 = vadd.f32 %v1075, %v1093
      %v1115 = vadd.f32 %v1076, %v1093
      %v1116 = vadd.f32 %v1077, %v1093
      %v1117 = vadd.f32 %v1078, %v1093
      %v1118 = vadd.f32 %v1079, %v1093
      %v1119 = vadd.f32 %v1080, %v1093
      %v1120 = vadd.f32 %v1081, %v1093
      %v1121 = vadd.f32 %v1082, %v1093
      %v1122 = vadd.f32 %v1083, %v1093
      %v1123 = vadd.f32 %v1084, %v1093
      %v1124 = vadd.f32 %v1085, %v1093
      %v1125 = vadd.f32 %v1086, %v1093
      %v1126 = vadd.f32 %v1087, %v1093
      %v1127 = vld [vmem:[%s445] sm:$0xff]
      %v1128 = vld [vmem:[%s448] sm:$0x1]
      %v1130 = vlaneseq
      %v1131 = vshrl.u32 %v1130, 7
      %v1132 = vsub.s32 0, %v1131
      %v1133 = vrot.slane %v1128, %v1132
      %v1136 = vsel %vm631, %v1095, 0
      %v1139 = vsel %vm631, %v1096, 0
      %v1142 = vsel %vm631, %v1097, 0
      %v1145 = vsel %vm631, %v1098, 0
      %v1148 = vsel %vm631, %v1099, 0
      %v1151 = vsel %vm631, %v1100, 0
      %v1154 = vsel %vm631, %v1101, 0
      %v1157 = vsel %vm631, %v1102, 0
      %v1160 = vsel %vm631, %v1103, 0
      %v1163 = vsel %vm631, %v1104, 0
      %v1166 = vsel %vm631, %v1105, 0
      %v1169 = vsel %vm631, %v1106, 0
      %v1172 = vsel %vm631, %v1107, 0
      %v1175 = vsel %vm631, %v1108, 0
      %v1178 = vsel %vm631, %v1109, 0
      %v1181 = vsel %vm631, %v1110, 0
      %v1184 = vsel %vm631, %v1111, 0
      %v1187 = vsel %vm631, %v1112, 0
      %v1190 = vsel %vm631, %v1113, 0
      %v1193 = vsel %vm631, %v1114, 0
      %v1196 = vsel %vm631, %v1115, 0
      %v1199 = vsel %vm631, %v1116, 0
      %v1202 = vsel %vm631, %v1117, 0
      %v1205 = vsel %vm631, %v1118, 0
      %v1208 = vsel %vm631, %v1119, 0
      %v1211 = vsel %vm631, %v1120, 0
      %v1214 = vsel %vm631, %v1121, 0
      %v1217 = vsel %vm631, %v1122, 0
      %v1220 = vsel %vm631, %v1123, 0
      %v1223 = vsel %vm631, %v1124, 0
      %v1226 = vsel %vm631, %v1125, 0
      %v1229 = vsel %vm631, %v1126, 0
      %1231 = vmatprep.subr.mxu0 0.0
      %1232 = vmatpush1.msra.mxu0 %v1127
      %1233 = vmatprep.subr.mxu0 0.0
      %1234 = vmatpush1.msra.mxu0 0.0
      %1235 = vmatprep.subr.mxu0 0.0
      %1236 = vmatpush1.msra.mxu0 0.0
      %1237 = vmatprep.subr.mxu0 0.0
      %1238 = vmatpush1.msra.mxu0 0.0
      %1239 = vmatprep.subr.mxu0 0.0
      %1240 = vmatpush1.msra.mxu0 0.0
      %1241 = vmatprep.subr.mxu0 0.0
      %1242 = vmatpush1.msra.mxu0 0.0
      %1243 = vmatprep.subr.mxu0 0.0
      %1244 = vmatpush1.msra.mxu0 0.0
      %1245 = vmatprep.subr.mxu0 0.0
      %1246 = vmatpush1.msra.mxu0 0.0
      %1247 = vmatprep.subr.mxu0 0.0
      %1248 = vmatpush1.msra.mxu0 0.0
      %1249 = vmatprep.subr.mxu0 0.0
      %1250 = vmatpush1.msra.mxu0 0.0
      %1251 = vmatprep.subr.mxu0 0.0
      %1252 = vmatpush1.msra.mxu0 0.0
      %1253 = vmatprep.subr.mxu0 0.0
      %1254 = vmatpush1.msra.mxu0 0.0
      %1255 = vmatprep.subr.mxu0 0.0
      %1256 = vmatpush1.msra.mxu0 0.0
      %1257 = vmatprep.subr.mxu0 0.0
      %1258 = vmatpush1.msra.mxu0 0.0
      %1259 = vmatprep.subr.mxu0 0.0
      %1260 = vmatpush1.msra.mxu0 0.0
      %1261 = vmatprep.subr.mxu0 0.0
      %1262 = vmatpush1.msra.mxu0 0.0
      %1263 = vmatprep.subr.mxu0 0.0
      %1264 = vmatpush1.msra.mxu0 0.0
      %1265 = vmatprep.subr.mxu0 0.0
      %1266 = vmatpush1.msra.mxu0 0.0
      %1267 = vmatprep.subr.mxu0 0.0
      %1268 = vmatpush1.msra.mxu0 0.0
      %1269 = vmatprep.subr.mxu0 0.0
      %1270 = vmatpush1.msra.mxu0 0.0
      %1271 = vmatprep.subr.mxu0 0.0
      %1272 = vmatpush1.msra.mxu0 0.0
      %1273 = vmatprep.subr.mxu0 0.0
      %1274 = vmatpush1.msra.mxu0 0.0
      %1275 = vmatprep.subr.mxu0 0.0
      %1276 = vmatpush1.msra.mxu0 0.0
      %1277 = vmatprep.subr.mxu0 0.0
      %1278 = vmatpush1.msra.mxu0 0.0
      %1279 = vmatprep.subr.mxu0 0.0
      %1280 = vmatpush1.msra.mxu0 0.0
      %1281 = vmatprep.subr.mxu0 0.0
      %1282 = vmatpush1.msra.mxu0 0.0
      %1283 = vmatprep.subr.mxu0 0.0
      %1284 = vmatpush1.msra.mxu0 0.0
      %1285 = vmatprep.subr.mxu0 0.0
      %1286 = vmatpush1.msra.mxu0 0.0
      %1287 = vmatprep.subr.mxu0 0.0
      %1288 = vmatpush1.msra.mxu0 0.0
      %1289 = vmatprep.subr.mxu0 0.0
      %1290 = vmatpush1.msra.mxu0 0.0
      %1291 = vmatprep.subr.mxu0 0.0
      %1292 = vmatpush1.msra.mxu0 0.0
      %1293 = vmatprep.subr.mxu0 0.0
      %1294 = vmatpush1.msra.mxu0 0.0
      %1295 = vmatprep.mubr.f32.mxu0 0.0
      %1296 = vmatmul.mubr.f32.gmra.mrb[0].mxu0 %v1136
      %v1297 = vpop.f32.mrb[0].mxu0
      %v1298 = vadd.f32 %v1133, %v1297
      %v1299 = vpop.f32.mrb[0].mxu0
      %1300 = vmatprep.mubr.f32.mxu0 0.0
      %1301 = vmatmul.mubr.f32.gmra.mrb[0].mxu0 %v1139
      %v1302 = vpop.f32.mrb[0].mxu0
      %v1303 = vadd.f32 %v1133, %v1302
      %v1304 = vpop.f32.mrb[0].mxu0
      %1305 = vmatprep.mubr.f32.mxu0 0.0
      %1306 = vmatmul.mubr.f32.gmra.mrb[0].mxu0 %v1142
      %v1307 = vpop.f32.mrb[0].mxu0
      %v1308 = vadd.f32 %v1133, %v1307
      %v1309 = vpop.f32.mrb[0].mxu0
      %1310 = vmatprep.mubr.f32.mxu0 0.0
      %1311 = vmatmul.mubr.f32.gmra.mrb[0].mxu0 %v1145
      %v1312 = vpop.f32.mrb[0].mxu0
      %v1313 = vadd.f32 %v1133, %v1312
      %v1314 = vpop.f32.mrb[0].mxu0
      %1315 = vmatprep.mubr.f32.mxu0 0.0
      %1316 = vmatmul.mubr.f32.gmra.mrb[0].mxu0 %v1148
      %v1317 = vpop.f32.mrb[0].mxu0
      %v1318 = vadd.f32 %v1133, %v1317
      %v1319 = vpop.f32.mrb[0].mxu0
      %1320 = vmatprep.mubr.f32.mxu0 0.0
      %1321 = vmatmul.mubr.f32.gmra.mrb[0].mxu0 %v1151
      %v1322 = vpop.f32.mrb[0].mxu0
      %v1323 = vadd.f32 %v1133, %v1322
      %v1324 = vpop.f32.mrb[0].mxu0
      %1325 = vmatprep.mubr.f32.mxu0 0.0
      %1326 = vmatmul.mubr.f32.gmra.mrb[0].mxu0 %v1154
      %v1327 = vpop.f32.mrb[0].mxu0
      %v1328 = vadd.f32 %v1133, %v1327
      %v1329 = vpop.f32.mrb[0].mxu0
      %1330 = vmatprep.mubr.f32.mxu0 0.0
      %1331 = vmatmul.mubr.f32.gmra.mrb[0].mxu0 %v1157
      %v1332 = vpop.f32.mrb[0].mxu0
      %v1333 = vadd.f32 %v1133, %v1332
      %v1334 = vpop.f32.mrb[0].mxu0
      %1335 = vmatprep.mubr.f32.mxu0 0.0
      %1336 = vmatmul.mubr.f32.gmra.mrb[0].mxu0 %v1160
      %v1337 = vpop.f32.mrb[0].mxu0
      %v1338 = vadd.f32 %v1133, %v1337
      %v1339 = vpop.f32.mrb[0].mxu0
      %1340 = vmatprep.mubr.f32.mxu0 0.0
      %1341 = vmatmul.mubr.f32.gmra.mrb[0].mxu0 %v1163
      %v1342 = vpop.f32.mrb[0].mxu0
      %v1343 = vadd.f32 %v1133, %v1342
      %v1344 = vpop.f32.mrb[0].mxu0
      %1345 = vmatprep.mubr.f32.mxu0 0.0
      %1346 = vmatmul.mubr.f32.gmra.mrb[0].mxu0 %v1166
      %v1347 = vpop.f32.mrb[0].mxu0
      %v1348 = vadd.f32 %v1133, %v1347
      %v1349 = vpop.f32.mrb[0].mxu0
      %1350 = vmatprep.mubr.f32.mxu0 0.0
      %1351 = vmatmul.mubr.f32.gmra.mrb[0].mxu0 %v1169
      %v1352 = vpop.f32.mrb[0].mxu0
      %v1353 = vadd.f32 %v1133, %v1352
      %v1354 = vpop.f32.mrb[0].mxu0
      %1355 = vmatprep.mubr.f32.mxu0 0.0
      %1356 = vmatmul.mubr.f32.gmra.mrb[0].mxu0 %v1172
      %v1357 = vpop.f32.mrb[0].mxu0
      %v1358 = vadd.f32 %v1133, %v1357
      %v1359 = vpop.f32.mrb[0].mxu0
      %1360 = vmatprep.mubr.f32.mxu0 0.0
      %1361 = vmatmul.mubr.f32.gmra.mrb[0].mxu0 %v1175
      %v1362 = vpop.f32.mrb[0].mxu0
      %v1363 = vadd.f32 %v1133, %v1362
      %v1364 = vpop.f32.mrb[0].mxu0
      %1365 = vmatprep.mubr.f32.mxu0 0.0
      %1366 = vmatmul.mubr.f32.gmra.mrb[0].mxu0 %v1178
      %v1367 = vpop.f32.mrb[0].mxu0
      %v1368 = vadd.f32 %v1133, %v1367
      %v1369 = vpop.f32.mrb[0].mxu0
      %1370 = vmatprep.mubr.f32.mxu0 0.0
      %1371 = vmatmul.mubr.f32.gmra.mrb[0].mxu0 %v1181
      %v1372 = vpop.f32.mrb[0].mxu0
      %v1373 = vadd.f32 %v1133, %v1372
      %v1374 = vpop.f32.mrb[0].mxu0
      %1375 = vmatprep.mubr.f32.mxu0 0.0
      %1376 = vmatmul.mubr.f32.gmra.mrb[0].mxu0 %v1184
      %v1377 = vpop.f32.mrb[0].mxu0
      %v1378 = vadd.f32 %v1133, %v1377
      %v1379 = vpop.f32.mrb[0].mxu0
      %1380 = vmatprep.mubr.f32.mxu0 0.0
      %1381 = vmatmul.mubr.f32.gmra.mrb[0].mxu0 %v1187
      %v1382 = vpop.f32.mrb[0].mxu0
      %v1383 = vadd.f32 %v1133, %v1382
      %v1384 = vpop.f32.mrb[0].mxu0
      %1385 = vmatprep.mubr.f32.mxu0 0.0
      %1386 = vmatmul.mubr.f32.gmra.mrb[0].mxu0 %v1190
      %v1387 = vpop.f32.mrb[0].mxu0
      %v1388 = vadd.f32 %v1133, %v1387
      %v1389 = vpop.f32.mrb[0].mxu0
      %1390 = vmatprep.mubr.f32.mxu0 0.0
      %1391 = vmatmul.mubr.f32.gmra.mrb[0].mxu0 %v1193
      %v1392 = vpop.f32.mrb[0].mxu0
      %v1393 = vadd.f32 %v1133, %v1392
      %v1394 = vpop.f32.mrb[0].mxu0
      %1395 = vmatprep.mubr.f32.mxu0 0.0
      %1396 = vmatmul.mubr.f32.gmra.mrb[0].mxu0 %v1196
      %v1397 = vpop.f32.mrb[0].mxu0
      %v1398 = vadd.f32 %v1133, %v1397
      %v1399 = vpop.f32.mrb[0].mxu0
      %1400 = vmatprep.mubr.f32.mxu0 0.0
      %1401 = vmatmul.mubr.f32.gmra.mrb[0].mxu0 %v1199
      %v1402 = vpop.f32.mrb[0].mxu0
      %v1403 = vadd.f32 %v1133, %v1402
      %v1404 = vpop.f32.mrb[0].mxu0
      %1405 = vmatprep.mubr.f32.mxu0 0.0
      %1406 = vmatmul.mubr.f32.gmra.mrb[0].mxu0 %v1202
      %v1407 = vpop.f32.mrb[0].mxu0
      %v1408 = vadd.f32 %v1133, %v1407
      %v1409 = vpop.f32.mrb[0].mxu0
      %1410 = vmatprep.mubr.f32.mxu0 0.0
      %1411 = vmatmul.mubr.f32.gmra.mrb[0].mxu0 %v1205
      %v1412 = vpop.f32.mrb[0].mxu0
      %v1413 = vadd.f32 %v1133, %v1412
      %v1414 = vpop.f32.mrb[0].mxu0
      %1415 = vmatprep.mubr.f32.mxu0 0.0
      %1416 = vmatmul.mubr.f32.gmra.mrb[0].mxu0 %v1208
      %v1417 = vpop.f32.mrb[0].mxu0
      %v1418 = vadd.f32 %v1133, %v1417
      %v1419 = vpop.f32.mrb[0].mxu0
      %1420 = vmatprep.mubr.f32.mxu0 0.0
      %1421 = vmatmul.mubr.f32.gmra.mrb[0].mxu0 %v1211
      %v1422 = vpop.f32.mrb[0].mxu0
      %v1423 = vadd.f32 %v1133, %v1422
      %v1424 = vpop.f32.mrb[0].mxu0
      %1425 = vmatprep.mubr.f32.mxu0 0.0
      %1426 = vmatmul.mubr.f32.gmra.mrb[0].mxu0 %v1214
      %v1427 = vpop.f32.mrb[0].mxu0
      %v1428 = vadd.f32 %v1133, %v1427
      %v1429 = vpop.f32.mrb[0].mxu0
      %1430 = vmatprep.mubr.f32.mxu0 0.0
      %1431 = vmatmul.mubr.f32.gmra.mrb[0].mxu0 %v1217
      %v1432 = vpop.f32.mrb[0].mxu0
      %v1433 = vadd.f32 %v1133, %v1432
      %v1434 = vpop.f32.mrb[0].mxu0
      %1435 = vmatprep.mubr.f32.mxu0 0.0
      %1436 = vmatmul.mubr.f32.gmra.mrb[0].mxu0 %v1220
      %v1437 = vpop.f32.mrb[0].mxu0
      %v1438 = vadd.f32 %v1133, %v1437
      %v1439 = vpop.f32.mrb[0].mxu0
      %1440 = vmatprep.mubr.f32.mxu0 0.0
      %1441 = vmatmul.mubr.f32.gmra.mrb[0].mxu0 %v1223
      %v1442 = vpop.f32.mrb[0].mxu0
      %v1443 = vadd.f32 %v1133, %v1442
      %v1444 = vpop.f32.mrb[0].mxu0
      %1445 = vmatprep.mubr.f32.mxu0 0.0
      %1446 = vmatmul.mubr.f32.gmra.mrb[0].mxu0 %v1226
      %v1447 = vpop.f32.mrb[0].mxu0
      %v1448 = vadd.f32 %v1133, %v1447
      %v1449 = vpop.f32.mrb[0].mxu0
      %1450 = vmatprep.mubr.f32.mxu0 0.0
      %1451 = vmatmul.mubr.f32.gmra.mrb[0].mxu0 %v1229
      %v1452 = vpop.f32.mrb[0].mxu0
      %v1453 = vadd.f32 %v1133, %v1452
      %v1454 = vpop.f32.mrb[0].mxu0
      %1455 = vdwg.mxu0
      %s1456 = scalar_lea.vmem [#allocation3], 48
      %1457 = vst.msk [vmem:[%s1456 + $0x2] sm:$0xff] %vm631, %v1298
      %1458 = vst.msk [vmem:[%s1456 + $0xa] sm:$0xff] %vm631, %v1303
      %1459 = vst.msk [vmem:[%s1456 + $0x1a] sm:$0xff] %vm631, %v1308
      %1460 = vst.msk [vmem:[%s1456 + $0x22] sm:$0xff] %vm631, %v1313
      %1461 = vst.msk [vmem:[%s1456 + $0x32] sm:$0xff] %vm631, %v1318
      %1462 = vst.msk [vmem:[%s1456 + $0x3a] sm:$0xff] %vm631, %v1323
      %1463 = vst.msk [vmem:[%s1456 + $0x4a] sm:$0xff] %vm631, %v1328
      %1464 = vst.msk [vmem:[%s1456 + $0x52] sm:$0xff] %vm631, %v1333
      %1465 = vst.msk [vmem:[%s1456 + $0x62] sm:$0xff] %vm631, %v1338
      %1466 = vst.msk [vmem:[%s1456 + $0x6a] sm:$0xff] %vm631, %v1343
      %1467 = vst.msk [vmem:[%s1456 + $0x7a] sm:$0xff] %vm631, %v1348
      %1468 = vst.msk [vmem:[%s1456 + $0x82] sm:$0xff] %vm631, %v1353
      %1469 = vst.msk [vmem:[%s1456 + $0x92] sm:$0xff] %vm631, %v1358
      %1470 = vst.msk [vmem:[%s1456 + $0x9a] sm:$0xff] %vm631, %v1363
      %1471 = vst.msk [vmem:[%s1456 + $0xaa] sm:$0xff] %vm631, %v1368
      %1472 = vst.msk [vmem:[%s1456 + $0xb2] sm:$0xff] %vm631, %v1373
      %1473 = vst.msk [vmem:[%s1456 + $0xc2] sm:$0xff] %vm631, %v1378
      %1474 = vst.msk [vmem:[%s1456 + $0xca] sm:$0xff] %vm631, %v1383
      %1475 = vst.msk [vmem:[%s1456 + $0xda] sm:$0xff] %vm631, %v1388
      %1476 = vst.msk [vmem:[%s1456 + $0xe2] sm:$0xff] %vm631, %v1393
      %1477 = vst.msk [vmem:[%s1456 + $0xf2] sm:$0xff] %vm631, %v1398
      %1478 = vst.msk [vmem:[%s1456 + $0xfa] sm:$0xff] %vm631, %v1403
      %1479 = vst.msk [vmem:[%s1456 + $0x10a] sm:$0xff] %vm631, %v1408
      %1480 = vst.msk [vmem:[%s1456 + $0x112] sm:$0xff] %vm631, %v1413
      %1481 = vst.msk [vmem:[%s1456 + $0x122] sm:$0xff] %vm631, %v1418
      %1482 = vst.msk [vmem:[%s1456 + $0x12a] sm:$0xff] %vm631, %v1423
      %1483 = vst.msk [vmem:[%s1456 + $0x13a] sm:$0xff] %vm631, %v1428
      %1484 = vst.msk [vmem:[%s1456 + $0x142] sm:$0xff] %vm631, %v1433
      %1485 = vst.msk [vmem:[%s1456 + $0x152] sm:$0xff] %vm631, %v1438
      %1486 = vst.msk [vmem:[%s1456 + $0x15a] sm:$0xff] %vm631, %v1443
      %1487 = vst.msk [vmem:[%s1456 + $0x16a] sm:$0xff] %vm631, %v1448
      %1488 = vst.msk [vmem:[%s1456 + $0x172] sm:$0xff] %vm631, %v1453
      %v1489 = vld [vmem:[%s453] sm:$0xff]
      %v1490 = vld [vmem:[%s453 + $0x8] sm:$0xff]
      %v1491 = vld [vmem:[%s453 + $0x10] sm:$0xff]
      %v1492 = vld [vmem:[%s453 + $0x18] sm:$0x1]
      %v1493 = vld [vmem:[%s456] sm:$0x1]
      %v1495 = vlaneseq
      %v1496 = vshrl.u32 %v1495, 7
      %v1497 = vsub.s32 0, %v1496
      %v1498 = vrot.slane %v1493, %v1497
      %v1500 = vld [vmem:[#allocation3] sm:$0xff]
      %v1501 = vld [vmem:[#allocation3 + $0x8] sm:$0xff]
      %v1502 = vld [vmem:[#allocation3 + $0x18] sm:$0xff]
      %v1503 = vld [vmem:[#allocation3 + $0x20] sm:$0xff]
      %v1504 = vld [vmem:[#allocation3 + $0x30] sm:$0xff]
      %v1505 = vld [vmem:[#allocation3 + $0x38] sm:$0xff]
      %v1506 = vld [vmem:[#allocation3 + $0x48] sm:$0xff]
      %v1507 = vld [vmem:[#allocation3 + $0x50] sm:$0xff]
      %v1508 = vld [vmem:[#allocation3 + $0x60] sm:$0xff]
      %v1509 = vld [vmem:[#allocation3 + $0x68] sm:$0xff]
      %v1510 = vld [vmem:[#allocation3 + $0x78] sm:$0xff]
      %v1511 = vld [vmem:[#allocation3 + $0x80] sm:$0xff]
      %v1512 = vld [vmem:[#allocation3 + $0x90] sm:$0xff]
      %v1513 = vld [vmem:[#allocation3 + $0x98] sm:$0xff]
      %v1514 = vld [vmem:[#allocation3 + $0xa8] sm:$0xff]
      %v1515 = vld [vmem:[#allocation3 + $0xb0] sm:$0xff]
      %v1516 = vld [vmem:[#allocation3 + $0xc0] sm:$0xff]
      %v1517 = vld [vmem:[#allocation3 + $0xc8] sm:$0xff]
      %v1518 = vld [vmem:[#allocation3 + $0xd8] sm:$0xff]
      %v1519 = vld [vmem:[#allocation3 + $0xe0] sm:$0xff]
      %v1520 = vld [vmem:[#allocation3 + $0xf0] sm:$0xff]
      %v1521 = vld [vmem:[#allocation3 + $0xf8] sm:$0xff]
      %v1522 = vld [vmem:[#allocation3 + $0x108] sm:$0xff]
      %v1523 = vld [vmem:[#allocation3 + $0x110] sm:$0xff]
      %v1524 = vld [vmem:[#allocation3 + $0x120] sm:$0xff]
      %v1525 = vld [vmem:[#allocation3 + $0x128] sm:$0xff]
      %v1526 = vld [vmem:[#allocation3 + $0x138] sm:$0xff]
      %v1527 = vld [vmem:[#allocation3 + $0x140] sm:$0xff]
      %v1528 = vld [vmem:[#allocation3 + $0x150] sm:$0xff]
      %v1529 = vld [vmem:[#allocation3 + $0x158] sm:$0xff]
      %v1530 = vld [vmem:[#allocation3 + $0x168] sm:$0xff]
      %v1531 = vld [vmem:[#allocation3 + $0x170] sm:$0xff]
      %v1532 = vld [vmem:[#allocation3 + $0x180] sm:$0xff]
      %v1533 = vld [vmem:[#allocation3 + $0x188] sm:$0xff]
      %v1534 = vld [vmem:[#allocation3 + $0x198] sm:$0xff]
      %v1535 = vld [vmem:[#allocation3 + $0x1a0] sm:$0xff]
      %v1536 = vld [vmem:[#allocation3 + $0x1b0] sm:$0xff]
      %v1537 = vld [vmem:[#allocation3 + $0x1b8] sm:$0xff]
      %v1538 = vld [vmem:[#allocation3 + $0x1c8] sm:$0xff]
      %v1539 = vld [vmem:[#allocation3 + $0x1d0] sm:$0xff]
      %v1540 = vlaneseq
      %v1541 = vshrl.u32 %v1540, 7
      %v1542 = vsub.s32 0, %v1541
      %v1543 = vrot.slane %v1489, %v1542
      %v1544 = vmul.f32 %v1500, %v1543
      %v1545 = vmul.f32 %v1501, %v1543
      %v1546 = vmul.f32 %v1502, %v1543
      %v1547 = vmul.f32 %v1503, %v1543
      %v1548 = vmul.f32 %v1504, %v1543
      %v1549 = vmul.f32 %v1505, %v1543
      %v1550 = vmul.f32 %v1506, %v1543
      %v1551 = vmul.f32 %v1507, %v1543
      %v1552 = vmul.f32 %v1508, %v1543
      %v1553 = vmul.f32 %v1509, %v1543
      %v1554 = vmul.f32 %v1510, %v1543
      %v1555 = vmul.f32 %v1511, %v1543
      %v1556 = vmul.f32 %v1512, %v1543
      %v1557 = vmul.f32 %v1513, %v1543
      %v1558 = vmul.f32 %v1514, %v1543
      %v1559 = vmul.f32 %v1515, %v1543
      %v1560 = vmul.f32 %v1516, %v1543
      %v1561 = vmul.f32 %v1517, %v1543
      %v1562 = vmul.f32 %v1518, %v1543
      %v1563 = vmul.f32 %v1519, %v1543
      %v1564 = vmul.f32 %v1520, %v1543
      %v1565 = vmul.f32 %v1521, %v1543
      %v1566 = vmul.f32 %v1522, %v1543
      %v1567 = vmul.f32 %v1523, %v1543
      %v1568 = vmul.f32 %v1524, %v1543
      %v1569 = vmul.f32 %v1525, %v1543
      %v1570 = vmul.f32 %v1526, %v1543
      %v1571 = vmul.f32 %v1527, %v1543
      %v1572 = vmul.f32 %v1528, %v1543
      %v1573 = vmul.f32 %v1529, %v1543
      %v1574 = vmul.f32 %v1530, %v1543
      %v1575 = vmul.f32 %v1531, %v1543
      %v1576 = vadd.f32 %v1498, %v1544
      %v1577 = vadd.f32 %v1498, %v1545
      %v1578 = vadd.f32 %v1498, %v1546
      %v1579 = vadd.f32 %v1498, %v1547
      %v1580 = vadd.f32 %v1498, %v1548
      %v1581 = vadd.f32 %v1498, %v1549
      %v1582 = vadd.f32 %v1498, %v1550
      %v1583 = vadd.f32 %v1498, %v1551
      %v1584 = vadd.f32 %v1498, %v1552
      %v1585 = vadd.f32 %v1498, %v1553
      %v1586 = vadd.f32 %v1498, %v1554
      %v1587 = vadd.f32 %v1498, %v1555
      %v1588 = vadd.f32 %v1498, %v1556
      %v1589 = vadd.f32 %v1498, %v1557
      %v1590 = vadd.f32 %v1498, %v1558
      %v1591 = vadd.f32 %v1498, %v1559
      %v1592 = vadd.f32 %v1498, %v1560
      %v1593 = vadd.f32 %v1498, %v1561
      %v1594 = vadd.f32 %v1498, %v1562
      %v1595 = vadd.f32 %v1498, %v1563
      %v1596 = vadd.f32 %v1498, %v1564
      %v1597 = vadd.f32 %v1498, %v1565
      %v1598 = vadd.f32 %v1498, %v1566
      %v1599 = vadd.f32 %v1498, %v1567
      %v1600 = vadd.f32 %v1498, %v1568
      %v1601 = vadd.f32 %v1498, %v1569
      %v1602 = vadd.f32 %v1498, %v1570
      %v1603 = vadd.f32 %v1498, %v1571
      %v1604 = vadd.f32 %v1498, %v1572
      %v1605 = vadd.f32 %v1498, %v1573
      %v1606 = vadd.f32 %v1498, %v1574
      %v1607 = vadd.f32 %v1498, %v1575
      %v1608 = vlaneseq
      %v1609 = vshrl.u32 %v1608, 7
      %v1610 = vsub.s32 5, %v1609
      %v1611 = vrot.slane %v1489, %v1610
      %v1612 = vmul.f32 %v1502, %v1611
      %v1613 = vmul.f32 %v1503, %v1611
      %v1614 = vmul.f32 %v1504, %v1611
      %v1615 = vmul.f32 %v1505, %v1611
      %v1616 = vmul.f32 %v1506, %v1611
      %v1617 = vmul.f32 %v1507, %v1611
      %v1618 = vmul.f32 %v1508, %v1611
      %v1619 = vmul.f32 %v1509, %v1611
      %v1620 = vmul.f32 %v1510, %v1611
      %v1621 = vmul.f32 %v1511, %v1611
      %v1622 = vmul.f32 %v1512, %v1611
      %v1623 = vmul.f32 %v1513, %v1611
      %v1624 = vmul.f32 %v1514, %v1611
      %v1625 = vmul.f32 %v1515, %v1611
      %v1626 = vmul.f32 %v1516, %v1611
      %v1627 = vmul.f32 %v1517, %v1611
      %v1628 = vmul.f32 %v1518, %v1611
      %v1629 = vmul.f32 %v1519, %v1611
      %v1630 = vmul.f32 %v1520, %v1611
      %v1631 = vmul.f32 %v1521, %v1611
      %v1632 = vmul.f32 %v1522, %v1611
      %v1633 = vmul.f32 %v1523, %v1611
      %v1634 = vmul.f32 %v1524, %v1611
      %v1635 = vmul.f32 %v1525, %v1611
      %v1636 = vmul.f32 %v1526, %v1611
      %v1637 = vmul.f32 %v1527, %v1611
      %v1638 = vmul.f32 %v1528, %v1611
      %v1639 = vmul.f32 %v1529, %v1611
      %v1640 = vmul.f32 %v1530, %v1611
      %v1641 = vmul.f32 %v1531, %v1611
      %v1642 = vmul.f32 %v1532, %v1611
      %v1643 = vmul.f32 %v1533, %v1611
      %v1644 = vadd.f32 %v1576, %v1612
      %v1645 = vadd.f32 %v1577, %v1613
      %v1646 = vadd.f32 %v1578, %v1614
      %v1647 = vadd.f32 %v1579, %v1615
      %v1648 = vadd.f32 %v1580, %v1616
      %v1649 = vadd.f32 %v1581, %v1617
      %v1650 = vadd.f32 %v1582, %v1618
      %v1651 = vadd.f32 %v1583, %v1619
      %v1652 = vadd.f32 %v1584, %v1620
      %v1653 = vadd.f32 %v1585, %v1621
      %v1654 = vadd.f32 %v1586, %v1622
      %v1655 = vadd.f32 %v1587, %v1623
      %v1656 = vadd.f32 %v1588, %v1624
      %v1657 = vadd.f32 %v1589, %v1625
      %v1658 = vadd.f32 %v1590, %v1626
      %v1659 = vadd.f32 %v1591, %v1627
      %v1660 = vadd.f32 %v1592, %v1628
      %v1661 = vadd.f32 %v1593, %v1629
      %v1662 = vadd.f32 %v1594, %v1630
      %v1663 = vadd.f32 %v1595, %v1631
      %v1664 = vadd.f32 %v1596, %v1632
      %v1665 = vadd.f32 %v1597, %v1633
      %v1666 = vadd.f32 %v1598, %v1634
      %v1667 = vadd.f32 %v1599, %v1635
      %v1668 = vadd.f32 %v1600, %v1636
      %v1669 = vadd.f32 %v1601, %v1637
      %v1670 = vadd.f32 %v1602, %v1638
      %v1671 = vadd.f32 %v1603, %v1639
      %v1672 = vadd.f32 %v1604, %v1640
      %v1673 = vadd.f32 %v1605, %v1641
      %v1674 = vadd.f32 %v1606, %v1642
      %v1675 = vadd.f32 %v1607, %v1643
      %v1676 = vlaneseq
      %v1677 = vshrl.u32 %v1676, 7
      %v1678 = vsub.s32 2, %v1677
      %v1679 = vrot.slane %v1490, %v1678
      %v1680 = vmul.f32 %v1504, %v1679
      %v1681 = vmul.f32 %v1505, %v1679
      %v1682 = vmul.f32 %v1506, %v1679
      %v1683 = vmul.f32 %v1507, %v1679
      %v1684 = vmul.f32 %v1508, %v1679
      %v1685 = vmul.f32 %v1509, %v1679
      %v1686 = vmul.f32 %v1510, %v1679
      %v1687 = vmul.f32 %v1511, %v1679
      %v1688 = vmul.f32 %v1512, %v1679
      %v1689 = vmul.f32 %v1513, %v1679
      %v1690 = vmul.f32 %v1514, %v1679
      %v1691 = vmul.f32 %v1515, %v1679
      %v1692 = vmul.f32 %v1516, %v1679
      %v1693 = vmul.f32 %v1517, %v1679
      %v1694 = vmul.f32 %v1518, %v1679
      %v1695 = vmul.f32 %v1519, %v1679
      %v1696 = vmul.f32 %v1520, %v1679
      %v1697 = vmul.f32 %v1521, %v1679
      %v1698 = vmul.f32 %v1522, %v1679
      %v1699 = vmul.f32 %v1523, %v1679
      %v1700 = vmul.f32 %v1524, %v1679
      %v1701 = vmul.f32 %v1525, %v1679
      %v1702 = vmul.f32 %v1526, %v1679
      %v1703 = vmul.f32 %v1527, %v1679
      %v1704 = vmul.f32 %v1528, %v1679
      %v1705 = vmul.f32 %v1529, %v1679
      %v1706 = vmul.f32 %v1530, %v1679
      %v1707 = vmul.f32 %v1531, %v1679
      %v1708 = vmul.f32 %v1532, %v1679
      %v1709 = vmul.f32 %v1533, %v1679
      %v1710 = vmul.f32 %v1534, %v1679
      %v1711 = vmul.f32 %v1535, %v1679
      %v1712 = vadd.f32 %v1644, %v1680
      %v1713 = vadd.f32 %v1645, %v1681
      %v1714 = vadd.f32 %v1646, %v1682
      %v1715 = vadd.f32 %v1647, %v1683
      %v1716 = vadd.f32 %v1648, %v1684
      %v1717 = vadd.f32 %v1649, %v1685
      %v1718 = vadd.f32 %v1650, %v1686
      %v1719 = vadd.f32 %v1651, %v1687
      %v1720 = vadd.f32 %v1652, %v1688
      %v1721 = vadd.f32 %v1653, %v1689
      %v1722 = vadd.f32 %v1654, %v1690
      %v1723 = vadd.f32 %v1655, %v1691
      %v1724 = vadd.f32 %v1656, %v1692
      %v1725 = vadd.f32 %v1657, %v1693
      %v1726 = vadd.f32 %v1658, %v1694
      %v1727 = vadd.f32 %v1659, %v1695
      %v1728 = vadd.f32 %v1660, %v1696
      %v1729 = vadd.f32 %v1661, %v1697
      %v1730 = vadd.f32 %v1662, %v1698
      %v1731 = vadd.f32 %v1663, %v1699
      %v1732 = vadd.f32 %v1664, %v1700
      %v1733 = vadd.f32 %v1665, %v1701
      %v1734 = vadd.f32 %v1666, %v1702
      %v1735 = vadd.f32 %v1667, %v1703
      %v1736 = vadd.f32 %v1668, %v1704
      %v1737 = vadd.f32 %v1669, %v1705
      %v1738 = vadd.f32 %v1670, %v1706
      %v1739 = vadd.f32 %v1671, %v1707
      %v1740 = vadd.f32 %v1672, %v1708
      %v1741 = vadd.f32 %v1673, %v1709
      %v1742 = vadd.f32 %v1674, %v1710
      %v1743 = vadd.f32 %v1675, %v1711
      %v1744 = vlaneseq
      %v1745 = vshrl.u32 %v1744, 7
      %v1746 = vsub.s32 7, %v1745
      %v1747 = vrot.slane %v1490, %v1746
      %v1748 = vmul.f32 %v1506, %v1747
      %v1749 = vmul.f32 %v1507, %v1747
      %v1750 = vmul.f32 %v1508, %v1747
      %v1751 = vmul.f32 %v1509, %v1747
      %v1752 = vmul.f32 %v1510, %v1747
      %v1753 = vmul.f32 %v1511, %v1747
      %v1754 = vmul.f32 %v1512, %v1747
      %v1755 = vmul.f32 %v1513, %v1747
      %v1756 = vmul.f32 %v1514, %v1747
      %v1757 = vmul.f32 %v1515, %v1747
      %v1758 = vmul.f32 %v1516, %v1747
      %v1759 = vmul.f32 %v1517, %v1747
      %v1760 = vmul.f32 %v1518, %v1747
      %v1761 = vmul.f32 %v1519, %v1747
      %v1762 = vmul.f32 %v1520, %v1747
      %v1763 = vmul.f32 %v1521, %v1747
      %v1764 = vmul.f32 %v1522, %v1747
      %v1765 = vmul.f32 %v1523, %v1747
      %v1766 = vmul.f32 %v1524, %v1747
      %v1767 = vmul.f32 %v1525, %v1747
      %v1768 = vmul.f32 %v1526, %v1747
      %v1769 = vmul.f32 %v1527, %v1747
      %v1770 = vmul.f32 %v1528, %v1747
      %v1771 = vmul.f32 %v1529, %v1747
      %v1772 = vmul.f32 %v1530, %v1747
      %v1773 = vmul.f32 %v1531, %v1747
      %v1774 = vmul.f32 %v1532, %v1747
      %v1775 = vmul.f32 %v1533, %v1747
      %v1776 = vmul.f32 %v1534, %v1747
      %v1777 = vmul.f32 %v1535, %v1747
      %v1778 = vmul.f32 %v1536, %v1747
      %v1779 = vmul.f32 %v1537, %v1747
      %v1780 = vadd.f32 %v1712, %v1748
      %v1781 = vadd.f32 %v1713, %v1749
      %v1782 = vadd.f32 %v1714, %v1750
      %v1783 = vadd.f32 %v1715, %v1751
      %v1784 = vadd.f32 %v1716, %v1752
      %v1785 = vadd.f32 %v1717, %v1753
      %v1786 = vadd.f32 %v1718, %v1754
      %v1787 = vadd.f32 %v1719, %v1755
      %v1788 = vadd.f32 %v1720, %v1756
      %v1789 = vadd.f32 %v1721, %v1757
      %v1790 = vadd.f32 %v1722, %v1758
      %v1791 = vadd.f32 %v1723, %v1759
      %v1792 = vadd.f32 %v1724, %v1760
      %v1793 = vadd.f32 %v1725, %v1761
      %v1794 = vadd.f32 %v1726, %v1762
      %v1795 = vadd.f32 %v1727, %v1763
      %v1796 = vadd.f32 %v1728, %v1764
      %v1797 = vadd.f32 %v1729, %v1765
      %v1798 = vadd.f32 %v1730, %v1766
      %v1799 = vadd.f32 %v1731, %v1767
      %v1800 = vadd.f32 %v1732, %v1768
      %v1801 = vadd.f32 %v1733, %v1769
      %v1802 = vadd.f32 %v1734, %v1770
      %v1803 = vadd.f32 %v1735, %v1771
      %v1804 = vadd.f32 %v1736, %v1772
      %v1805 = vadd.f32 %v1737, %v1773
      %v1806 = vadd.f32 %v1738, %v1774
      %v1807 = vadd.f32 %v1739, %v1775
      %v1808 = vadd.f32 %v1740, %v1776
      %v1809 = vadd.f32 %v1741, %v1777
      %v1810 = vadd.f32 %v1742, %v1778
      %v1811 = vadd.f32 %v1743, %v1779
      %v1812 = vlaneseq
      %v1813 = vshrl.u32 %v1812, 7
      %v1814 = vsub.s32 4, %v1813
      %v1815 = vrot.slane %v1491, %v1814
      %v1816 = vmul.f32 %v1508, %v1815
      %v1817 = vmul.f32 %v1509, %v1815
      %v1818 = vmul.f32 %v1510, %v1815
      %v1819 = vmul.f32 %v1511, %v1815
      %v1820 = vmul.f32 %v1512, %v1815
      %v1821 = vmul.f32 %v1513, %v1815
      %v1822 = vmul.f32 %v1514, %v1815
      %v1823 = vmul.f32 %v1515, %v1815
      %v1824 = vmul.f32 %v1516, %v1815
      %v1825 = vmul.f32 %v1517, %v1815
      %v1826 = vmul.f32 %v1518, %v1815
      %v1827 = vmul.f32 %v1519, %v1815
      %v1828 = vmul.f32 %v1520, %v1815
      %v1829 = vmul.f32 %v1521, %v1815
      %v1830 = vmul.f32 %v1522, %v1815
      %v1831 = vmul.f32 %v1523, %v1815
      %v1832 = vmul.f32 %v1524, %v1815
      %v1833 = vmul.f32 %v1525, %v1815
      %v1834 = vmul.f32 %v1526, %v1815
      %v1835 = vmul.f32 %v1527, %v1815
      %v1836 = vmul.f32 %v1528, %v1815
      %v1837 = vmul.f32 %v1529, %v1815
      %v1838 = vmul.f32 %v1530, %v1815
      %v1839 = vmul.f32 %v1531, %v1815
      %v1840 = vmul.f32 %v1532, %v1815
      %v1841 = vmul.f32 %v1533, %v1815
      %v1842 = vmul.f32 %v1534, %v1815
      %v1843 = vmul.f32 %v1535, %v1815
      %v1844 = vmul.f32 %v1536, %v1815
      %v1845 = vmul.f32 %v1537, %v1815
      %v1846 = vmul.f32 %v1538, %v1815
      %v1847 = vmul.f32 %v1539, %v1815
      %v1848 = vadd.f32 %v1780, %v1816
      %v1849 = vadd.f32 %v1781, %v1817
      %v1850 = vadd.f32 %v1782, %v1818
      %v1851 = vadd.f32 %v1783, %v1819
      %v1852 = vadd.f32 %v1784, %v1820
      %v1853 = vadd.f32 %v1785, %v1821
      %v1854 = vadd.f32 %v1786, %v1822
      %v1855 = vadd.f32 %v1787, %v1823
      %v1856 = vadd.f32 %v1788, %v1824
      %v1857 = vadd.f32 %v1789, %v1825
      %v1858 = vadd.f32 %v1790, %v1826
      %v1859 = vadd.f32 %v1791, %v1827
      %v1860 = vadd.f32 %v1792, %v1828
      %v1861 = vadd.f32 %v1793, %v1829
      %v1862 = vadd.f32 %v1794, %v1830
      %v1863 = vadd.f32 %v1795, %v1831
      %v1864 = vadd.f32 %v1796, %v1832
      %v1865 = vadd.f32 %v1797, %v1833
      %v1866 = vadd.f32 %v1798, %v1834
      %v1867 = vadd.f32 %v1799, %v1835
      %v1868 = vadd.f32 %v1800, %v1836
      %v1869 = vadd.f32 %v1801, %v1837
      %v1870 = vadd.f32 %v1802, %v1838
      %v1871 = vadd.f32 %v1803, %v1839
      %v1872 = vadd.f32 %v1804, %v1840
      %v1873 = vadd.f32 %v1805, %v1841
      %v1874 = vadd.f32 %v1806, %v1842
      %v1875 = vadd.f32 %v1807, %v1843
      %v1876 = vadd.f32 %v1808, %v1844
      %v1877 = vadd.f32 %v1809, %v1845
      %v1878 = vadd.f32 %v1810, %v1846
      %v1879 = vadd.f32 %v1811, %v1847
      %v1880 = vld [vmem:[#allocation3 + $0x1] sm:$0xff]
      %v1881 = vld [vmem:[#allocation3 + $0x9] sm:$0xff]
      %v1882 = vld [vmem:[#allocation3 + $0x19] sm:$0xff]
      %v1883 = vld [vmem:[#allocation3 + $0x21] sm:$0xff]
      %v1884 = vld [vmem:[#allocation3 + $0x31] sm:$0xff]
      %v1885 = vld [vmem:[#allocation3 + $0x39] sm:$0xff]
      %v1886 = vld [vmem:[#allocation3 + $0x49] sm:$0xff]
      %v1887 = vld [vmem:[#allocation3 + $0x51] sm:$0xff]
      %v1888 = vld [vmem:[#allocation3 + $0x61] sm:$0xff]
      %v1889 = vld [vmem:[#allocation3 + $0x69] sm:$0xff]
      %v1890 = vld [vmem:[#allocation3 + $0x79] sm:$0xff]
      %v1891 = vld [vmem:[#allocation3 + $0x81] sm:$0xff]
      %v1892 = vld [vmem:[#allocation3 + $0x91] sm:$0xff]
      %v1893 = vld [vmem:[#allocation3 + $0x99] sm:$0xff]
      %v1894 = vld [vmem:[#allocation3 + $0xa9] sm:$0xff]
      %v1895 = vld [vmem:[#allocation3 + $0xb1] sm:$0xff]
      %v1896 = vld [vmem:[#allocation3 + $0xc1] sm:$0xff]
      %v1897 = vld [vmem:[#allocation3 + $0xc9] sm:$0xff]
      %v1898 = vld [vmem:[#allocation3 + $0xd9] sm:$0xff]
      %v1899 = vld [vmem:[#allocation3 + $0xe1] sm:$0xff]
      %v1900 = vld [vmem:[#allocation3 + $0xf1] sm:$0xff]
      %v1901 = vld [vmem:[#allocation3 + $0xf9] sm:$0xff]
      %v1902 = vld [vmem:[#allocation3 + $0x109] sm:$0xff]
      %v1903 = vld [vmem:[#allocation3 + $0x111] sm:$0xff]
      %v1904 = vld [vmem:[#allocation3 + $0x121] sm:$0xff]
      %v1905 = vld [vmem:[#allocation3 + $0x129] sm:$0xff]
      %v1906 = vld [vmem:[#allocation3 + $0x139] sm:$0xff]
      %v1907 = vld [vmem:[#allocation3 + $0x141] sm:$0xff]
      %v1908 = vld [vmem:[#allocation3 + $0x151] sm:$0xff]
      %v1909 = vld [vmem:[#allocation3 + $0x159] sm:$0xff]
      %v1910 = vld [vmem:[#allocation3 + $0x169] sm:$0xff]
      %v1911 = vld [vmem:[#allocation3 + $0x171] sm:$0xff]
      %v1912 = vld [vmem:[#allocation3 + $0x181] sm:$0xff]
      %v1913 = vld [vmem:[#allocation3 + $0x189] sm:$0xff]
      %v1914 = vld [vmem:[#allocation3 + $0x199] sm:$0xff]
      %v1915 = vld [vmem:[#allocation3 + $0x1a1] sm:$0xff]
      %v1916 = vld [vmem:[#allocation3 + $0x1b1] sm:$0xff]
      %v1917 = vld [vmem:[#allocation3 + $0x1b9] sm:$0xff]
      %v1918 = vld [vmem:[#allocation3 + $0x1c9] sm:$0xff]
      %v1919 = vld [vmem:[#allocation3 + $0x1d1] sm:$0xff]
      %v1920 = vlaneseq
      %v1921 = vshrl.u32 %v1920, 7
      %v1922 = vsub.s32 1, %v1921
      %v1923 = vrot.slane %v1489, %v1922
      %v1924 = vmul.f32 %v1880, %v1923
      %v1925 = vmul.f32 %v1881, %v1923
      %v1926 = vmul.f32 %v1882, %v1923
      %v1927 = vmul.f32 %v1883, %v1923
      %v1928 = vmul.f32 %v1884, %v1923
      %v1929 = vmul.f32 %v1885, %v1923
      %v1930 = vmul.f32 %v1886, %v1923
      %v1931 = vmul.f32 %v1887, %v1923
      %v1932 = vmul.f32 %v1888, %v1923
      %v1933 = vmul.f32 %v1889, %v1923
      %v1934 = vmul.f32 %v1890, %v1923
      %v1935 = vmul.f32 %v1891, %v1923
      %v1936 = vmul.f32 %v1892, %v1923
      %v1937 = vmul.f32 %v1893, %v1923
      %v1938 = vmul.f32 %v1894, %v1923
      %v1939 = vmul.f32 %v1895, %v1923
      %v1940 = vmul.f32 %v1896, %v1923
      %v1941 = vmul.f32 %v1897, %v1923
      %v1942 = vmul.f32 %v1898, %v1923
      %v1943 = vmul.f32 %v1899, %v1923
      %v1944 = vmul.f32 %v1900, %v1923
      %v1945 = vmul.f32 %v1901, %v1923
      %v1946 = vmul.f32 %v1902, %v1923
      %v1947 = vmul.f32 %v1903, %v1923
      %v1948 = vmul.f32 %v1904, %v1923
      %v1949 = vmul.f32 %v1905, %v1923
      %v1950 = vmul.f32 %v1906, %v1923
      %v1951 = vmul.f32 %v1907, %v1923
      %v1952 = vmul.f32 %v1908, %v1923
      %v1953 = vmul.f32 %v1909, %v1923
      %v1954 = vmul.f32 %v1910, %v1923
      %v1955 = vmul.f32 %v1911, %v1923
      %v1956 = vadd.f32 %v1848, %v1924
      %v1957 = vadd.f32 %v1849, %v1925
      %v1958 = vadd.f32 %v1850, %v1926
      %v1959 = vadd.f32 %v1851, %v1927
      %v1960 = vadd.f32 %v1852, %v1928
      %v1961 = vadd.f32 %v1853, %v1929
      %v1962 = vadd.f32 %v1854, %v1930
      %v1963 = vadd.f32 %v1855, %v1931
      %v1964 = vadd.f32 %v1856, %v1932
      %v1965 = vadd.f32 %v1857, %v1933
      %v1966 = vadd.f32 %v1858, %v1934
      %v1967 = vadd.f32 %v1859, %v1935
      %v1968 = vadd.f32 %v1860, %v1936
      %v1969 = vadd.f32 %v1861, %v1937
      %v1970 = vadd.f32 %v1862, %v1938
      %v1971 = vadd.f32 %v1863, %v1939
      %v1972 = vadd.f32 %v1864, %v1940
      %v1973 = vadd.f32 %v1865, %v1941
      %v1974 = vadd.f32 %v1866, %v1942
      %v1975 = vadd.f32 %v1867, %v1943
      %v1976 = vadd.f32 %v1868, %v1944
      %v1977 = vadd.f32 %v1869, %v1945
      %v1978 = vadd.f32 %v1870, %v1946
      %v1979 = vadd.f32 %v1871, %v1947
      %v1980 = vadd.f32 %v1872, %v1948
      %v1981 = vadd.f32 %v1873, %v1949
      %v1982 = vadd.f32 %v1874, %v1950
      %v1983 = vadd.f32 %v1875, %v1951
      %v1984 = vadd.f32 %v1876, %v1952
      %v1985 = vadd.f32 %v1877, %v1953
      %v1986 = vadd.f32 %v1878, %v1954
      %v1987 = vadd.f32 %v1879, %v1955
      %v1988 = vlaneseq
      %v1989 = vshrl.u32 %v1988, 7
      %v1990 = vsub.s32 6, %v1989
      %v1991 = vrot.slane %v1489, %v1990
      %v1992 = vmul.f32 %v1882, %v1991
      %v1993 = vmul.f32 %v1883, %v1991
      %v1994 = vmul.f32 %v1884, %v1991
      %v1995 = vmul.f32 %v1885, %v1991
      %v1996 = vmul.f32 %v1886, %v1991
      %v1997 = vmul.f32 %v1887, %v1991
      %v1998 = vmul.f32 %v1888, %v1991
      %v1999 = vmul.f32 %v1889, %v1991
      %v2000 = vmul.f32 %v1890, %v1991
      %v2001 = vmul.f32 %v1891, %v1991
      %v2002 = vmul.f32 %v1892, %v1991
      %v2003 = vmul.f32 %v1893, %v1991
      %v2004 = vmul.f32 %v1894, %v1991
      %v2005 = vmul.f32 %v1895, %v1991
      %v2006 = vmul.f32 %v1896, %v1991
      %v2007 = vmul.f32 %v1897, %v1991
      %v2008 = vmul.f32 %v1898, %v1991
      %v2009 = vmul.f32 %v1899, %v1991
      %v2010 = vmul.f32 %v1900, %v1991
      %v2011 = vmul.f32 %v1901, %v1991
      %v2012 = vmul.f32 %v1902, %v1991
      %v2013 = vmul.f32 %v1903, %v1991
      %v2014 = vmul.f32 %v1904, %v1991
      %v2015 = vmul.f32 %v1905, %v1991
      %v2016 = vmul.f32 %v1906, %v1991
      %v2017 = vmul.f32 %v1907, %v1991
      %v2018 = vmul.f32 %v1908, %v1991
      %v2019 = vmul.f32 %v1909, %v1991
      %v2020 = vmul.f32 %v1910, %v1991
      %v2021 = vmul.f32 %v1911, %v1991
      %v2022 = vmul.f32 %v1912, %v1991
      %v2023 = vmul.f32 %v1913, %v1991
      %v2024 = vadd.f32 %v1956, %v1992
      %v2025 = vadd.f32 %v1957, %v1993
      %v2026 = vadd.f32 %v1958, %v1994
      %v2027 = vadd.f32 %v1959, %v1995
      %v2028 = vadd.f32 %v1960, %v1996
      %v2029 = vadd.f32 %v1961, %v1997
      %v2030 = vadd.f32 %v1962, %v1998
      %v2031 = vadd.f32 %v1963, %v1999
      %v2032 = vadd.f32 %v1964, %v2000
      %v2033 = vadd.f32 %v1965, %v2001
      %v2034 = vadd.f32 %v1966, %v2002
      %v2035 = vadd.f32 %v1967, %v2003
      %v2036 = vadd.f32 %v1968, %v2004
      %v2037 = vadd.f32 %v1969, %v2005
      %v2038 = vadd.f32 %v1970, %v2006
      %v2039 = vadd.f32 %v1971, %v2007
      %v2040 = vadd.f32 %v1972, %v2008
      %v2041 = vadd.f32 %v1973, %v2009
      %v2042 = vadd.f32 %v1974, %v2010
      %v2043 = vadd.f32 %v1975, %v2011
      %v2044 = vadd.f32 %v1976, %v2012
      %v2045 = vadd.f32 %v1977, %v2013
      %v2046 = vadd.f32 %v1978, %v2014
      %v2047 = vadd.f32 %v1979, %v2015
      %v2048 = vadd.f32 %v1980, %v2016
      %v2049 = vadd.f32 %v1981, %v2017
      %v2050 = vadd.f32 %v1982, %v2018
      %v2051 = vadd.f32 %v1983, %v2019
      %v2052 = vadd.f32 %v1984, %v2020
      %v2053 = vadd.f32 %v1985, %v2021
      %v2054 = vadd.f32 %v1986, %v2022
      %v2055 = vadd.f32 %v1987, %v2023
      %v2056 = vlaneseq
      %v2057 = vshrl.u32 %v2056, 7
      %v2058 = vsub.s32 3, %v2057
      %v2059 = vrot.slane %v1490, %v2058
      %v2060 = vmul.f32 %v1884, %v2059
      %v2061 = vmul.f32 %v1885, %v2059
      %v2062 = vmul.f32 %v1886, %v2059
      %v2063 = vmul.f32 %v1887, %v2059
      %v2064 = vmul.f32 %v1888, %v2059
      %v2065 = vmul.f32 %v1889, %v2059
      %v2066 = vmul.f32 %v1890, %v2059
      %v2067 = vmul.f32 %v1891, %v2059
      %v2068 = vmul.f32 %v1892, %v2059
      %v2069 = vmul.f32 %v1893, %v2059
      %v2070 = vmul.f32 %v1894, %v2059
      %v2071 = vmul.f32 %v1895, %v2059
      %v2072 = vmul.f32 %v1896, %v2059
      %v2073 = vmul.f32 %v1897, %v2059
      %v2074 = vmul.f32 %v1898, %v2059
      %v2075 = vmul.f32 %v1899, %v2059
      %v2076 = vmul.f32 %v1900, %v2059
      %v2077 = vmul.f32 %v1901, %v2059
      %v2078 = vmul.f32 %v1902, %v2059
      %v2079 = vmul.f32 %v1903, %v2059
      %v2080 = vmul.f32 %v1904, %v2059
      %v2081 = vmul.f32 %v1905, %v2059
      %v2082 = vmul.f32 %v1906, %v2059
      %v2083 = vmul.f32 %v1907, %v2059
      %v2084 = vmul.f32 %v1908, %v2059
      %v2085 = vmul.f32 %v1909, %v2059
      %v2086 = vmul.f32 %v1910, %v2059
      %v2087 = vmul.f32 %v1911, %v2059
      %v2088 = vmul.f32 %v1912, %v2059
      %v2089 = vmul.f32 %v1913, %v2059
      %v2090 = vmul.f32 %v1914, %v2059
      %v2091 = vmul.f32 %v1915, %v2059
      %v2092 = vadd.f32 %v2024, %v2060
      %v2093 = vadd.f32 %v2025, %v2061
      %v2094 = vadd.f32 %v2026, %v2062
      %v2095 = vadd.f32 %v2027, %v2063
      %v2096 = vadd.f32 %v2028, %v2064
      %v2097 = vadd.f32 %v2029, %v2065
      %v2098 = vadd.f32 %v2030, %v2066
      %v2099 = vadd.f32 %v2031, %v2067
      %v2100 = vadd.f32 %v2032, %v2068
      %v2101 = vadd.f32 %v2033, %v2069
      %v2102 = vadd.f32 %v2034, %v2070
      %v2103 = vadd.f32 %v2035, %v2071
      %v2104 = vadd.f32 %v2036, %v2072
      %v2105 = vadd.f32 %v2037, %v2073
      %v2106 = vadd.f32 %v2038, %v2074
      %v2107 = vadd.f32 %v2039, %v2075
      %v2108 = vadd.f32 %v2040, %v2076
      %v2109 = vadd.f32 %v2041, %v2077
      %v2110 = vadd.f32 %v2042, %v2078
      %v2111 = vadd.f32 %v2043, %v2079
      %v2112 = vadd.f32 %v2044, %v2080
      %v2113 = vadd.f32 %v2045, %v2081
      %v2114 = vadd.f32 %v2046, %v2082
      %v2115 = vadd.f32 %v2047, %v2083
      %v2116 = vadd.f32 %v2048, %v2084
      %v2117 = vadd.f32 %v2049, %v2085
      %v2118 = vadd.f32 %v2050, %v2086
      %v2119 = vadd.f32 %v2051, %v2087
      %v2120 = vadd.f32 %v2052, %v2088
      %v2121 = vadd.f32 %v2053, %v2089
      %v2122 = vadd.f32 %v2054, %v2090
      %v2123 = vadd.f32 %v2055, %v2091
      %v2124 = vlaneseq
      %v2125 = vshrl.u32 %v2124, 7
      %v2126 = vsub.s32 0, %v2125
      %v2127 = vrot.slane %v1491, %v2126
      %v2128 = vmul.f32 %v1886, %v2127
      %v2129 = vmul.f32 %v1887, %v2127
      %v2130 = vmul.f32 %v1888, %v2127
      %v2131 = vmul.f32 %v1889, %v2127
      %v2132 = vmul.f32 %v1890, %v2127
      %v2133 = vmul.f32 %v1891, %v2127
      %v2134 = vmul.f32 %v1892, %v2127
      %v2135 = vmul.f32 %v1893, %v2127
      %v2136 = vmul.f32 %v1894, %v2127
      %v2137 = vmul.f32 %v1895, %v2127
      %v2138 = vmul.f32 %v1896, %v2127
      %v2139 = vmul.f32 %v1897, %v2127
      %v2140 = vmul.f32 %v1898, %v2127
      %v2141 = vmul.f32 %v1899, %v2127
      %v2142 = vmul.f32 %v1900, %v2127
      %v2143 = vmul.f32 %v1901, %v2127
      %v2144 = vmul.f32 %v1902, %v2127
      %v2145 = vmul.f32 %v1903, %v2127
      %v2146 = vmul.f32 %v1904, %v2127
      %v2147 = vmul.f32 %v1905, %v2127
      %v2148 = vmul.f32 %v1906, %v2127
      %v2149 = vmul.f32 %v1907, %v2127
      %v2150 = vmul.f32 %v1908, %v2127
      %v2151 = vmul.f32 %v1909, %v2127
      %v2152 = vmul.f32 %v1910, %v2127
      %v2153 = vmul.f32 %v1911, %v2127
      %v2154 = vmul.f32 %v1912, %v2127
      %v2155 = vmul.f32 %v1913, %v2127
      %v2156 = vmul.f32 %v1914, %v2127
      %v2157 = vmul.f32 %v1915, %v2127
      %v2158 = vmul.f32 %v1916, %v2127
      %v2159 = vmul.f32 %v1917, %v2127
      %v2160 = vadd.f32 %v2092, %v2128
      %v2161 = vadd.f32 %v2093, %v2129
      %v2162 = vadd.f32 %v2094, %v2130
      %v2163 = vadd.f32 %v2095, %v2131
      %v2164 = vadd.f32 %v2096, %v2132
      %v2165 = vadd.f32 %v2097, %v2133
      %v2166 = vadd.f32 %v2098, %v2134
      %v2167 = vadd.f32 %v2099, %v2135
      %v2168 = vadd.f32 %v2100, %v2136
      %v2169 = vadd.f32 %v2101, %v2137
      %v2170 = vadd.f32 %v2102, %v2138
      %v2171 = vadd.f32 %v2103, %v2139
      %v2172 = vadd.f32 %v2104, %v2140
      %v2173 = vadd.f32 %v2105, %v2141
      %v2174 = vadd.f32 %v2106, %v2142
      %v2175 = vadd.f32 %v2107, %v2143
      %v2176 = vadd.f32 %v2108, %v2144
      %v2177 = vadd.f32 %v2109, %v2145
      %v2178 = vadd.f32 %v2110, %v2146
      %v2179 = vadd.f32 %v2111, %v2147
      %v2180 = vadd.f32 %v2112, %v2148
      %v2181 = vadd.f32 %v2113, %v2149
      %v2182 = vadd.f32 %v2114, %v2150
      %v2183 = vadd.f32 %v2115, %v2151
      %v2184 = vadd.f32 %v2116, %v2152
      %v2185 = vadd.f32 %v2117, %v2153
      %v2186 = vadd.f32 %v2118, %v2154
      %v2187 = vadd.f32 %v2119, %v2155
      %v2188 = vadd.f32 %v2120, %v2156
      %v2189 = vadd.f32 %v2121, %v2157
      %v2190 = vadd.f32 %v2122, %v2158
      %v2191 = vadd.f32 %v2123, %v2159
      %v2192 = vlaneseq
      %v2193 = vshrl.u32 %v2192, 7
      %v2194 = vsub.s32 5, %v2193
      %v2195 = vrot.slane %v1491, %v2194
      %v2196 = vmul.f32 %v1888, %v2195
      %v2197 = vmul.f32 %v1889, %v2195
      %v2198 = vmul.f32 %v1890, %v2195
      %v2199 = vmul.f32 %v1891, %v2195
      %v2200 = vmul.f32 %v1892, %v2195
      %v2201 = vmul.f32 %v1893, %v2195
      %v2202 = vmul.f32 %v1894, %v2195
      %v2203 = vmul.f32 %v1895, %v2195
      %v2204 = vmul.f32 %v1896, %v2195
      %v2205 = vmul.f32 %v1897, %v2195
      %v2206 = vmul.f32 %v1898, %v2195
      %v2207 = vmul.f32 %v1899, %v2195
      %v2208 = vmul.f32 %v1900, %v2195
      %v2209 = vmul.f32 %v1901, %v2195
      %v2210 = vmul.f32 %v1902, %v2195
      %v2211 = vmul.f32 %v1903, %v2195
      %v2212 = vmul.f32 %v1904, %v2195
      %v2213 = vmul.f32 %v1905, %v2195
      %v2214 = vmul.f32 %v1906, %v2195
      %v2215 = vmul.f32 %v1907, %v2195
      %v2216 = vmul.f32 %v1908, %v2195
      %v2217 = vmul.f32 %v1909, %v2195
      %v2218 = vmul.f32 %v1910, %v2195
      %v2219 = vmul.f32 %v1911, %v2195
      %v2220 = vmul.f32 %v1912, %v2195
      %v2221 = vmul.f32 %v1913, %v2195
      %v2222 = vmul.f32 %v1914, %v2195
      %v2223 = vmul.f32 %v1915, %v2195
      %v2224 = vmul.f32 %v1916, %v2195
      %v2225 = vmul.f32 %v1917, %v2195
      %v2226 = vmul.f32 %v1918, %v2195
      %v2227 = vmul.f32 %v1919, %v2195
      %v2228 = vadd.f32 %v2160, %v2196
      %v2229 = vadd.f32 %v2161, %v2197
      %v2230 = vadd.f32 %v2162, %v2198
      %v2231 = vadd.f32 %v2163, %v2199
      %v2232 = vadd.f32 %v2164, %v2200
      %v2233 = vadd.f32 %v2165, %v2201
      %v2234 = vadd.f32 %v2166, %v2202
      %v2235 = vadd.f32 %v2167, %v2203
      %v2236 = vadd.f32 %v2168, %v2204
      %v2237 = vadd.f32 %v2169, %v2205
      %v2238 = vadd.f32 %v2170, %v2206
      %v2239 = vadd.f32 %v2171, %v2207
      %v2240 = vadd.f32 %v2172, %v2208
      %v2241 = vadd.f32 %v2173, %v2209
      %v2242 = vadd.f32 %v2174, %v2210
      %v2243 = vadd.f32 %v2175, %v2211
      %v2244 = vadd.f32 %v2176, %v2212
      %v2245 = vadd.f32 %v2177, %v2213
      %v2246 = vadd.f32 %v2178, %v2214
      %v2247 = vadd.f32 %v2179, %v2215
      %v2248 = vadd.f32 %v2180, %v2216
      %v2249 = vadd.f32 %v2181, %v2217
      %v2250 = vadd.f32 %v2182, %v2218
      %v2251 = vadd.f32 %v2183, %v2219
      %v2252 = vadd.f32 %v2184, %v2220
      %v2253 = vadd.f32 %v2185, %v2221
      %v2254 = vadd.f32 %v2186, %v2222
      %v2255 = vadd.f32 %v2187, %v2223
      %v2256 = vadd.f32 %v2188, %v2224
      %v2257 = vadd.f32 %v2189, %v2225
      %v2258 = vadd.f32 %v2190, %v2226
      %v2259 = vadd.f32 %v2191, %v2227
      %v2260 = vld [vmem:[#allocation3 + $0x2] sm:$0xff]
      %v2261 = vld [vmem:[#allocation3 + $0xa] sm:$0xff]
      %v2262 = vld [vmem:[#allocation3 + $0x1a] sm:$0xff]
      %v2263 = vld [vmem:[#allocation3 + $0x22] sm:$0xff]
      %v2264 = vld [vmem:[#allocation3 + $0x32] sm:$0xff]
      %v2265 = vld [vmem:[#allocation3 + $0x3a] sm:$0xff]
      %v2266 = vld [vmem:[#allocation3 + $0x4a] sm:$0xff]
      %v2267 = vld [vmem:[#allocation3 + $0x52] sm:$0xff]
      %v2268 = vld [vmem:[#allocation3 + $0x62] sm:$0xff]
      %v2269 = vld [vmem:[#allocation3 + $0x6a] sm:$0xff]
      %v2270 = vld [vmem:[#allocation3 + $0x7a] sm:$0xff]
      %v2271 = vld [vmem:[#allocation3 + $0x82] sm:$0xff]
      %v2272 = vld [vmem:[#allocation3 + $0x92] sm:$0xff]
      %v2273 = vld [vmem:[#allocation3 + $0x9a] sm:$0xff]
      %v2274 = vld [vmem:[#allocation3 + $0xaa] sm:$0xff]
      %v2275 = vld [vmem:[#allocation3 + $0xb2] sm:$0xff]
      %v2276 = vld [vmem:[#allocation3 + $0xc2] sm:$0xff]
      %v2277 = vld [vmem:[#allocation3 + $0xca] sm:$0xff]
      %v2278 = vld [vmem:[#allocation3 + $0xda] sm:$0xff]
      %v2279 = vld [vmem:[#allocation3 + $0xe2] sm:$0xff]
      %v2280 = vld [vmem:[#allocation3 + $0xf2] sm:$0xff]
      %v2281 = vld [vmem:[#allocation3 + $0xfa] sm:$0xff]
      %v2282 = vld [vmem:[#allocation3 + $0x10a] sm:$0xff]
      %v2283 = vld [vmem:[#allocation3 + $0x112] sm:$0xff]
      %v2284 = vld [vmem:[#allocation3 + $0x122] sm:$0xff]
      %v2285 = vld [vmem:[#allocation3 + $0x12a] sm:$0xff]
      %v2286 = vld [vmem:[#allocation3 + $0x13a] sm:$0xff]
      %v2287 = vld [vmem:[#allocation3 + $0x142] sm:$0xff]
      %v2288 = vld [vmem:[#allocation3 + $0x152] sm:$0xff]
      %v2289 = vld [vmem:[#allocation3 + $0x15a] sm:$0xff]
      %v2290 = vld [vmem:[#allocation3 + $0x16a] sm:$0xff]
      %v2291 = vld [vmem:[#allocation3 + $0x172] sm:$0xff]
      %v2292 = vld [vmem:[#allocation3 + $0x182] sm:$0xff]
      %v2293 = vld [vmem:[#allocation3 + $0x18a] sm:$0xff]
      %v2294 = vld [vmem:[#allocation3 + $0x19a] sm:$0xff]
      %v2295 = vld [vmem:[#allocation3 + $0x1a2] sm:$0xff]
      %v2296 = vld [vmem:[#allocation3 + $0x1b2] sm:$0xff]
      %v2297 = vld [vmem:[#allocation3 + $0x1ba] sm:$0xff]
      %v2298 = vld [vmem:[#allocation3 + $0x1ca] sm:$0xff]
      %v2299 = vld [vmem:[#allocation3 + $0x1d2] sm:$0xff]
      %v2300 = vlaneseq
      %v2301 = vshrl.u32 %v2300, 7
      %v2302 = vsub.s32 2, %v2301
      %v2303 = vrot.slane %v1489, %v2302
      %v2304 = vmul.f32 %v2260, %v2303
      %v2305 = vmul.f32 %v2261, %v2303
      %v2306 = vmul.f32 %v2262, %v2303
      %v2307 = vmul.f32 %v2263, %v2303
      %v2308 = vmul.f32 %v2264, %v2303
      %v2309 = vmul.f32 %v2265, %v2303
      %v2310 = vmul.f32 %v2266, %v2303
      %v2311 = vmul.f32 %v2267, %v2303
      %v2312 = vmul.f32 %v2268, %v2303
      %v2313 = vmul.f32 %v2269, %v2303
      %v2314 = vmul.f32 %v2270, %v2303
      %v2315 = vmul.f32 %v2271, %v2303
      %v2316 = vmul.f32 %v2272, %v2303
      %v2317 = vmul.f32 %v2273, %v2303
      %v2318 = vmul.f32 %v2274, %v2303
      %v2319 = vmul.f32 %v2275, %v2303
      %v2320 = vmul.f32 %v2276, %v2303
      %v2321 = vmul.f32 %v2277, %v2303
      %v2322 = vmul.f32 %v2278, %v2303
      %v2323 = vmul.f32 %v2279, %v2303
      %v2324 = vmul.f32 %v2280, %v2303
      %v2325 = vmul.f32 %v2281, %v2303
      %v2326 = vmul.f32 %v2282, %v2303
      %v2327 = vmul.f32 %v2283, %v2303
      %v2328 = vmul.f32 %v2284, %v2303
      %v2329 = vmul.f32 %v2285, %v2303
      %v2330 = vmul.f32 %v2286, %v2303
      %v2331 = vmul.f32 %v2287, %v2303
      %v2332 = vmul.f32 %v2288, %v2303
      %v2333 = vmul.f32 %v2289, %v2303
      %v2334 = vmul.f32 %v2290, %v2303
      %v2335 = vmul.f32 %v2291, %v2303
      %v2336 = vadd.f32 %v2228, %v2304
      %v2337 = vadd.f32 %v2229, %v2305
      %v2338 = vadd.f32 %v2230, %v2306
      %v2339 = vadd.f32 %v2231, %v2307
      %v2340 = vadd.f32 %v2232, %v2308
      %v2341 = vadd.f32 %v2233, %v2309
      %v2342 = vadd.f32 %v2234, %v2310
      %v2343 = vadd.f32 %v2235, %v2311
      %v2344 = vadd.f32 %v2236, %v2312
      %v2345 = vadd.f32 %v2237, %v2313
      %v2346 = vadd.f32 %v2238, %v2314
      %v2347 = vadd.f32 %v2239, %v2315
      %v2348 = vadd.f32 %v2240, %v2316
      %v2349 = vadd.f32 %v2241, %v2317
      %v2350 = vadd.f32 %v2242, %v2318
      %v2351 = vadd.f32 %v2243, %v2319
      %v2352 = vadd.f32 %v2244, %v2320
      %v2353 = vadd.f32 %v2245, %v2321
      %v2354 = vadd.f32 %v2246, %v2322
      %v2355 = vadd.f32 %v2247, %v2323
      %v2356 = vadd.f32 %v2248, %v2324
      %v2357 = vadd.f32 %v2249, %v2325
      %v2358 = vadd.f32 %v2250, %v2326
      %v2359 = vadd.f32 %v2251, %v2327
      %v2360 = vadd.f32 %v2252, %v2328
      %v2361 = vadd.f32 %v2253, %v2329
      %v2362 = vadd.f32 %v2254, %v2330
      %v2363 = vadd.f32 %v2255, %v2331
      %v2364 = vadd.f32 %v2256, %v2332
      %v2365 = vadd.f32 %v2257, %v2333
      %v2366 = vadd.f32 %v2258, %v2334
      %v2367 = vadd.f32 %v2259, %v2335
      %v2368 = vlaneseq
      %v2369 = vshrl.u32 %v2368, 7
      %v2370 = vsub.s32 7, %v2369
      %v2371 = vrot.slane %v1489, %v2370
      %v2372 = vmul.f32 %v2262, %v2371
      %v2373 = vmul.f32 %v2263, %v2371
      %v2374 = vmul.f32 %v2264, %v2371
      %v2375 = vmul.f32 %v2265, %v2371
      %v2376 = vmul.f32 %v2266, %v2371
      %v2377 = vmul.f32 %v2267, %v2371
      %v2378 = vmul.f32 %v2268, %v2371
      %v2379 = vmul.f32 %v2269, %v2371
      %v2380 = vmul.f32 %v2270, %v2371
      %v2381 = vmul.f32 %v2271, %v2371
      %v2382 = vmul.f32 %v2272, %v2371
      %v2383 = vmul.f32 %v2273, %v2371
      %v2384 = vmul.f32 %v2274, %v2371
      %v2385 = vmul.f32 %v2275, %v2371
      %v2386 = vmul.f32 %v2276, %v2371
      %v2387 = vmul.f32 %v2277, %v2371
      %v2388 = vmul.f32 %v2278, %v2371
      %v2389 = vmul.f32 %v2279, %v2371
      %v2390 = vmul.f32 %v2280, %v2371
      %v2391 = vmul.f32 %v2281, %v2371
      %v2392 = vmul.f32 %v2282, %v2371
      %v2393 = vmul.f32 %v2283, %v2371
      %v2394 = vmul.f32 %v2284, %v2371
      %v2395 = vmul.f32 %v2285, %v2371
      %v2396 = vmul.f32 %v2286, %v2371
      %v2397 = vmul.f32 %v2287, %v2371
      %v2398 = vmul.f32 %v2288, %v2371
      %v2399 = vmul.f32 %v2289, %v2371
      %v2400 = vmul.f32 %v2290, %v2371
      %v2401 = vmul.f32 %v2291, %v2371
      %v2402 = vmul.f32 %v2292, %v2371
      %v2403 = vmul.f32 %v2293, %v2371
      %v2404 = vadd.f32 %v2336, %v2372
      %v2405 = vadd.f32 %v2337, %v2373
      %v2406 = vadd.f32 %v2338, %v2374
      %v2407 = vadd.f32 %v2339, %v2375
      %v2408 = vadd.f32 %v2340, %v2376
      %v2409 = vadd.f32 %v2341, %v2377
      %v2410 = vadd.f32 %v2342, %v2378
      %v2411 = vadd.f32 %v2343, %v2379
      %v2412 = vadd.f32 %v2344, %v2380
      %v2413 = vadd.f32 %v2345, %v2381
      %v2414 = vadd.f32 %v2346, %v2382
      %v2415 = vadd.f32 %v2347, %v2383
      %v2416 = vadd.f32 %v2348, %v2384
      %v2417 = vadd.f32 %v2349, %v2385
      %v2418 = vadd.f32 %v2350, %v2386
      %v2419 = vadd.f32 %v2351, %v2387
      %v2420 = vadd.f32 %v2352, %v2388
      %v2421 = vadd.f32 %v2353, %v2389
      %v2422 = vadd.f32 %v2354, %v2390
      %v2423 = vadd.f32 %v2355, %v2391
      %v2424 = vadd.f32 %v2356, %v2392
      %v2425 = vadd.f32 %v2357, %v2393
      %v2426 = vadd.f32 %v2358, %v2394
      %v2427 = vadd.f32 %v2359, %v2395
      %v2428 = vadd.f32 %v2360, %v2396
      %v2429 = vadd.f32 %v2361, %v2397
      %v2430 = vadd.f32 %v2362, %v2398
      %v2431 = vadd.f32 %v2363, %v2399
      %v2432 = vadd.f32 %v2364, %v2400
      %v2433 = vadd.f32 %v2365, %v2401
      %v2434 = vadd.f32 %v2366, %v2402
      %v2435 = vadd.f32 %v2367, %v2403
      %v2436 = vlaneseq
      %v2437 = vshrl.u32 %v2436, 7
      %v2438 = vsub.s32 4, %v2437
      %v2439 = vrot.slane %v1490, %v2438
      %v2440 = vmul.f32 %v2264, %v2439
      %v2441 = vmul.f32 %v2265, %v2439
      %v2442 = vmul.f32 %v2266, %v2439
      %v2443 = vmul.f32 %v2267, %v2439
      %v2444 = vmul.f32 %v2268, %v2439
      %v2445 = vmul.f32 %v2269, %v2439
      %v2446 = vmul.f32 %v2270, %v2439
      %v2447 = vmul.f32 %v2271, %v2439
      %v2448 = vmul.f32 %v2272, %v2439
      %v2449 = vmul.f32 %v2273, %v2439
      %v2450 = vmul.f32 %v2274, %v2439
      %v2451 = vmul.f32 %v2275, %v2439
      %v2452 = vmul.f32 %v2276, %v2439
      %v2453 = vmul.f32 %v2277, %v2439
      %v2454 = vmul.f32 %v2278, %v2439
      %v2455 = vmul.f32 %v2279, %v2439
      %v2456 = vmul.f32 %v2280, %v2439
      %v2457 = vmul.f32 %v2281, %v2439
      %v2458 = vmul.f32 %v2282, %v2439
      %v2459 = vmul.f32 %v2283, %v2439
      %v2460 = vmul.f32 %v2284, %v2439
      %v2461 = vmul.f32 %v2285, %v2439
      %v2462 = vmul.f32 %v2286, %v2439
      %v2463 = vmul.f32 %v2287, %v2439
      %v2464 = vmul.f32 %v2288, %v2439
      %v2465 = vmul.f32 %v2289, %v2439
      %v2466 = vmul.f32 %v2290, %v2439
      %v2467 = vmul.f32 %v2291, %v2439
      %v2468 = vmul.f32 %v2292, %v2439
      %v2469 = vmul.f32 %v2293, %v2439
      %v2470 = vmul.f32 %v2294, %v2439
      %v2471 = vmul.f32 %v2295, %v2439
      %v2472 = vadd.f32 %v2404, %v2440
      %v2473 = vadd.f32 %v2405, %v2441
      %v2474 = vadd.f32 %v2406, %v2442
      %v2475 = vadd.f32 %v2407, %v2443
      %v2476 = vadd.f32 %v2408, %v2444
      %v2477 = vadd.f32 %v2409, %v2445
      %v2478 = vadd.f32 %v2410, %v2446
      %v2479 = vadd.f32 %v2411, %v2447
      %v2480 = vadd.f32 %v2412, %v2448
      %v2481 = vadd.f32 %v2413, %v2449
      %v2482 = vadd.f32 %v2414, %v2450
      %v2483 = vadd.f32 %v2415, %v2451
      %v2484 = vadd.f32 %v2416, %v2452
      %v2485 = vadd.f32 %v2417, %v2453
      %v2486 = vadd.f32 %v2418, %v2454
      %v2487 = vadd.f32 %v2419, %v2455
      %v2488 = vadd.f32 %v2420, %v2456
      %v2489 = vadd.f32 %v2421, %v2457
      %v2490 = vadd.f32 %v2422, %v2458
      %v2491 = vadd.f32 %v2423, %v2459
      %v2492 = vadd.f32 %v2424, %v2460
      %v2493 = vadd.f32 %v2425, %v2461
      %v2494 = vadd.f32 %v2426, %v2462
      %v2495 = vadd.f32 %v2427, %v2463
      %v2496 = vadd.f32 %v2428, %v2464
      %v2497 = vadd.f32 %v2429, %v2465
      %v2498 = vadd.f32 %v2430, %v2466
      %v2499 = vadd.f32 %v2431, %v2467
      %v2500 = vadd.f32 %v2432, %v2468
      %v2501 = vadd.f32 %v2433, %v2469
      %v2502 = vadd.f32 %v2434, %v2470
      %v2503 = vadd.f32 %v2435, %v2471
      %v2504 = vlaneseq
      %v2505 = vshrl.u32 %v2504, 7
      %v2506 = vsub.s32 1, %v2505
      %v2507 = vrot.slane %v1491, %v2506
      %v2508 = vmul.f32 %v2266, %v2507
      %v2509 = vmul.f32 %v2267, %v2507
      %v2510 = vmul.f32 %v2268, %v2507
      %v2511 = vmul.f32 %v2269, %v2507
      %v2512 = vmul.f32 %v2270, %v2507
      %v2513 = vmul.f32 %v2271, %v2507
      %v2514 = vmul.f32 %v2272, %v2507
      %v2515 = vmul.f32 %v2273, %v2507
      %v2516 = vmul.f32 %v2274, %v2507
      %v2517 = vmul.f32 %v2275, %v2507
      %v2518 = vmul.f32 %v2276, %v2507
      %v2519 = vmul.f32 %v2277, %v2507
      %v2520 = vmul.f32 %v2278, %v2507
      %v2521 = vmul.f32 %v2279, %v2507
      %v2522 = vmul.f32 %v2280, %v2507
      %v2523 = vmul.f32 %v2281, %v2507
      %v2524 = vmul.f32 %v2282, %v2507
      %v2525 = vmul.f32 %v2283, %v2507
      %v2526 = vmul.f32 %v2284, %v2507
      %v2527 = vmul.f32 %v2285, %v2507
      %v2528 = vmul.f32 %v2286, %v2507
      %v2529 = vmul.f32 %v2287, %v2507
      %v2530 = vmul.f32 %v2288, %v2507
      %v2531 = vmul.f32 %v2289, %v2507
      %v2532 = vmul.f32 %v2290, %v2507
      %v2533 = vmul.f32 %v2291, %v2507
      %v2534 = vmul.f32 %v2292, %v2507
      %v2535 = vmul.f32 %v2293, %v2507
      %v2536 = vmul.f32 %v2294, %v2507
      %v2537 = vmul.f32 %v2295, %v2507
      %v2538 = vmul.f32 %v2296, %v2507
      %v2539 = vmul.f32 %v2297, %v2507
      %v2540 = vadd.f32 %v2472, %v2508
      %v2541 = vadd.f32 %v2473, %v2509
      %v2542 = vadd.f32 %v2474, %v2510
      %v2543 = vadd.f32 %v2475, %v2511
      %v2544 = vadd.f32 %v2476, %v2512
      %v2545 = vadd.f32 %v2477, %v2513
      %v2546 = vadd.f32 %v2478, %v2514
      %v2547 = vadd.f32 %v2479, %v2515
      %v2548 = vadd.f32 %v2480, %v2516
      %v2549 = vadd.f32 %v2481, %v2517
      %v2550 = vadd.f32 %v2482, %v2518
      %v2551 = vadd.f32 %v2483, %v2519
      %v2552 = vadd.f32 %v2484, %v2520
      %v2553 = vadd.f32 %v2485, %v2521
      %v2554 = vadd.f32 %v2486, %v2522
      %v2555 = vadd.f32 %v2487, %v2523
      %v2556 = vadd.f32 %v2488, %v2524
      %v2557 = vadd.f32 %v2489, %v2525
      %v2558 = vadd.f32 %v2490, %v2526
      %v2559 = vadd.f32 %v2491, %v2527
      %v2560 = vadd.f32 %v2492, %v2528
      %v2561 = vadd.f32 %v2493, %v2529
      %v2562 = vadd.f32 %v2494, %v2530
      %v2563 = vadd.f32 %v2495, %v2531
      %v2564 = vadd.f32 %v2496, %v2532
      %v2565 = vadd.f32 %v2497, %v2533
      %v2566 = vadd.f32 %v2498, %v2534
      %v2567 = vadd.f32 %v2499, %v2535
      %v2568 = vadd.f32 %v2500, %v2536
      %v2569 = vadd.f32 %v2501, %v2537
      %v2570 = vadd.f32 %v2502, %v2538
      %v2571 = vadd.f32 %v2503, %v2539
      %v2572 = vlaneseq
      %v2573 = vshrl.u32 %v2572, 7
      %v2574 = vsub.s32 6, %v2573
      %v2575 = vrot.slane %v1491, %v2574
      %v2576 = vmul.f32 %v2268, %v2575
      %v2577 = vmul.f32 %v2269, %v2575
      %v2578 = vmul.f32 %v2270, %v2575
      %v2579 = vmul.f32 %v2271, %v2575
      %v2580 = vmul.f32 %v2272, %v2575
      %v2581 = vmul.f32 %v2273, %v2575
      %v2582 = vmul.f32 %v2274, %v2575
      %v2583 = vmul.f32 %v2275, %v2575
      %v2584 = vmul.f32 %v2276, %v2575
      %v2585 = vmul.f32 %v2277, %v2575
      %v2586 = vmul.f32 %v2278, %v2575
      %v2587 = vmul.f32 %v2279, %v2575
      %v2588 = vmul.f32 %v2280, %v2575
      %v2589 = vmul.f32 %v2281, %v2575
      %v2590 = vmul.f32 %v2282, %v2575
      %v2591 = vmul.f32 %v2283, %v2575
      %v2592 = vmul.f32 %v2284, %v2575
      %v2593 = vmul.f32 %v2285, %v2575
      %v2594 = vmul.f32 %v2286, %v2575
      %v2595 = vmul.f32 %v2287, %v2575
      %v2596 = vmul.f32 %v2288, %v2575
      %v2597 = vmul.f32 %v2289, %v2575
      %v2598 = vmul.f32 %v2290, %v2575
      %v2599 = vmul.f32 %v2291, %v2575
      %v2600 = vmul.f32 %v2292, %v2575
      %v2601 = vmul.f32 %v2293, %v2575
      %v2602 = vmul.f32 %v2294, %v2575
      %v2603 = vmul.f32 %v2295, %v2575
      %v2604 = vmul.f32 %v2296, %v2575
      %v2605 = vmul.f32 %v2297, %v2575
      %v2606 = vmul.f32 %v2298, %v2575
      %v2607 = vmul.f32 %v2299, %v2575
      %v2608 = vadd.f32 %v2540, %v2576
      %v2609 = vadd.f32 %v2541, %v2577
      %v2610 = vadd.f32 %v2542, %v2578
      %v2611 = vadd.f32 %v2543, %v2579
      %v2612 = vadd.f32 %v2544, %v2580
      %v2613 = vadd.f32 %v2545, %v2581
      %v2614 = vadd.f32 %v2546, %v2582
      %v2615 = vadd.f32 %v2547, %v2583
      %v2616 = vadd.f32 %v2548, %v2584
      %v2617 = vadd.f32 %v2549, %v2585
      %v2618 = vadd.f32 %v2550, %v2586
      %v2619 = vadd.f32 %v2551, %v2587
      %v2620 = vadd.f32 %v2552, %v2588
      %v2621 = vadd.f32 %v2553, %v2589
      %v2622 = vadd.f32 %v2554, %v2590
      %v2623 = vadd.f32 %v2555, %v2591
      %v2624 = vadd.f32 %v2556, %v2592
      %v2625 = vadd.f32 %v2557, %v2593
      %v2626 = vadd.f32 %v2558, %v2594
      %v2627 = vadd.f32 %v2559, %v2595
      %v2628 = vadd.f32 %v2560, %v2596
      %v2629 = vadd.f32 %v2561, %v2597
      %v2630 = vadd.f32 %v2562, %v2598
      %v2631 = vadd.f32 %v2563, %v2599
      %v2632 = vadd.f32 %v2564, %v2600
      %v2633 = vadd.f32 %v2565, %v2601
      %v2634 = vadd.f32 %v2566, %v2602
      %v2635 = vadd.f32 %v2567, %v2603
      %v2636 = vadd.f32 %v2568, %v2604
      %v2637 = vadd.f32 %v2569, %v2605
      %v2638 = vadd.f32 %v2570, %v2606
      %v2639 = vadd.f32 %v2571, %v2607
      %v2640 = vld [vmem:[#allocation3 + $0x3] sm:$0xff]
      %v2641 = vld [vmem:[#allocation3 + $0xb] sm:$0xff]
      %v2642 = vld [vmem:[#allocation3 + $0x1b] sm:$0xff]
      %v2643 = vld [vmem:[#allocation3 + $0x23] sm:$0xff]
      %v2644 = vld [vmem:[#allocation3 + $0x33] sm:$0xff]
      %v2645 = vld [vmem:[#allocation3 + $0x3b] sm:$0xff]
      %v2646 = vld [vmem:[#allocation3 + $0x4b] sm:$0xff]
      %v2647 = vld [vmem:[#allocation3 + $0x53] sm:$0xff]
      %v2648 = vld [vmem:[#allocation3 + $0x63] sm:$0xff]
      %v2649 = vld [vmem:[#allocation3 + $0x6b] sm:$0xff]
      %v2650 = vld [vmem:[#allocation3 + $0x7b] sm:$0xff]
      %v2651 = vld [vmem:[#allocation3 + $0x83] sm:$0xff]
      %v2652 = vld [vmem:[#allocation3 + $0x93] sm:$0xff]
      %v2653 = vld [vmem:[#allocation3 + $0x9b] sm:$0xff]
      %v2654 = vld [vmem:[#allocation3 + $0xab] sm:$0xff]
      %v2655 = vld [vmem:[#allocation3 + $0xb3] sm:$0xff]
      %v2656 = vld [vmem:[#allocation3 + $0xc3] sm:$0xff]
      %v2657 = vld [vmem:[#allocation3 + $0xcb] sm:$0xff]
      %v2658 = vld [vmem:[#allocation3 + $0xdb] sm:$0xff]
      %v2659 = vld [vmem:[#allocation3 + $0xe3] sm:$0xff]
      %v2660 = vld [vmem:[#allocation3 + $0xf3] sm:$0xff]
      %v2661 = vld [vmem:[#allocation3 + $0xfb] sm:$0xff]
      %v2662 = vld [vmem:[#allocation3 + $0x10b] sm:$0xff]
      %v2663 = vld [vmem:[#allocation3 + $0x113] sm:$0xff]
      %v2664 = vld [vmem:[#allocation3 + $0x123] sm:$0xff]
      %v2665 = vld [vmem:[#allocation3 + $0x12b] sm:$0xff]
      %v2666 = vld [vmem:[#allocation3 + $0x13b] sm:$0xff]
      %v2667 = vld [vmem:[#allocation3 + $0x143] sm:$0xff]
      %v2668 = vld [vmem:[#allocation3 + $0x153] sm:$0xff]
      %v2669 = vld [vmem:[#allocation3 + $0x15b] sm:$0xff]
      %v2670 = vld [vmem:[#allocation3 + $0x16b] sm:$0xff]
      %v2671 = vld [vmem:[#allocation3 + $0x173] sm:$0xff]
      %v2672 = vld [vmem:[#allocation3 + $0x183] sm:$0xff]
      %v2673 = vld [vmem:[#allocation3 + $0x18b] sm:$0xff]
      %v2674 = vld [vmem:[#allocation3 + $0x19b] sm:$0xff]
      %v2675 = vld [vmem:[#allocation3 + $0x1a3] sm:$0xff]
      %v2676 = vld [vmem:[#allocation3 + $0x1b3] sm:$0xff]
      %v2677 = vld [vmem:[#allocation3 + $0x1bb] sm:$0xff]
      %v2678 = vld [vmem:[#allocation3 + $0x1cb] sm:$0xff]
      %v2679 = vld [vmem:[#allocation3 + $0x1d3] sm:$0xff]
      %v2680 = vlaneseq
      %v2681 = vshrl.u32 %v2680, 7
      %v2682 = vsub.s32 3, %v2681
      %v2683 = vrot.slane %v1489, %v2682
      %v2684 = vmul.f32 %v2640, %v2683
      %v2685 = vmul.f32 %v2641, %v2683
      %v2686 = vmul.f32 %v2642, %v2683
      %v2687 = vmul.f32 %v2643, %v2683
      %v2688 = vmul.f32 %v2644, %v2683
      %v2689 = vmul.f32 %v2645, %v2683
      %v2690 = vmul.f32 %v2646, %v2683
      %v2691 = vmul.f32 %v2647, %v2683
      %v2692 = vmul.f32 %v2648, %v2683
      %v2693 = vmul.f32 %v2649, %v2683
      %v2694 = vmul.f32 %v2650, %v2683
      %v2695 = vmul.f32 %v2651, %v2683
      %v2696 = vmul.f32 %v2652, %v2683
      %v2697 = vmul.f32 %v2653, %v2683
      %v2698 = vmul.f32 %v2654, %v2683
      %v2699 = vmul.f32 %v2655, %v2683
      %v2700 = vmul.f32 %v2656, %v2683
      %v2701 = vmul.f32 %v2657, %v2683
      %v2702 = vmul.f32 %v2658, %v2683
      %v2703 = vmul.f32 %v2659, %v2683
      %v2704 = vmul.f32 %v2660, %v2683
      %v2705 = vmul.f32 %v2661, %v2683
      %v2706 = vmul.f32 %v2662, %v2683
      %v2707 = vmul.f32 %v2663, %v2683
      %v2708 = vmul.f32 %v2664, %v2683
      %v2709 = vmul.f32 %v2665, %v2683
      %v2710 = vmul.f32 %v2666, %v2683
      %v2711 = vmul.f32 %v2667, %v2683
      %v2712 = vmul.f32 %v2668, %v2683
      %v2713 = vmul.f32 %v2669, %v2683
      %v2714 = vmul.f32 %v2670, %v2683
      %v2715 = vmul.f32 %v2671, %v2683
      %v2716 = vadd.f32 %v2608, %v2684
      %v2717 = vadd.f32 %v2609, %v2685
      %v2718 = vadd.f32 %v2610, %v2686
      %v2719 = vadd.f32 %v2611, %v2687
      %v2720 = vadd.f32 %v2612, %v2688
      %v2721 = vadd.f32 %v2613, %v2689
      %v2722 = vadd.f32 %v2614, %v2690
      %v2723 = vadd.f32 %v2615, %v2691
      %v2724 = vadd.f32 %v2616, %v2692
      %v2725 = vadd.f32 %v2617, %v2693
      %v2726 = vadd.f32 %v2618, %v2694
      %v2727 = vadd.f32 %v2619, %v2695
      %v2728 = vadd.f32 %v2620, %v2696
      %v2729 = vadd.f32 %v2621, %v2697
      %v2730 = vadd.f32 %v2622, %v2698
      %v2731 = vadd.f32 %v2623, %v2699
      %v2732 = vadd.f32 %v2624, %v2700
      %v2733 = vadd.f32 %v2625, %v2701
      %v2734 = vadd.f32 %v2626, %v2702
      %v2735 = vadd.f32 %v2627, %v2703
      %v2736 = vadd.f32 %v2628, %v2704
      %v2737 = vadd.f32 %v2629, %v2705
      %v2738 = vadd.f32 %v2630, %v2706
      %v2739 = vadd.f32 %v2631, %v2707
      %v2740 = vadd.f32 %v2632, %v2708
      %v2741 = vadd.f32 %v2633, %v2709
      %v2742 = vadd.f32 %v2634, %v2710
      %v2743 = vadd.f32 %v2635, %v2711
      %v2744 = vadd.f32 %v2636, %v2712
      %v2745 = vadd.f32 %v2637, %v2713
      %v2746 = vadd.f32 %v2638, %v2714
      %v2747 = vadd.f32 %v2639, %v2715
      %v2748 = vlaneseq
      %v2749 = vshrl.u32 %v2748, 7
      %v2750 = vsub.s32 0, %v2749
      %v2751 = vrot.slane %v1490, %v2750
      %v2752 = vmul.f32 %v2642, %v2751
      %v2753 = vmul.f32 %v2643, %v2751
      %v2754 = vmul.f32 %v2644, %v2751
      %v2755 = vmul.f32 %v2645, %v2751
      %v2756 = vmul.f32 %v2646, %v2751
      %v2757 = vmul.f32 %v2647, %v2751
      %v2758 = vmul.f32 %v2648, %v2751
      %v2759 = vmul.f32 %v2649, %v2751
      %v2760 = vmul.f32 %v2650, %v2751
      %v2761 = vmul.f32 %v2651, %v2751
      %v2762 = vmul.f32 %v2652, %v2751
      %v2763 = vmul.f32 %v2653, %v2751
      %v2764 = vmul.f32 %v2654, %v2751
      %v2765 = vmul.f32 %v2655, %v2751
      %v2766 = vmul.f32 %v2656, %v2751
      %v2767 = vmul.f32 %v2657, %v2751
      %v2768 = vmul.f32 %v2658, %v2751
      %v2769 = vmul.f32 %v2659, %v2751
      %v2770 = vmul.f32 %v2660, %v2751
      %v2771 = vmul.f32 %v2661, %v2751
      %v2772 = vmul.f32 %v2662, %v2751
      %v2773 = vmul.f32 %v2663, %v2751
      %v2774 = vmul.f32 %v2664, %v2751
      %v2775 = vmul.f32 %v2665, %v2751
      %v2776 = vmul.f32 %v2666, %v2751
      %v2777 = vmul.f32 %v2667, %v2751
      %v2778 = vmul.f32 %v2668, %v2751
      %v2779 = vmul.f32 %v2669, %v2751
      %v2780 = vmul.f32 %v2670, %v2751
      %v2781 = vmul.f32 %v2671, %v2751
      %v2782 = vmul.f32 %v2672, %v2751
      %v2783 = vmul.f32 %v2673, %v2751
      %v2784 = vadd.f32 %v2716, %v2752
      %v2785 = vadd.f32 %v2717, %v2753
      %v2786 = vadd.f32 %v2718, %v2754
      %v2787 = vadd.f32 %v2719, %v2755
      %v2788 = vadd.f32 %v2720, %v2756
      %v2789 = vadd.f32 %v2721, %v2757
      %v2790 = vadd.f32 %v2722, %v2758
      %v2791 = vadd.f32 %v2723, %v2759
      %v2792 = vadd.f32 %v2724, %v2760
      %v2793 = vadd.f32 %v2725, %v2761
      %v2794 = vadd.f32 %v2726, %v2762
      %v2795 = vadd.f32 %v2727, %v2763
      %v2796 = vadd.f32 %v2728, %v2764
      %v2797 = vadd.f32 %v2729, %v2765
      %v2798 = vadd.f32 %v2730, %v2766
      %v2799 = vadd.f32 %v2731, %v2767
      %v2800 = vadd.f32 %v2732, %v2768
      %v2801 = vadd.f32 %v2733, %v2769
      %v2802 = vadd.f32 %v2734, %v2770
      %v2803 = vadd.f32 %v2735, %v2771
      %v2804 = vadd.f32 %v2736, %v2772
      %v2805 = vadd.f32 %v2737, %v2773
      %v2806 = vadd.f32 %v2738, %v2774
      %v2807 = vadd.f32 %v2739, %v2775
      %v2808 = vadd.f32 %v2740, %v2776
      %v2809 = vadd.f32 %v2741, %v2777
      %v2810 = vadd.f32 %v2742, %v2778
      %v2811 = vadd.f32 %v2743, %v2779
      %v2812 = vadd.f32 %v2744, %v2780
      %v2813 = vadd.f32 %v2745, %v2781
      %v2814 = vadd.f32 %v2746, %v2782
      %v2815 = vadd.f32 %v2747, %v2783
      %v2816 = vlaneseq
      %v2817 = vshrl.u32 %v2816, 7
      %v2818 = vsub.s32 5, %v2817
      %v2819 = vrot.slane %v1490, %v2818
      %v2820 = vmul.f32 %v2644, %v2819
      %v2821 = vmul.f32 %v2645, %v2819
      %v2822 = vmul.f32 %v2646, %v2819
      %v2823 = vmul.f32 %v2647, %v2819
      %v2824 = vmul.f32 %v2648, %v2819
      %v2825 = vmul.f32 %v2649, %v2819
      %v2826 = vmul.f32 %v2650, %v2819
      %v2827 = vmul.f32 %v2651, %v2819
      %v2828 = vmul.f32 %v2652, %v2819
      %v2829 = vmul.f32 %v2653, %v2819
      %v2830 = vmul.f32 %v2654, %v2819
      %v2831 = vmul.f32 %v2655, %v2819
      %v2832 = vmul.f32 %v2656, %v2819
      %v2833 = vmul.f32 %v2657, %v2819
      %v2834 = vmul.f32 %v2658, %v2819
      %v2835 = vmul.f32 %v2659, %v2819
      %v2836 = vmul.f32 %v2660, %v2819
      %v2837 = vmul.f32 %v2661, %v2819
      %v2838 = vmul.f32 %v2662, %v2819
      %v2839 = vmul.f32 %v2663, %v2819
      %v2840 = vmul.f32 %v2664, %v2819
      %v2841 = vmul.f32 %v2665, %v2819
      %v2842 = vmul.f32 %v2666, %v2819
      %v2843 = vmul.f32 %v2667, %v2819
      %v2844 = vmul.f32 %v2668, %v2819
      %v2845 = vmul.f32 %v2669, %v2819
      %v2846 = vmul.f32 %v2670, %v2819
      %v2847 = vmul.f32 %v2671, %v2819
      %v2848 = vmul.f32 %v2672, %v2819
      %v2849 = vmul.f32 %v2673, %v2819
      %v2850 = vmul.f32 %v2674, %v2819
      %v2851 = vmul.f32 %v2675, %v2819
      %v2852 = vadd.f32 %v2784, %v2820
      %v2853 = vadd.f32 %v2785, %v2821
      %v2854 = vadd.f32 %v2786, %v2822
      %v2855 = vadd.f32 %v2787, %v2823
      %v2856 = vadd.f32 %v2788, %v2824
      %v2857 = vadd.f32 %v2789, %v2825
      %v2858 = vadd.f32 %v2790, %v2826
      %v2859 = vadd.f32 %v2791, %v2827
      %v2860 = vadd.f32 %v2792, %v2828
      %v2861 = vadd.f32 %v2793, %v2829
      %v2862 = vadd.f32 %v2794, %v2830
      %v2863 = vadd.f32 %v2795, %v2831
      %v2864 = vadd.f32 %v2796, %v2832
      %v2865 = vadd.f32 %v2797, %v2833
      %v2866 = vadd.f32 %v2798, %v2834
      %v2867 = vadd.f32 %v2799, %v2835
      %v2868 = vadd.f32 %v2800, %v2836
      %v2869 = vadd.f32 %v2801, %v2837
      %v2870 = vadd.f32 %v2802, %v2838
      %v2871 = vadd.f32 %v2803, %v2839
      %v2872 = vadd.f32 %v2804, %v2840
      %v2873 = vadd.f32 %v2805, %v2841
      %v2874 = vadd.f32 %v2806, %v2842
      %v2875 = vadd.f32 %v2807, %v2843
      %v2876 = vadd.f32 %v2808, %v2844
      %v2877 = vadd.f32 %v2809, %v2845
      %v2878 = vadd.f32 %v2810, %v2846
      %v2879 = vadd.f32 %v2811, %v2847
      %v2880 = vadd.f32 %v2812, %v2848
      %v2881 = vadd.f32 %v2813, %v2849
      %v2882 = vadd.f32 %v2814, %v2850
      %v2883 = vadd.f32 %v2815, %v2851
      %v2884 = vlaneseq
      %v2885 = vshrl.u32 %v2884, 7
      %v2886 = vsub.s32 2, %v2885
      %v2887 = vrot.slane %v1491, %v2886
      %v2888 = vmul.f32 %v2646, %v2887
      %v2889 = vmul.f32 %v2647, %v2887
      %v2890 = vmul.f32 %v2648, %v2887
      %v2891 = vmul.f32 %v2649, %v2887
      %v2892 = vmul.f32 %v2650, %v2887
      %v2893 = vmul.f32 %v2651, %v2887
      %v2894 = vmul.f32 %v2652, %v2887
      %v2895 = vmul.f32 %v2653, %v2887
      %v2896 = vmul.f32 %v2654, %v2887
      %v2897 = vmul.f32 %v2655, %v2887
      %v2898 = vmul.f32 %v2656, %v2887
      %v2899 = vmul.f32 %v2657, %v2887
      %v2900 = vmul.f32 %v2658, %v2887
      %v2901 = vmul.f32 %v2659, %v2887
      %v2902 = vmul.f32 %v2660, %v2887
      %v2903 = vmul.f32 %v2661, %v2887
      %v2904 = vmul.f32 %v2662, %v2887
      %v2905 = vmul.f32 %v2663, %v2887
      %v2906 = vmul.f32 %v2664, %v2887
      %v2907 = vmul.f32 %v2665, %v2887
      %v2908 = vmul.f32 %v2666, %v2887
      %v2909 = vmul.f32 %v2667, %v2887
      %v2910 = vmul.f32 %v2668, %v2887
      %v2911 = vmul.f32 %v2669, %v2887
      %v2912 = vmul.f32 %v2670, %v2887
      %v2913 = vmul.f32 %v2671, %v2887
      %v2914 = vmul.f32 %v2672, %v2887
      %v2915 = vmul.f32 %v2673, %v2887
      %v2916 = vmul.f32 %v2674, %v2887
      %v2917 = vmul.f32 %v2675, %v2887
      %v2918 = vmul.f32 %v2676, %v2887
      %v2919 = vmul.f32 %v2677, %v2887
      %v2920 = vadd.f32 %v2852, %v2888
      %v2921 = vadd.f32 %v2853, %v2889
      %v2922 = vadd.f32 %v2854, %v2890
      %v2923 = vadd.f32 %v2855, %v2891
      %v2924 = vadd.f32 %v2856, %v2892
      %v2925 = vadd.f32 %v2857, %v2893
      %v2926 = vadd.f32 %v2858, %v2894
      %v2927 = vadd.f32 %v2859, %v2895
      %v2928 = vadd.f32 %v2860, %v2896
      %v2929 = vadd.f32 %v2861, %v2897
      %v2930 = vadd.f32 %v2862, %v2898
      %v2931 = vadd.f32 %v2863, %v2899
      %v2932 = vadd.f32 %v2864, %v2900
      %v2933 = vadd.f32 %v2865, %v2901
      %v2934 = vadd.f32 %v2866, %v2902
      %v2935 = vadd.f32 %v2867, %v2903
      %v2936 = vadd.f32 %v2868, %v2904
      %v2937 = vadd.f32 %v2869, %v2905
      %v2938 = vadd.f32 %v2870, %v2906
      %v2939 = vadd.f32 %v2871, %v2907
      %v2940 = vadd.f32 %v2872, %v2908
      %v2941 = vadd.f32 %v2873, %v2909
      %v2942 = vadd.f32 %v2874, %v2910
      %v2943 = vadd.f32 %v2875, %v2911
      %v2944 = vadd.f32 %v2876, %v2912
      %v2945 = vadd.f32 %v2877, %v2913
      %v2946 = vadd.f32 %v2878, %v2914
      %v2947 = vadd.f32 %v2879, %v2915
      %v2948 = vadd.f32 %v2880, %v2916
      %v2949 = vadd.f32 %v2881, %v2917
      %v2950 = vadd.f32 %v2882, %v2918
      %v2951 = vadd.f32 %v2883, %v2919
      %v2952 = vlaneseq
      %v2953 = vshrl.u32 %v2952, 7
      %v2954 = vsub.s32 7, %v2953
      %v2955 = vrot.slane %v1491, %v2954
      %v2956 = vmul.f32 %v2648, %v2955
      %v2957 = vmul.f32 %v2649, %v2955
      %v2958 = vmul.f32 %v2650, %v2955
      %v2959 = vmul.f32 %v2651, %v2955
      %v2960 = vmul.f32 %v2652, %v2955
      %v2961 = vmul.f32 %v2653, %v2955
      %v2962 = vmul.f32 %v2654, %v2955
      %v2963 = vmul.f32 %v2655, %v2955
      %v2964 = vmul.f32 %v2656, %v2955
      %v2965 = vmul.f32 %v2657, %v2955
      %v2966 = vmul.f32 %v2658, %v2955
      %v2967 = vmul.f32 %v2659, %v2955
      %v2968 = vmul.f32 %v2660, %v2955
      %v2969 = vmul.f32 %v2661, %v2955
      %v2970 = vmul.f32 %v2662, %v2955
      %v2971 = vmul.f32 %v2663, %v2955
      %v2972 = vmul.f32 %v2664, %v2955
      %v2973 = vmul.f32 %v2665, %v2955
      %v2974 = vmul.f32 %v2666, %v2955
      %v2975 = vmul.f32 %v2667, %v2955
      %v2976 = vmul.f32 %v2668, %v2955
      %v2977 = vmul.f32 %v2669, %v2955
      %v2978 = vmul.f32 %v2670, %v2955
      %v2979 = vmul.f32 %v2671, %v2955
      %v2980 = vmul.f32 %v2672, %v2955
      %v2981 = vmul.f32 %v2673, %v2955
      %v2982 = vmul.f32 %v2674, %v2955
      %v2983 = vmul.f32 %v2675, %v2955
      %v2984 = vmul.f32 %v2676, %v2955
      %v2985 = vmul.f32 %v2677, %v2955
      %v2986 = vmul.f32 %v2678, %v2955
      %v2987 = vmul.f32 %v2679, %v2955
      %v2988 = vadd.f32 %v2920, %v2956
      %v2989 = vadd.f32 %v2921, %v2957
      %v2990 = vadd.f32 %v2922, %v2958
      %v2991 = vadd.f32 %v2923, %v2959
      %v2992 = vadd.f32 %v2924, %v2960
      %v2993 = vadd.f32 %v2925, %v2961
      %v2994 = vadd.f32 %v2926, %v2962
      %v2995 = vadd.f32 %v2927, %v2963
      %v2996 = vadd.f32 %v2928, %v2964
      %v2997 = vadd.f32 %v2929, %v2965
      %v2998 = vadd.f32 %v2930, %v2966
      %v2999 = vadd.f32 %v2931, %v2967
      %v3000 = vadd.f32 %v2932, %v2968
      %v3001 = vadd.f32 %v2933, %v2969
      %v3002 = vadd.f32 %v2934, %v2970
      %v3003 = vadd.f32 %v2935, %v2971
      %v3004 = vadd.f32 %v2936, %v2972
      %v3005 = vadd.f32 %v2937, %v2973
      %v3006 = vadd.f32 %v2938, %v2974
      %v3007 = vadd.f32 %v2939, %v2975
      %v3008 = vadd.f32 %v2940, %v2976
      %v3009 = vadd.f32 %v2941, %v2977
      %v3010 = vadd.f32 %v2942, %v2978
      %v3011 = vadd.f32 %v2943, %v2979
      %v3012 = vadd.f32 %v2944, %v2980
      %v3013 = vadd.f32 %v2945, %v2981
      %v3014 = vadd.f32 %v2946, %v2982
      %v3015 = vadd.f32 %v2947, %v2983
      %v3016 = vadd.f32 %v2948, %v2984
      %v3017 = vadd.f32 %v2949, %v2985
      %v3018 = vadd.f32 %v2950, %v2986
      %v3019 = vadd.f32 %v2951, %v2987
      %v3020 = vld [vmem:[#allocation3 + $0x4] sm:$0xff]
      %v3021 = vld [vmem:[#allocation3 + $0xc] sm:$0xff]
      %v3022 = vld [vmem:[#allocation3 + $0x1c] sm:$0xff]
      %v3023 = vld [vmem:[#allocation3 + $0x24] sm:$0xff]
      %v3024 = vld [vmem:[#allocation3 + $0x34] sm:$0xff]
      %v3025 = vld [vmem:[#allocation3 + $0x3c] sm:$0xff]
      %v3026 = vld [vmem:[#allocation3 + $0x4c] sm:$0xff]
      %v3027 = vld [vmem:[#allocation3 + $0x54] sm:$0xff]
      %v3028 = vld [vmem:[#allocation3 + $0x64] sm:$0xff]
      %v3029 = vld [vmem:[#allocation3 + $0x6c] sm:$0xff]
      %v3030 = vld [vmem:[#allocation3 + $0x7c] sm:$0xff]
      %v3031 = vld [vmem:[#allocation3 + $0x84] sm:$0xff]
      %v3032 = vld [vmem:[#allocation3 + $0x94] sm:$0xff]
      %v3033 = vld [vmem:[#allocation3 + $0x9c] sm:$0xff]
      %v3034 = vld [vmem:[#allocation3 + $0xac] sm:$0xff]
      %v3035 = vld [vmem:[#allocation3 + $0xb4] sm:$0xff]
      %v3036 = vld [vmem:[#allocation3 + $0xc4] sm:$0xff]
      %v3037 = vld [vmem:[#allocation3 + $0xcc] sm:$0xff]
      %v3038 = vld [vmem:[#allocation3 + $0xdc] sm:$0xff]
      %v3039 = vld [vmem:[#allocation3 + $0xe4] sm:$0xff]
      %v3040 = vld [vmem:[#allocation3 + $0xf4] sm:$0xff]
      %v3041 = vld [vmem:[#allocation3 + $0xfc] sm:$0xff]
      %v3042 = vld [vmem:[#allocation3 + $0x10c] sm:$0xff]
      %v3043 = vld [vmem:[#allocation3 + $0x114] sm:$0xff]
      %v3044 = vld [vmem:[#allocation3 + $0x124] sm:$0xff]
      %v3045 = vld [vmem:[#allocation3 + $0x12c] sm:$0xff]
      %v3046 = vld [vmem:[#allocation3 + $0x13c] sm:$0xff]
      %v3047 = vld [vmem:[#allocation3 + $0x144] sm:$0xff]
      %v3048 = vld [vmem:[#allocation3 + $0x154] sm:$0xff]
      %v3049 = vld [vmem:[#allocation3 + $0x15c] sm:$0xff]
      %v3050 = vld [vmem:[#allocation3 + $0x16c] sm:$0xff]
      %v3051 = vld [vmem:[#allocation3 + $0x174] sm:$0xff]
      %v3052 = vld [vmem:[#allocation3 + $0x184] sm:$0xff]
      %v3053 = vld [vmem:[#allocation3 + $0x18c] sm:$0xff]
      %v3054 = vld [vmem:[#allocation3 + $0x19c] sm:$0xff]
      %v3055 = vld [vmem:[#allocation3 + $0x1a4] sm:$0xff]
      %v3056 = vld [vmem:[#allocation3 + $0x1b4] sm:$0xff]
      %v3057 = vld [vmem:[#allocation3 + $0x1bc] sm:$0xff]
      %v3058 = vld [vmem:[#allocation3 + $0x1cc] sm:$0xff]
      %v3059 = vld [vmem:[#allocation3 + $0x1d4] sm:$0xff]
      %v3060 = vlaneseq
      %v3061 = vshrl.u32 %v3060, 7
      %v3062 = vsub.s32 4, %v3061
      %v3063 = vrot.slane %v1489, %v3062
      %v3064 = vmul.f32 %v3020, %v3063
      %v3065 = vmul.f32 %v3021, %v3063
      %v3066 = vmul.f32 %v3022, %v3063
      %v3067 = vmul.f32 %v3023, %v3063
      %v3068 = vmul.f32 %v3024, %v3063
      %v3069 = vmul.f32 %v3025, %v3063
      %v3070 = vmul.f32 %v3026, %v3063
      %v3071 = vmul.f32 %v3027, %v3063
      %v3072 = vmul.f32 %v3028, %v3063
      %v3073 = vmul.f32 %v3029, %v3063
      %v3074 = vmul.f32 %v3030, %v3063
      %v3075 = vmul.f32 %v3031, %v3063
      %v3076 = vmul.f32 %v3032, %v3063
      %v3077 = vmul.f32 %v3033, %v3063
      %v3078 = vmul.f32 %v3034, %v3063
      %v3079 = vmul.f32 %v3035, %v3063
      %v3080 = vmul.f32 %v3036, %v3063
      %v3081 = vmul.f32 %v3037, %v3063
      %v3082 = vmul.f32 %v3038, %v3063
      %v3083 = vmul.f32 %v3039, %v3063
      %v3084 = vmul.f32 %v3040, %v3063
      %v3085 = vmul.f32 %v3041, %v3063
      %v3086 = vmul.f32 %v3042, %v3063
      %v3087 = vmul.f32 %v3043, %v3063
      %v3088 = vmul.f32 %v3044, %v3063
      %v3089 = vmul.f32 %v3045, %v3063
      %v3090 = vmul.f32 %v3046, %v3063
      %v3091 = vmul.f32 %v3047, %v3063
      %v3092 = vmul.f32 %v3048, %v3063
      %v3093 = vmul.f32 %v3049, %v3063
      %v3094 = vmul.f32 %v3050, %v3063
      %v3095 = vmul.f32 %v3051, %v3063
      %v3096 = vadd.f32 %v2988, %v3064
      %v3097 = vadd.f32 %v2989, %v3065
      %v3098 = vadd.f32 %v2990, %v3066
      %v3099 = vadd.f32 %v2991, %v3067
      %v3100 = vadd.f32 %v2992, %v3068
      %v3101 = vadd.f32 %v2993, %v3069
      %v3102 = vadd.f32 %v2994, %v3070
      %v3103 = vadd.f32 %v2995, %v3071
      %v3104 = vadd.f32 %v2996, %v3072
      %v3105 = vadd.f32 %v2997, %v3073
      %v3106 = vadd.f32 %v2998, %v3074
      %v3107 = vadd.f32 %v2999, %v3075
      %v3108 = vadd.f32 %v3000, %v3076
      %v3109 = vadd.f32 %v3001, %v3077
      %v3110 = vadd.f32 %v3002, %v3078
      %v3111 = vadd.f32 %v3003, %v3079
      %v3112 = vadd.f32 %v3004, %v3080
      %v3113 = vadd.f32 %v3005, %v3081
      %v3114 = vadd.f32 %v3006, %v3082
      %v3115 = vadd.f32 %v3007, %v3083
      %v3116 = vadd.f32 %v3008, %v3084
      %v3117 = vadd.f32 %v3009, %v3085
      %v3118 = vadd.f32 %v3010, %v3086
      %v3119 = vadd.f32 %v3011, %v3087
      %v3120 = vadd.f32 %v3012, %v3088
      %v3121 = vadd.f32 %v3013, %v3089
      %v3122 = vadd.f32 %v3014, %v3090
      %v3123 = vadd.f32 %v3015, %v3091
      %v3124 = vadd.f32 %v3016, %v3092
      %v3125 = vadd.f32 %v3017, %v3093
      %v3126 = vadd.f32 %v3018, %v3094
      %v3127 = vadd.f32 %v3019, %v3095
      %v3128 = vlaneseq
      %v3129 = vshrl.u32 %v3128, 7
      %v3130 = vsub.s32 1, %v3129
      %v3131 = vrot.slane %v1490, %v3130
      %v3132 = vmul.f32 %v3022, %v3131
      %v3133 = vmul.f32 %v3023, %v3131
      %v3134 = vmul.f32 %v3024, %v3131
      %v3135 = vmul.f32 %v3025, %v3131
      %v3136 = vmul.f32 %v3026, %v3131
      %v3137 = vmul.f32 %v3027, %v3131
      %v3138 = vmul.f32 %v3028, %v3131
      %v3139 = vmul.f32 %v3029, %v3131
      %v3140 = vmul.f32 %v3030, %v3131
      %v3141 = vmul.f32 %v3031, %v3131
      %v3142 = vmul.f32 %v3032, %v3131
      %v3143 = vmul.f32 %v3033, %v3131
      %v3144 = vmul.f32 %v3034, %v3131
      %v3145 = vmul.f32 %v3035, %v3131
      %v3146 = vmul.f32 %v3036, %v3131
      %v3147 = vmul.f32 %v3037, %v3131
      %v3148 = vmul.f32 %v3038, %v3131
      %v3149 = vmul.f32 %v3039, %v3131
      %v3150 = vmul.f32 %v3040, %v3131
      %v3151 = vmul.f32 %v3041, %v3131
      %v3152 = vmul.f32 %v3042, %v3131
      %v3153 = vmul.f32 %v3043, %v3131
      %v3154 = vmul.f32 %v3044, %v3131
      %v3155 = vmul.f32 %v3045, %v3131
      %v3156 = vmul.f32 %v3046, %v3131
      %v3157 = vmul.f32 %v3047, %v3131
      %v3158 = vmul.f32 %v3048, %v3131
      %v3159 = vmul.f32 %v3049, %v3131
      %v3160 = vmul.f32 %v3050, %v3131
      %v3161 = vmul.f32 %v3051, %v3131
      %v3162 = vmul.f32 %v3052, %v3131
      %v3163 = vmul.f32 %v3053, %v3131
      %v3164 = vadd.f32 %v3096, %v3132
      %v3165 = vadd.f32 %v3097, %v3133
      %v3166 = vadd.f32 %v3098, %v3134
      %v3167 = vadd.f32 %v3099, %v3135
      %v3168 = vadd.f32 %v3100, %v3136
      %v3169 = vadd.f32 %v3101, %v3137
      %v3170 = vadd.f32 %v3102, %v3138
      %v3171 = vadd.f32 %v3103, %v3139
      %v3172 = vadd.f32 %v3104, %v3140
      %v3173 = vadd.f32 %v3105, %v3141
      %v3174 = vadd.f32 %v3106, %v3142
      %v3175 = vadd.f32 %v3107, %v3143
      %v3176 = vadd.f32 %v3108, %v3144
      %v3177 = vadd.f32 %v3109, %v3145
      %v3178 = vadd.f32 %v3110, %v3146
      %v3179 = vadd.f32 %v3111, %v3147
      %v3180 = vadd.f32 %v3112, %v3148
      %v3181 = vadd.f32 %v3113, %v3149
      %v3182 = vadd.f32 %v3114, %v3150
      %v3183 = vadd.f32 %v3115, %v3151
      %v3184 = vadd.f32 %v3116, %v3152
      %v3185 = vadd.f32 %v3117, %v3153
      %v3186 = vadd.f32 %v3118, %v3154
      %v3187 = vadd.f32 %v3119, %v3155
      %v3188 = vadd.f32 %v3120, %v3156
      %v3189 = vadd.f32 %v3121, %v3157
      %v3190 = vadd.f32 %v3122, %v3158
      %v3191 = vadd.f32 %v3123, %v3159
      %v3192 = vadd.f32 %v3124, %v3160
      %v3193 = vadd.f32 %v3125, %v3161
      %v3194 = vadd.f32 %v3126, %v3162
      %v3195 = vadd.f32 %v3127, %v3163
      %v3196 = vlaneseq
      %v3197 = vshrl.u32 %v3196, 7
      %v3198 = vsub.s32 6, %v3197
      %v3199 = vrot.slane %v1490, %v3198
      %v3200 = vmul.f32 %v3024, %v3199
      %v3201 = vmul.f32 %v3025, %v3199
      %v3202 = vmul.f32 %v3026, %v3199
      %v3203 = vmul.f32 %v3027, %v3199
      %v3204 = vmul.f32 %v3028, %v3199
      %v3205 = vmul.f32 %v3029, %v3199
      %v3206 = vmul.f32 %v3030, %v3199
      %v3207 = vmul.f32 %v3031, %v3199
      %v3208 = vmul.f32 %v3032, %v3199
      %v3209 = vmul.f32 %v3033, %v3199
      %v3210 = vmul.f32 %v3034, %v3199
      %v3211 = vmul.f32 %v3035, %v3199
      %v3212 = vmul.f32 %v3036, %v3199
      %v3213 = vmul.f32 %v3037, %v3199
      %v3214 = vmul.f32 %v3038, %v3199
      %v3215 = vmul.f32 %v3039, %v3199
      %v3216 = vmul.f32 %v3040, %v3199
      %v3217 = vmul.f32 %v3041, %v3199
      %v3218 = vmul.f32 %v3042, %v3199
      %v3219 = vmul.f32 %v3043, %v3199
      %v3220 = vmul.f32 %v3044, %v3199
      %v3221 = vmul.f32 %v3045, %v3199
      %v3222 = vmul.f32 %v3046, %v3199
      %v3223 = vmul.f32 %v3047, %v3199
      %v3224 = vmul.f32 %v3048, %v3199
      %v3225 = vmul.f32 %v3049, %v3199
      %v3226 = vmul.f32 %v3050, %v3199
      %v3227 = vmul.f32 %v3051, %v3199
      %v3228 = vmul.f32 %v3052, %v3199
      %v3229 = vmul.f32 %v3053, %v3199
      %v3230 = vmul.f32 %v3054, %v3199
      %v3231 = vmul.f32 %v3055, %v3199
      %v3232 = vadd.f32 %v3164, %v3200
      %v3233 = vadd.f32 %v3165, %v3201
      %v3234 = vadd.f32 %v3166, %v3202
      %v3235 = vadd.f32 %v3167, %v3203
      %v3236 = vadd.f32 %v3168, %v3204
      %v3237 = vadd.f32 %v3169, %v3205
      %v3238 = vadd.f32 %v3170, %v3206
      %v3239 = vadd.f32 %v3171, %v3207
      %v3240 = vadd.f32 %v3172, %v3208
      %v3241 = vadd.f32 %v3173, %v3209
      %v3242 = vadd.f32 %v3174, %v3210
      %v3243 = vadd.f32 %v3175, %v3211
      %v3244 = vadd.f32 %v3176, %v3212
      %v3245 = vadd.f32 %v3177, %v3213
      %v3246 = vadd.f32 %v3178, %v3214
      %v3247 = vadd.f32 %v3179, %v3215
      %v3248 = vadd.f32 %v3180, %v3216
      %v3249 = vadd.f32 %v3181, %v3217
      %v3250 = vadd.f32 %v3182, %v3218
      %v3251 = vadd.f32 %v3183, %v3219
      %v3252 = vadd.f32 %v3184, %v3220
      %v3253 = vadd.f32 %v3185, %v3221
      %v3254 = vadd.f32 %v3186, %v3222
      %v3255 = vadd.f32 %v3187, %v3223
      %v3256 = vadd.f32 %v3188, %v3224
      %v3257 = vadd.f32 %v3189, %v3225
      %v3258 = vadd.f32 %v3190, %v3226
      %v3259 = vadd.f32 %v3191, %v3227
      %v3260 = vadd.f32 %v3192, %v3228
      %v3261 = vadd.f32 %v3193, %v3229
      %v3262 = vadd.f32 %v3194, %v3230
      %v3263 = vadd.f32 %v3195, %v3231
      %v3264 = vlaneseq
      %v3265 = vshrl.u32 %v3264, 7
      %v3266 = vsub.s32 3, %v3265
      %v3267 = vrot.slane %v1491, %v3266
      %v3268 = vmul.f32 %v3026, %v3267
      %v3269 = vmul.f32 %v3027, %v3267
      %v3270 = vmul.f32 %v3028, %v3267
      %v3271 = vmul.f32 %v3029, %v3267
      %v3272 = vmul.f32 %v3030, %v3267
      %v3273 = vmul.f32 %v3031, %v3267
      %v3274 = vmul.f32 %v3032, %v3267
      %v3275 = vmul.f32 %v3033, %v3267
      %v3276 = vmul.f32 %v3034, %v3267
      %v3277 = vmul.f32 %v3035, %v3267
      %v3278 = vmul.f32 %v3036, %v3267
      %v3279 = vmul.f32 %v3037, %v3267
      %v3280 = vmul.f32 %v3038, %v3267
      %v3281 = vmul.f32 %v3039, %v3267
      %v3282 = vmul.f32 %v3040, %v3267
      %v3283 = vmul.f32 %v3041, %v3267
      %v3284 = vmul.f32 %v3042, %v3267
      %v3285 = vmul.f32 %v3043, %v3267
      %v3286 = vmul.f32 %v3044, %v3267
      %v3287 = vmul.f32 %v3045, %v3267
      %v3288 = vmul.f32 %v3046, %v3267
      %v3289 = vmul.f32 %v3047, %v3267
      %v3290 = vmul.f32 %v3048, %v3267
      %v3291 = vmul.f32 %v3049, %v3267
      %v3292 = vmul.f32 %v3050, %v3267
      %v3293 = vmul.f32 %v3051, %v3267
      %v3294 = vmul.f32 %v3052, %v3267
      %v3295 = vmul.f32 %v3053, %v3267
      %v3296 = vmul.f32 %v3054, %v3267
      %v3297 = vmul.f32 %v3055, %v3267
      %v3298 = vmul.f32 %v3056, %v3267
      %v3299 = vmul.f32 %v3057, %v3267
      %v3300 = vadd.f32 %v3232, %v3268
      %v3301 = vadd.f32 %v3233, %v3269
      %v3302 = vadd.f32 %v3234, %v3270
      %v3303 = vadd.f32 %v3235, %v3271
      %v3304 = vadd.f32 %v3236, %v3272
      %v3305 = vadd.f32 %v3237, %v3273
      %v3306 = vadd.f32 %v3238, %v3274
      %v3307 = vadd.f32 %v3239, %v3275
      %v3308 = vadd.f32 %v3240, %v3276
      %v3309 = vadd.f32 %v3241, %v3277
      %v3310 = vadd.f32 %v3242, %v3278
      %v3311 = vadd.f32 %v3243, %v3279
      %v3312 = vadd.f32 %v3244, %v3280
      %v3313 = vadd.f32 %v3245, %v3281
      %v3314 = vadd.f32 %v3246, %v3282
      %v3315 = vadd.f32 %v3247, %v3283
      %v3316 = vadd.f32 %v3248, %v3284
      %v3317 = vadd.f32 %v3249, %v3285
      %v3318 = vadd.f32 %v3250, %v3286
      %v3319 = vadd.f32 %v3251, %v3287
      %v3320 = vadd.f32 %v3252, %v3288
      %v3321 = vadd.f32 %v3253, %v3289
      %v3322 = vadd.f32 %v3254, %v3290
      %v3323 = vadd.f32 %v3255, %v3291
      %v3324 = vadd.f32 %v3256, %v3292
      %v3325 = vadd.f32 %v3257, %v3293
      %v3326 = vadd.f32 %v3258, %v3294
      %v3327 = vadd.f32 %v3259, %v3295
      %v3328 = vadd.f32 %v3260, %v3296
      %v3329 = vadd.f32 %v3261, %v3297
      %v3330 = vadd.f32 %v3262, %v3298
      %v3331 = vadd.f32 %v3263, %v3299
      %v3332 = vlaneseq
      %v3333 = vshrl.u32 %v3332, 7
      %v3334 = vsub.s32 0, %v3333
      %v3335 = vrot.slane %v1492, %v3334
      %v3336 = vmul.f32 %v3028, %v3335
      %v3337 = vmul.f32 %v3029, %v3335
      %v3338 = vmul.f32 %v3030, %v3335
      %v3339 = vmul.f32 %v3031, %v3335
      %v3340 = vmul.f32 %v3032, %v3335
      %v3341 = vmul.f32 %v3033, %v3335
      %v3342 = vmul.f32 %v3034, %v3335
      %v3343 = vmul.f32 %v3035, %v3335
      %v3344 = vmul.f32 %v3036, %v3335
      %v3345 = vmul.f32 %v3037, %v3335
      %v3346 = vmul.f32 %v3038, %v3335
      %v3347 = vmul.f32 %v3039, %v3335
      %v3348 = vmul.f32 %v3040, %v3335
      %v3349 = vmul.f32 %v3041, %v3335
      %v3350 = vmul.f32 %v3042, %v3335
      %v3351 = vmul.f32 %v3043, %v3335
      %v3352 = vmul.f32 %v3044, %v3335
      %v3353 = vmul.f32 %v3045, %v3335
      %v3354 = vmul.f32 %v3046, %v3335
      %v3355 = vmul.f32 %v3047, %v3335
      %v3356 = vmul.f32 %v3048, %v3335
      %v3357 = vmul.f32 %v3049, %v3335
      %v3358 = vmul.f32 %v3050, %v3335
      %v3359 = vmul.f32 %v3051, %v3335
      %v3360 = vmul.f32 %v3052, %v3335
      %v3361 = vmul.f32 %v3053, %v3335
      %v3362 = vmul.f32 %v3054, %v3335
      %v3363 = vmul.f32 %v3055, %v3335
      %v3364 = vmul.f32 %v3056, %v3335
      %v3365 = vmul.f32 %v3057, %v3335
      %v3366 = vmul.f32 %v3058, %v3335
      %v3367 = vmul.f32 %v3059, %v3335
      %v3368 = vadd.f32 %v3300, %v3336
      %v3369 = vadd.f32 %v3301, %v3337
      %v3370 = vadd.f32 %v3302, %v3338
      %v3371 = vadd.f32 %v3303, %v3339
      %v3372 = vadd.f32 %v3304, %v3340
      %v3373 = vadd.f32 %v3305, %v3341
      %v3374 = vadd.f32 %v3306, %v3342
      %v3375 = vadd.f32 %v3307, %v3343
      %v3376 = vadd.f32 %v3308, %v3344
      %v3377 = vadd.f32 %v3309, %v3345
      %v3378 = vadd.f32 %v3310, %v3346
      %v3379 = vadd.f32 %v3311, %v3347
      %v3380 = vadd.f32 %v3312, %v3348
      %v3381 = vadd.f32 %v3313, %v3349
      %v3382 = vadd.f32 %v3314, %v3350
      %v3383 = vadd.f32 %v3315, %v3351
      %v3384 = vadd.f32 %v3316, %v3352
      %v3385 = vadd.f32 %v3317, %v3353
      %v3386 = vadd.f32 %v3318, %v3354
      %v3387 = vadd.f32 %v3319, %v3355
      %v3388 = vadd.f32 %v3320, %v3356
      %v3389 = vadd.f32 %v3321, %v3357
      %v3390 = vadd.f32 %v3322, %v3358
      %v3391 = vadd.f32 %v3323, %v3359
      %v3392 = vadd.f32 %v3324, %v3360
      %v3393 = vadd.f32 %v3325, %v3361
      %v3394 = vadd.f32 %v3326, %v3362
      %v3395 = vadd.f32 %v3327, %v3363
      %v3396 = vadd.f32 %v3328, %v3364
      %v3397 = vadd.f32 %v3329, %v3365
      %v3398 = vadd.f32 %v3330, %v3366
      %v3399 = vadd.f32 %v3331, %v3367
      %3432 = vrot.lane.b32.xlu0 %v3368, 8
      %v3433 = vpop.permute.xlu0 %3432
      %3434 = vrot.lane.b32.xlu0 %v3369, 8
      %v3435 = vpop.permute.xlu0 %3434
      %3436 = vrot.lane.b32.xlu0 %v3370, 8
      %v3437 = vpop.permute.xlu0 %3436
      %3438 = vrot.lane.b32.xlu0 %v3371, 8
      %v3439 = vpop.permute.xlu0 %3438
      %3440 = vrot.lane.b32.xlu0 %v3372, 8
      %v3441 = vpop.permute.xlu0 %3440
      %3442 = vrot.lane.b32.xlu0 %v3373, 8
      %v3443 = vpop.permute.xlu0 %3442
      %3444 = vrot.lane.b32.xlu0 %v3374, 8
      %v3445 = vpop.permute.xlu0 %3444
      %3446 = vrot.lane.b32.xlu0 %v3375, 8
      %v3447 = vpop.permute.xlu0 %3446
      %3448 = vrot.lane.b32.xlu0 %v3376, 8
      %v3449 = vpop.permute.xlu0 %3448
      %3450 = vrot.lane.b32.xlu0 %v3377, 8
      %v3451 = vpop.permute.xlu0 %3450
      %3452 = vrot.lane.b32.xlu0 %v3378, 8
      %v3453 = vpop.permute.xlu0 %3452
      %3454 = vrot.lane.b32.xlu0 %v3379, 8
      %v3455 = vpop.permute.xlu0 %3454
      %3456 = vrot.lane.b32.xlu0 %v3380, 8
      %v3457 = vpop.permute.xlu0 %3456
      %3458 = vrot.lane.b32.xlu0 %v3381, 8
      %v3459 = vpop.permute.xlu0 %3458
      %3460 = vrot.lane.b32.xlu0 %v3382, 8
      %v3461 = vpop.permute.xlu0 %3460
      %3462 = vrot.lane.b32.xlu0 %v3383, 8
      %v3463 = vpop.permute.xlu0 %3462
      %3464 = vrot.lane.b32.xlu0 %v3384, 8
      %v3465 = vpop.permute.xlu0 %3464
      %3466 = vrot.lane.b32.xlu0 %v3385, 8
      %v3467 = vpop.permute.xlu0 %3466
      %3468 = vrot.lane.b32.xlu0 %v3386, 8
      %v3469 = vpop.permute.xlu0 %3468
      %3470 = vrot.lane.b32.xlu0 %v3387, 8
      %v3471 = vpop.permute.xlu0 %3470
      %3472 = vrot.lane.b32.xlu0 %v3388, 8
      %v3473 = vpop.permute.xlu0 %3472
      %3474 = vrot.lane.b32.xlu0 %v3389, 8
      %v3475 = vpop.permute.xlu0 %3474
      %3476 = vrot.lane.b32.xlu0 %v3390, 8
      %v3477 = vpop.permute.xlu0 %3476
      %3478 = vrot.lane.b32.xlu0 %v3391, 8
      %v3479 = vpop.permute.xlu0 %3478
      %3480 = vrot.lane.b32.xlu0 %v3392, 8
      %v3481 = vpop.permute.xlu0 %3480
      %3482 = vrot.lane.b32.xlu0 %v3393, 8
      %v3483 = vpop.permute.xlu0 %3482
      %3484 = vrot.lane.b32.xlu0 %v3394, 8
      %v3485 = vpop.permute.xlu0 %3484
      %3486 = vrot.lane.b32.xlu0 %v3395, 8
      %v3487 = vpop.permute.xlu0 %3486
      %3488 = vrot.lane.b32.xlu0 %v3396, 8
      %v3489 = vpop.permute.xlu0 %3488
      %3490 = vrot.lane.b32.xlu0 %v3397, 8
      %v3491 = vpop.permute.xlu0 %3490
      %3492 = vrot.lane.b32.xlu0 %v3398, 8
      %v3493 = vpop.permute.xlu0 %3492
      %3494 = vrot.lane.b32.xlu0 %v3399, 8
      %v3495 = vpop.permute.xlu0 %3494
      %v3528 = vmul.f32 %v1298, %v3433
      %v3529 = vmul.f32 %v1303, %v3435
      %v3530 = vmul.f32 %v1308, %v3437
      %v3531 = vmul.f32 %v1313, %v3439
      %v3532 = vmul.f32 %v1318, %v3441
      %v3533 = vmul.f32 %v1323, %v3443
      %v3534 = vmul.f32 %v1328, %v3445
      %v3535 = vmul.f32 %v1333, %v3447
      %v3536 = vmul.f32 %v1338, %v3449
      %v3537 = vmul.f32 %v1343, %v3451
      %v3538 = vmul.f32 %v1348, %v3453
      %v3539 = vmul.f32 %v1353, %v3455
      %v3540 = vmul.f32 %v1358, %v3457
      %v3541 = vmul.f32 %v1363, %v3459
      %v3542 = vmul.f32 %v1368, %v3461
      %v3543 = vmul.f32 %v1373, %v3463
      %v3544 = vmul.f32 %v1378, %v3465
      %v3545 = vmul.f32 %v1383, %v3467
      %v3546 = vmul.f32 %v1388, %v3469
      %v3547 = vmul.f32 %v1393, %v3471
      %v3548 = vmul.f32 %v1398, %v3473
      %v3549 = vmul.f32 %v1403, %v3475
      %v3550 = vmul.f32 %v1408, %v3477
      %v3551 = vmul.f32 %v1413, %v3479
      %v3552 = vmul.f32 %v1418, %v3481
      %v3553 = vmul.f32 %v1423, %v3483
      %v3554 = vmul.f32 %v1428, %v3485
      %v3555 = vmul.f32 %v1433, %v3487
      %v3556 = vmul.f32 %v1438, %v3489
      %v3557 = vmul.f32 %v1443, %v3491
      %v3558 = vmul.f32 %v1448, %v3493
      %v3559 = vmul.f32 %v1453, %v3495
      %v3560 = vmul.f32 %v3528, 0.5
      %v3561 = vmul.f32 %v3529, 0.5
      %v3562 = vmul.f32 %v3530, 0.5
      %v3563 = vmul.f32 %v3531, 0.5
      %v3564 = vmul.f32 %v3532, 0.5
      %v3565 = vmul.f32 %v3533, 0.5
      %v3566 = vmul.f32 %v3534, 0.5
      %v3567 = vmul.f32 %v3535, 0.5
      %v3568 = vmul.f32 %v3536, 0.5
      %v3569 = vmul.f32 %v3537, 0.5
      %v3570 = vmul.f32 %v3538, 0.5
      %v3571 = vmul.f32 %v3539, 0.5
      %v3572 = vmul.f32 %v3540, 0.5
      %v3573 = vmul.f32 %v3541, 0.5
      %v3574 = vmul.f32 %v3542, 0.5
      %v3575 = vmul.f32 %v3543, 0.5
      %v3576 = vmul.f32 %v3544, 0.5
      %v3577 = vmul.f32 %v3545, 0.5
      %v3578 = vmul.f32 %v3546, 0.5
      %v3579 = vmul.f32 %v3547, 0.5
      %v3580 = vmul.f32 %v3548, 0.5
      %v3581 = vmul.f32 %v3549, 0.5
      %v3582 = vmul.f32 %v3550, 0.5
      %v3583 = vmul.f32 %v3551, 0.5
      %v3584 = vmul.f32 %v3552, 0.5
      %v3585 = vmul.f32 %v3553, 0.5
      %v3586 = vmul.f32 %v3554, 0.5
      %v3587 = vmul.f32 %v3555, 0.5
      %v3588 = vmul.f32 %v3556, 0.5
      %v3589 = vmul.f32 %v3557, 0.5
      %v3590 = vmul.f32 %v3558, 0.5
      %v3591 = vmul.f32 %v3559, 0.5
      %v3592 = vmul.f32 %v3528, 0.70710677
      %v3593 = vmul.f32 %v3529, 0.70710677
      %v3594 = vmul.f32 %v3530, 0.70710677
      %v3595 = vmul.f32 %v3531, 0.70710677
      %v3596 = vmul.f32 %v3532, 0.70710677
      %v3597 = vmul.f32 %v3533, 0.70710677
      %v3598 = vmul.f32 %v3534, 0.70710677
      %v3599 = vmul.f32 %v3535, 0.70710677
      %v3600 = vmul.f32 %v3536, 0.70710677
      %v3601 = vmul.f32 %v3537, 0.70710677
      %v3602 = vmul.f32 %v3538, 0.70710677
      %v3603 = vmul.f32 %v3539, 0.70710677
      %v3604 = vmul.f32 %v3540, 0.70710677
      %v3605 = vmul.f32 %v3541, 0.70710677
      %v3606 = vmul.f32 %v3542, 0.70710677
      %v3607 = vmul.f32 %v3543, 0.70710677
      %v3608 = vmul.f32 %v3544, 0.70710677
      %v3609 = vmul.f32 %v3545, 0.70710677
      %v3610 = vmul.f32 %v3546, 0.70710677
      %v3611 = vmul.f32 %v3547, 0.70710677
      %v3612 = vmul.f32 %v3548, 0.70710677
      %v3613 = vmul.f32 %v3549, 0.70710677
      %v3614 = vmul.f32 %v3550, 0.70710677
      %v3615 = vmul.f32 %v3551, 0.70710677
      %v3616 = vmul.f32 %v3552, 0.70710677
      %v3617 = vmul.f32 %v3553, 0.70710677
      %v3618 = vmul.f32 %v3554, 0.70710677
      %v3619 = vmul.f32 %v3555, 0.70710677
      %v3620 = vmul.f32 %v3556, 0.70710677
      %v3621 = vmul.f32 %v3557, 0.70710677
      %v3622 = vmul.f32 %v3558, 0.70710677
      %v3623 = vmul.f32 %v3559, 0.70710677
      %v3624 = verf.f32.pop %v3592
      %v3625 = verf.f32.pop %v3593
      %v3626 = verf.f32.pop %v3594
      %v3627 = verf.f32.pop %v3595
      %v3628 = verf.f32.pop %v3596
      %v3629 = verf.f32.pop %v3597
      %v3630 = verf.f32.pop %v3598
      %v3631 = verf.f32.pop %v3599
      %v3632 = verf.f32.pop %v3600
      %v3633 = verf.f32.pop %v3601
      %v3634 = verf.f32.pop %v3602
      %v3635 = verf.f32.pop %v3603
      %v3636 = verf.f32.pop %v3604
      %v3637 = verf.f32.pop %v3605
      %v3638 = verf.f32.pop %v3606
      %v3639 = verf.f32.pop %v3607
      %v3640 = verf.f32.pop %v3608
      %v3641 = verf.f32.pop %v3609
      %v3642 = verf.f32.pop %v3610
      %v3643 = verf.f32.pop %v3611
      %v3644 = verf.f32.pop %v3612
      %v3645 = verf.f32.pop %v3613
      %v3646 = verf.f32.pop %v3614
      %v3647 = verf.f32.pop %v3615
      %v3648 = verf.f32.pop %v3616
      %v3649 = verf.f32.pop %v3617
      %v3650 = verf.f32.pop %v3618
      %v3651 = verf.f32.pop %v3619
      %v3652 = verf.f32.pop %v3620
      %v3653 = verf.f32.pop %v3621
      %v3654 = verf.f32.pop %v3622
      %v3655 = verf.f32.pop %v3623
      %v3656 = vadd.f32 %v3624, 1.0
      %v3657 = vadd.f32 %v3625, 1.0
      %v3658 = vadd.f32 %v3626, 1.0
      %v3659 = vadd.f32 %v3627, 1.0
      %v3660 = vadd.f32 %v3628, 1.0
      %v3661 = vadd.f32 %v3629, 1.0
      %v3662 = vadd.f32 %v3630, 1.0
      %v3663 = vadd.f32 %v3631, 1.0
      %v3664 = vadd.f32 %v3632, 1.0
      %v3665 = vadd.f32 %v3633, 1.0
      %v3666 = vadd.f32 %v3634, 1.0
      %v3667 = vadd.f32 %v3635, 1.0
      %v3668 = vadd.f32 %v3636, 1.0
      %v3669 = vadd.f32 %v3637, 1.0
      %v3670 = vadd.f32 %v3638, 1.0
      %v3671 = vadd.f32 %v3639, 1.0
      %v3672 = vadd.f32 %v3640, 1.0
      %v3673 = vadd.f32 %v3641, 1.0
      %v3674 = vadd.f32 %v3642, 1.0
      %v3675 = vadd.f32 %v3643, 1.0
      %v3676 = vadd.f32 %v3644, 1.0
      %v3677 = vadd.f32 %v3645, 1.0
      %v3678 = vadd.f32 %v3646, 1.0
      %v3679 = vadd.f32 %v3647, 1.0
      %v3680 = vadd.f32 %v3648, 1.0
      %v3681 = vadd.f32 %v3649, 1.0
      %v3682 = vadd.f32 %v3650, 1.0
      %v3683 = vadd.f32 %v3651, 1.0
      %v3684 = vadd.f32 %v3652, 1.0
      %v3685 = vadd.f32 %v3653, 1.0
      %v3686 = vadd.f32 %v3654, 1.0
      %v3687 = vadd.f32 %v3655, 1.0
      %v3688 = vmul.f32 %v3560, %v3656
      %v3689 = vmul.f32 %v3561, %v3657
      %v3690 = vmul.f32 %v3562, %v3658
      %v3691 = vmul.f32 %v3563, %v3659
      %v3692 = vmul.f32 %v3564, %v3660
      %v3693 = vmul.f32 %v3565, %v3661
      %v3694 = vmul.f32 %v3566, %v3662
      %v3695 = vmul.f32 %v3567, %v3663
      %v3696 = vmul.f32 %v3568, %v3664
      %v3697 = vmul.f32 %v3569, %v3665
      %v3698 = vmul.f32 %v3570, %v3666
      %v3699 = vmul.f32 %v3571, %v3667
      %v3700 = vmul.f32 %v3572, %v3668
      %v3701 = vmul.f32 %v3573, %v3669
      %v3702 = vmul.f32 %v3574, %v3670
      %v3703 = vmul.f32 %v3575, %v3671
      %v3704 = vmul.f32 %v3576, %v3672
      %v3705 = vmul.f32 %v3577, %v3673
      %v3706 = vmul.f32 %v3578, %v3674
      %v3707 = vmul.f32 %v3579, %v3675
      %v3708 = vmul.f32 %v3580, %v3676
      %v3709 = vmul.f32 %v3581, %v3677
      %v3710 = vmul.f32 %v3582, %v3678
      %v3711 = vmul.f32 %v3583, %v3679
      %v3712 = vmul.f32 %v3584, %v3680
      %v3713 = vmul.f32 %v3585, %v3681
      %v3714 = vmul.f32 %v3586, %v3682
      %v3715 = vmul.f32 %v3587, %v3683
      %v3716 = vmul.f32 %v3588, %v3684
      %v3717 = vmul.f32 %v3589, %v3685
      %v3718 = vmul.f32 %v3590, %v3686
      %v3719 = vmul.f32 %v3591, %v3687
      %v3720 = vld [vmem:[%s460] sm:$0xff]
      %v3721 = vld [vmem:[%s463] sm:$0x1]
      %v3723 = vlaneseq
      %v3724 = vshrl.u32 %v3723, 7
      %v3725 = vsub.s32 0, %v3724
      %v3726 = vrot.slane %v3721, %v3725
      %3760 = vrot.lane.b32.xlu0 %v3688, 120
      %v3761 = vpop.permute.xlu0 %3760
      %3762 = vrot.lane.b32.xlu0 %v3689, 120
      %v3763 = vpop.permute.xlu0 %3762
      %3764 = vrot.lane.b32.xlu0 %v3690, 120
      %v3765 = vpop.permute.xlu0 %3764
      %3766 = vrot.lane.b32.xlu0 %v3691, 120
      %v3767 = vpop.permute.xlu0 %3766
      %3768 = vrot.lane.b32.xlu0 %v3692, 120
      %v3769 = vpop.permute.xlu0 %3768
      %3770 = vrot.lane.b32.xlu0 %v3693, 120
      %v3771 = vpop.permute.xlu0 %3770
      %3772 = vrot.lane.b32.xlu0 %v3694, 120
      %v3773 = vpop.permute.xlu0 %3772
      %3774 = vrot.lane.b32.xlu0 %v3695, 120
      %v3775 = vpop.permute.xlu0 %3774
      %3776 = vrot.lane.b32.xlu0 %v3696, 120
      %v3777 = vpop.permute.xlu0 %3776
      %3778 = vrot.lane.b32.xlu0 %v3697, 120
      %v3779 = vpop.permute.xlu0 %3778
      %3780 = vrot.lane.b32.xlu0 %v3698, 120
      %v3781 = vpop.permute.xlu0 %3780
      %3782 = vrot.lane.b32.xlu0 %v3699, 120
      %v3783 = vpop.permute.xlu0 %3782
      %3784 = vrot.lane.b32.xlu0 %v3700, 120
      %v3785 = vpop.permute.xlu0 %3784
      %3786 = vrot.lane.b32.xlu0 %v3701, 120
      %v3787 = vpop.permute.xlu0 %3786
      %3788 = vrot.lane.b32.xlu0 %v3702, 120
      %v3789 = vpop.permute.xlu0 %3788
      %3790 = vrot.lane.b32.xlu0 %v3703, 120
      %v3791 = vpop.permute.xlu0 %3790
      %3792 = vrot.lane.b32.xlu0 %v3704, 120
      %v3793 = vpop.permute.xlu0 %3792
      %3794 = vrot.lane.b32.xlu0 %v3705, 120
      %v3795 = vpop.permute.xlu0 %3794
      %3796 = vrot.lane.b32.xlu0 %v3706, 120
      %v3797 = vpop.permute.xlu0 %3796
      %3798 = vrot.lane.b32.xlu0 %v3707, 120
      %v3799 = vpop.permute.xlu0 %3798
      %3800 = vrot.lane.b32.xlu0 %v3708, 120
      %v3801 = vpop.permute.xlu0 %3800
      %3802 = vrot.lane.b32.xlu0 %v3709, 120
      %v3803 = vpop.permute.xlu0 %3802
      %3804 = vrot.lane.b32.xlu0 %v3710, 120
      %v3805 = vpop.permute.xlu0 %3804
      %3806 = vrot.lane.b32.xlu0 %v3711, 120
      %v3807 = vpop.permute.xlu0 %3806
      %3808 = vrot.lane.b32.xlu0 %v3712, 120
      %v3809 = vpop.permute.xlu0 %3808
      %3810 = vrot.lane.b32.xlu0 %v3713, 120
      %v3811 = vpop.permute.xlu0 %3810
      %3812 = vrot.lane.b32.xlu0 %v3714, 120
      %v3813 = vpop.permute.xlu0 %3812
      %3814 = vrot.lane.b32.xlu0 %v3715, 120
      %v3815 = vpop.permute.xlu0 %3814
      %3816 = vrot.lane.b32.xlu0 %v3716, 120
      %v3817 = vpop.permute.xlu0 %3816
      %3818 = vrot.lane.b32.xlu0 %v3717, 120
      %v3819 = vpop.permute.xlu0 %3818
      %3820 = vrot.lane.b32.xlu0 %v3718, 120
      %v3821 = vpop.permute.xlu0 %3820
      %3822 = vrot.lane.b32.xlu0 %v3719, 120
      %v3823 = vpop.permute.xlu0 %3822
      %v3824 = vsel %vm631, %v3761, 0
      %v3826 = vsel %vm631, %v3763, 0
      %v3828 = vsel %vm631, %v3765, 0
      %v3830 = vsel %vm631, %v3767, 0
      %v3832 = vsel %vm631, %v3769, 0
      %v3834 = vsel %vm631, %v3771, 0
      %v3836 = vsel %vm631, %v3773, 0
      %v3838 = vsel %vm631, %v3775, 0
      %v3840 = vsel %vm631, %v3777, 0
      %v3842 = vsel %vm631, %v3779, 0
      %v3844 = vsel %vm631, %v3781, 0
      %v3846 = vsel %vm631, %v3783, 0
      %v3848 = vsel %vm631, %v3785, 0
      %v3850 = vsel %vm631, %v3787, 0
      %v3852 = vsel %vm631, %v3789, 0
      %v3854 = vsel %vm631, %v3791, 0
      %v3856 = vsel %vm631, %v3793, 0
      %v3858 = vsel %vm631, %v3795, 0
      %v3860 = vsel %vm631, %v3797, 0
      %v3862 = vsel %vm631, %v3799, 0
      %v3864 = vsel %vm631, %v3801, 0
      %v3866 = vsel %vm631, %v3803, 0
      %v3868 = vsel %vm631, %v3805, 0
      %v3870 = vsel %vm631, %v3807, 0
      %v3872 = vsel %vm631, %v3809, 0
      %v3874 = vsel %vm631, %v3811, 0
      %v3876 = vsel %vm631, %v3813, 0
      %v3878 = vsel %vm631, %v3815, 0
      %v3880 = vsel %vm631, %v3817, 0
      %v3882 = vsel %vm631, %v3819, 0
      %v3884 = vsel %vm631, %v3821, 0
      %v3886 = vsel %vm631, %v3823, 0
      %3888 = vmatprep.subr.mxu0 0.0
      %3889 = vmatpush1.msra.mxu0 %v3720
      %3890 = vmatprep.subr.mxu0 0.0
      %3891 = vmatpush1.msra.mxu0 0.0
      %3892 = vmatprep.subr.mxu0 0.0
      %3893 = vmatpush1.msra.mxu0 0.0
      %3894 = vmatprep.subr.mxu0 0.0
      %3895 = vmatpush1.msra.mxu0 0.0
      %3896 = vmatprep.subr.mxu0 0.0
      %3897 = vmatpush1.msra.mxu0 0.0
      %3898 = vmatprep.subr.mxu0 0.0
      %3899 = vmatpush1.msra.mxu0 0.0
      %3900 = vmatprep.subr.mxu0 0.0
      %3901 = vmatpush1.msra.mxu0 0.0
      %3902 = vmatprep.subr.mxu0 0.0
      %3903 = vmatpush1.msra.mxu0 0.0
      %3904 = vmatprep.subr.mxu0 0.0
      %3905 = vmatpush1.msra.mxu0 0.0
      %3906 = vmatprep.subr.mxu0 0.0
      %3907 = vmatpush1.msra.mxu0 0.0
      %3908 = vmatprep.subr.mxu0 0.0
      %3909 = vmatpush1.msra.mxu0 0.0
      %3910 = vmatprep.subr.mxu0 0.0
      %3911 = vmatpush1.msra.mxu0 0.0
      %3912 = vmatprep.subr.mxu0 0.0
      %3913 = vmatpush1.msra.mxu0 0.0
      %3914 = vmatprep.subr.mxu0 0.0
      %3915 = vmatpush1.msra.mxu0 0.0
      %3916 = vmatprep.subr.mxu0 0.0
      %3917 = vmatpush1.msra.mxu0 0.0
      %3918 = vmatprep.subr.mxu0 0.0
      %3919 = vmatpush1.msra.mxu0 0.0
      %3920 = vmatprep.subr.mxu0 0.0
      %3921 = vmatpush1.msra.mxu0 0.0
      %3922 = vmatprep.subr.mxu0 0.0
      %3923 = vmatpush1.msra.mxu0 0.0
      %3924 = vmatprep.subr.mxu0 0.0
      %3925 = vmatpush1.msra.mxu0 0.0
      %3926 = vmatprep.subr.mxu0 0.0
      %3927 = vmatpush1.msra.mxu0 0.0
      %3928 = vmatprep.subr.mxu0 0.0
      %3929 = vmatpush1.msra.mxu0 0.0
      %3930 = vmatprep.subr.mxu0 0.0
      %3931 = vmatpush1.msra.mxu0 0.0
      %3932 = vmatprep.subr.mxu0 0.0
      %3933 = vmatpush1.msra.mxu0 0.0
      %3934 = vmatprep.subr.mxu0 0.0
      %3935 = vmatpush1.msra.mxu0 0.0
      %3936 = vmatprep.subr.mxu0 0.0
      %3937 = vmatpush1.msra.mxu0 0.0
      %3938 = vmatprep.subr.mxu0 0.0
      %3939 = vmatpush1.msra.mxu0 0.0
      %3940 = vmatprep.subr.mxu0 0.0
      %3941 = vmatpush1.msra.mxu0 0.0
      %3942 = vmatprep.subr.mxu0 0.0
      %3943 = vmatpush1.msra.mxu0 0.0
      %3944 = vmatprep.subr.mxu0 0.0
      %3945 = vmatpush1.msra.mxu0 0.0
      %3946 = vmatprep.subr.mxu0 0.0
      %3947 = vmatpush1.msra.mxu0 0.0
      %3948 = vmatprep.subr.mxu0 0.0
      %3949 = vmatpush1.msra.mxu0 0.0
      %3950 = vmatprep.subr.mxu0 0.0
      %3951 = vmatpush1.msra.mxu0 0.0
      %3952 = vmatprep.mubr.f32.mxu0 0.0
      %3953 = vmatmul.mubr.f32.gmra.mrb[0].mxu0 %v3824
      %v3954 = vpop.f32.mrb[0].mxu0
      %v3955 = vadd.f32 %v3726, %v3954
      %v3956 = vpop.f32.mrb[0].mxu0
      %3957 = vmatprep.mubr.f32.mxu0 0.0
      %3958 = vmatmul.mubr.f32.gmra.mrb[0].mxu0 %v3826
      %v3959 = vpop.f32.mrb[0].mxu0
      %v3960 = vadd.f32 %v3726, %v3959
      %v3961 = vpop.f32.mrb[0].mxu0
      %3962 = vmatprep.mubr.f32.mxu0 0.0
      %3963 = vmatmul.mubr.f32.gmra.mrb[0].mxu0 %v3828
      %v3964 = vpop.f32.mrb[0].mxu0
      %v3965 = vadd.f32 %v3726, %v3964
      %v3966 = vpop.f32.mrb[0].mxu0
      %3967 = vmatprep.mubr.f32.mxu0 0.0
      %3968 = vmatmul.mubr.f32.gmra.mrb[0].mxu0 %v3830
      %v3969 = vpop.f32.mrb[0].mxu0
      %v3970 = vadd.f32 %v3726, %v3969
      %v3971 = vpop.f32.mrb[0].mxu0
      %3972 = vmatprep.mubr.f32.mxu0 0.0
      %3973 = vmatmul.mubr.f32.gmra.mrb[0].mxu0 %v3832
      %v3974 = vpop.f32.mrb[0].mxu0
      %v3975 = vadd.f32 %v3726, %v3974
      %v3976 = vpop.f32.mrb[0].mxu0
      %3977 = vmatprep.mubr.f32.mxu0 0.0
      %3978 = vmatmul.mubr.f32.gmra.mrb[0].mxu0 %v3834
      %v3979 = vpop.f32.mrb[0].mxu0
      %v3980 = vadd.f32 %v3726, %v3979
      %v3981 = vpop.f32.mrb[0].mxu0
      %3982 = vmatprep.mubr.f32.mxu0 0.0
      %3983 = vmatmul.mubr.f32.gmra.mrb[0].mxu0 %v3836
      %v3984 = vpop.f32.mrb[0].mxu0
      %v3985 = vadd.f32 %v3726, %v3984
      %v3986 = vpop.f32.mrb[0].mxu0
      %3987 = vmatprep.mubr.f32.mxu0 0.0
      %3988 = vmatmul.mubr.f32.gmra.mrb[0].mxu0 %v3838
      %v3989 = vpop.f32.mrb[0].mxu0
      %v3990 = vadd.f32 %v3726, %v3989
      %v3991 = vpop.f32.mrb[0].mxu0
      %3992 = vmatprep.mubr.f32.mxu0 0.0
      %3993 = vmatmul.mubr.f32.gmra.mrb[0].mxu0 %v3840
      %v3994 = vpop.f32.mrb[0].mxu0
      %v3995 = vadd.f32 %v3726, %v3994
      %v3996 = vpop.f32.mrb[0].mxu0
      %3997 = vmatprep.mubr.f32.mxu0 0.0
      %3998 = vmatmul.mubr.f32.gmra.mrb[0].mxu0 %v3842
      %v3999 = vpop.f32.mrb[0].mxu0
      %v4000 = vadd.f32 %v3726, %v3999
      %v4001 = vpop.f32.mrb[0].mxu0
      %4002 = vmatprep.mubr.f32.mxu0 0.0
      %4003 = vmatmul.mubr.f32.gmra.mrb[0].mxu0 %v3844
      %v4004 = vpop.f32.mrb[0].mxu0
      %v4005 = vadd.f32 %v3726, %v4004
      %v4006 = vpop.f32.mrb[0].mxu0
      %4007 = vmatprep.mubr.f32.mxu0 0.0
      %4008 = vmatmul.mubr.f32.gmra.mrb[0].mxu0 %v3846
      %v4009 = vpop.f32.mrb[0].mxu0
      %v4010 = vadd.f32 %v3726, %v4009
      %v4011 = vpop.f32.mrb[0].mxu0
      %4012 = vmatprep.mubr.f32.mxu0 0.0
      %4013 = vmatmul.mubr.f32.gmra.mrb[0].mxu0 %v3848
      %v4014 = vpop.f32.mrb[0].mxu0
      %v4015 = vadd.f32 %v3726, %v4014
      %v4016 = vpop.f32.mrb[0].mxu0
      %4017 = vmatprep.mubr.f32.mxu0 0.0
      %4018 = vmatmul.mubr.f32.gmra.mrb[0].mxu0 %v3850
      %v4019 = vpop.f32.mrb[0].mxu0
      %v4020 = vadd.f32 %v3726, %v4019
      %v4021 = vpop.f32.mrb[0].mxu0
      %4022 = vmatprep.mubr.f32.mxu0 0.0
      %4023 = vmatmul.mubr.f32.gmra.mrb[0].mxu0 %v3852
      %v4024 = vpop.f32.mrb[0].mxu0
      %v4025 = vadd.f32 %v3726, %v4024
      %v4026 = vpop.f32.mrb[0].mxu0
      %4027 = vmatprep.mubr.f32.mxu0 0.0
      %4028 = vmatmul.mubr.f32.gmra.mrb[0].mxu0 %v3854
      %v4029 = vpop.f32.mrb[0].mxu0
      %v4030 = vadd.f32 %v3726, %v4029
      %v4031 = vpop.f32.mrb[0].mxu0
      %4032 = vmatprep.mubr.f32.mxu0 0.0
      %4033 = vmatmul.mubr.f32.gmra.mrb[0].mxu0 %v3856
      %v4034 = vpop.f32.mrb[0].mxu0
      %v4035 = vadd.f32 %v3726, %v4034
      %v4036 = vpop.f32.mrb[0].mxu0
      %4037 = vmatprep.mubr.f32.mxu0 0.0
      %4038 = vmatmul.mubr.f32.gmra.mrb[0].mxu0 %v3858
      %v4039 = vpop.f32.mrb[0].mxu0
      %v4040 = vadd.f32 %v3726, %v4039
      %v4041 = vpop.f32.mrb[0].mxu0
      %4042 = vmatprep.mubr.f32.mxu0 0.0
      %4043 = vmatmul.mubr.f32.gmra.mrb[0].mxu0 %v3860
      %v4044 = vpop.f32.mrb[0].mxu0
      %v4045 = vadd.f32 %v3726, %v4044
      %v4046 = vpop.f32.mrb[0].mxu0
      %4047 = vmatprep.mubr.f32.mxu0 0.0
      %4048 = vmatmul.mubr.f32.gmra.mrb[0].mxu0 %v3862
      %v4049 = vpop.f32.mrb[0].mxu0
      %v4050 = vadd.f32 %v3726, %v4049
      %v4051 = vpop.f32.mrb[0].mxu0
      %4052 = vmatprep.mubr.f32.mxu0 0.0
      %4053 = vmatmul.mubr.f32.gmra.mrb[0].mxu0 %v3864
      %v4054 = vpop.f32.mrb[0].mxu0
      %v4055 = vadd.f32 %v3726, %v4054
      %v4056 = vpop.f32.mrb[0].mxu0
      %4057 = vmatprep.mubr.f32.mxu0 0.0
      %4058 = vmatmul.mubr.f32.gmra.mrb[0].mxu0 %v3866
      %v4059 = vpop.f32.mrb[0].mxu0
      %v4060 = vadd.f32 %v3726, %v4059
      %v4061 = vpop.f32.mrb[0].mxu0
      %4062 = vmatprep.mubr.f32.mxu0 0.0
      %4063 = vmatmul.mubr.f32.gmra.mrb[0].mxu0 %v3868
      %v4064 = vpop.f32.mrb[0].mxu0
      %v4065 = vadd.f32 %v3726, %v4064
      %v4066 = vpop.f32.mrb[0].mxu0
      %4067 = vmatprep.mubr.f32.mxu0 0.0
      %4068 = vmatmul.mubr.f32.gmra.mrb[0].mxu0 %v3870
      %v4069 = vpop.f32.mrb[0].mxu0
      %v4070 = vadd.f32 %v3726, %v4069
      %v4071 = vpop.f32.mrb[0].mxu0
      %4072 = vmatprep.mubr.f32.mxu0 0.0
      %4073 = vmatmul.mubr.f32.gmra.mrb[0].mxu0 %v3872
      %v4074 = vpop.f32.mrb[0].mxu0
      %v4075 = vadd.f32 %v3726, %v4074
      %v4076 = vpop.f32.mrb[0].mxu0
      %4077 = vmatprep.mubr.f32.mxu0 0.0
      %4078 = vmatmul.mubr.f32.gmra.mrb[0].mxu0 %v3874
      %v4079 = vpop.f32.mrb[0].mxu0
      %v4080 = vadd.f32 %v3726, %v4079
      %v4081 = vpop.f32.mrb[0].mxu0
      %4082 = vmatprep.mubr.f32.mxu0 0.0
      %4083 = vmatmul.mubr.f32.gmra.mrb[0].mxu0 %v3876
      %v4084 = vpop.f32.mrb[0].mxu0
      %v4085 = vadd.f32 %v3726, %v4084
      %v4086 = vpop.f32.mrb[0].mxu0
      %4087 = vmatprep.mubr.f32.mxu0 0.0
      %4088 = vmatmul.mubr.f32.gmra.mrb[0].mxu0 %v3878
      %v4089 = vpop.f32.mrb[0].mxu0
      %v4090 = vadd.f32 %v3726, %v4089
      %v4091 = vpop.f32.mrb[0].mxu0
      %4092 = vmatprep.mubr.f32.mxu0 0.0
      %4093 = vmatmul.mubr.f32.gmra.mrb[0].mxu0 %v3880
      %v4094 = vpop.f32.mrb[0].mxu0
      %v4095 = vadd.f32 %v3726, %v4094
      %v4096 = vpop.f32.mrb[0].mxu0
      %4097 = vmatprep.mubr.f32.mxu0 0.0
      %4098 = vmatmul.mubr.f32.gmra.mrb[0].mxu0 %v3882
      %v4099 = vpop.f32.mrb[0].mxu0
      %v4100 = vadd.f32 %v3726, %v4099
      %v4101 = vpop.f32.mrb[0].mxu0
      %4102 = vmatprep.mubr.f32.mxu0 0.0
      %4103 = vmatmul.mubr.f32.gmra.mrb[0].mxu0 %v3884
      %v4104 = vpop.f32.mrb[0].mxu0
      %v4105 = vadd.f32 %v3726, %v4104
      %v4106 = vpop.f32.mrb[0].mxu0
      %4107 = vmatprep.mubr.f32.mxu0 0.0
      %4108 = vmatmul.mubr.f32.gmra.mrb[0].mxu0 %v3886
      %v4109 = vpop.f32.mrb[0].mxu0
      %v4110 = vadd.f32 %v3726, %v4109
      %v4111 = vpop.f32.mrb[0].mxu0
      %4112 = vdwg.mxu0
      %v4113 = vadd.f32 %v3955, %v599
      %v4114 = vadd.f32 %v3960, %v600
      %v4115 = vadd.f32 %v3965, %v601
      %v4116 = vadd.f32 %v3970, %v602
      %v4117 = vadd.f32 %v3975, %v603
      %v4118 = vadd.f32 %v3980, %v604
      %v4119 = vadd.f32 %v3985, %v605
      %v4120 = vadd.f32 %v3990, %v606
      %v4121 = vadd.f32 %v3995, %v607
      %v4122 = vadd.f32 %v4000, %v608
      %v4123 = vadd.f32 %v4005, %v609
      %v4124 = vadd.f32 %v4010, %v610
      %v4125 = vadd.f32 %v4015, %v611
      %v4126 = vadd.f32 %v4020, %v612
      %v4127 = vadd.f32 %v4025, %v613
      %v4128 = vadd.f32 %v4030, %v614
      %v4129 = vadd.f32 %v4035, %v615
      %v4130 = vadd.f32 %v4040, %v616
      %v4131 = vadd.f32 %v4045, %v617
      %v4132 = vadd.f32 %v4050, %v618
      %v4133 = vadd.f32 %v4055, %v619
      %v4134 = vadd.f32 %v4060, %v620
      %v4135 = vadd.f32 %v4065, %v621
      %v4136 = vadd.f32 %v4070, %v622
      %v4137 = vadd.f32 %v4075, %v623
      %v4138 = vadd.f32 %v4080, %v624
      %v4139 = vadd.f32 %v4085, %v625
      %v4140 = vadd.f32 %v4090, %v626
      %v4141 = vadd.f32 %v4095, %v627
      %v4142 = vadd.f32 %v4100, %v628
      %v4143 = vadd.f32 %v4105, %v629
      %v4144 = vadd.f32 %v4110, %v630
      %4145 = vst.msk [vmem:[#allocation2] sm:$0xff] %vm631, %v4113
      %4146 = vst.msk [vmem:[#allocation2 + $0x8] sm:$0xff] %vm631, %v4114
      %4147 = vst.msk [vmem:[#allocation2 + $0x10] sm:$0xff] %vm631, %v4115
      %4148 = vst.msk [vmem:[#allocation2 + $0x18] sm:$0xff] %vm631, %v4116
      %4149 = vst.msk [vmem:[#allocation2 + $0x20] sm:$0xff] %vm631, %v4117
      %4150 = vst.msk [vmem:[#allocation2 + $0x28] sm:$0xff] %vm631, %v4118
      %4151 = vst.msk [vmem:[#allocation2 + $0x30] sm:$0xff] %vm631, %v4119
      %4152 = vst.msk [vmem:[#allocation2 + $0x38] sm:$0xff] %vm631, %v4120
      %4153 = vst.msk [vmem:[#allocation2 + $0x40] sm:$0xff] %vm631, %v4121
      %4154 = vst.msk [vmem:[#allocation2 + $0x48] sm:$0xff] %vm631, %v4122
      %4155 = vst.msk [vmem:[#allocation2 + $0x50] sm:$0xff] %vm631, %v4123
      %4156 = vst.msk [vmem:[#allocation2 + $0x58] sm:$0xff] %vm631, %v4124
      %4157 = vst.msk [vmem:[#allocation2 + $0x60] sm:$0xff] %vm631, %v4125
      %4158 = vst.msk [vmem:[#allocation2 + $0x68] sm:$0xff] %vm631, %v4126
      %4159 = vst.msk [vmem:[#allocation2 + $0x70] sm:$0xff] %vm631, %v4127
      %4160 = vst.msk [vmem:[#allocation2 + $0x78] sm:$0xff] %vm631, %v4128
      %4161 = vst.msk [vmem:[#allocation2 + $0x80] sm:$0xff] %vm631, %v4129
      %4162 = vst.msk [vmem:[#allocation2 + $0x88] sm:$0xff] %vm631, %v4130
      %4163 = vst.msk [vmem:[#allocation2 + $0x90] sm:$0xff] %vm631, %v4131
      %4164 = vst.msk [vmem:[#allocation2 + $0x98] sm:$0xff] %vm631, %v4132
      %4165 = vst.msk [vmem:[#allocation2 + $0xa0] sm:$0xff] %vm631, %v4133
      %4166 = vst.msk [vmem:[#allocation2 + $0xa8] sm:$0xff] %vm631, %v4134
      %4167 = vst.msk [vmem:[#allocation2 + $0xb0] sm:$0xff] %vm631, %v4135
      %4168 = vst.msk [vmem:[#allocation2 + $0xb8] sm:$0xff] %vm631, %v4136
      %4169 = vst.msk [vmem:[#allocation2 + $0xc0] sm:$0xff] %vm631, %v4137
      %4170 = vst.msk [vmem:[#allocation2 + $0xc8] sm:$0xff] %vm631, %v4138
      %4171 = vst.msk [vmem:[#allocation2 + $0xd0] sm:$0xff] %vm631, %v4139
      %4172 = vst.msk [vmem:[#allocation2 + $0xd8] sm:$0xff] %vm631, %v4140
      %4173 = vst.msk [vmem:[#allocation2 + $0xe0] sm:$0xff] %vm631, %v4141
      %4174 = vst.msk [vmem:[#allocation2 + $0xe8] sm:$0xff] %vm631, %v4142
      %4175 = vst.msk [vmem:[#allocation2 + $0xf0] sm:$0xff] %vm631, %v4143
      %4176 = vst.msk [vmem:[#allocation2 + $0xf8] sm:$0xff] %vm631, %v4144
      %p4177 = scmp.eq.s32.totalorder %s25, 1
      // Predicated region
      $region61: #{tpu_custom_call.1} parent=55 // pred_check
        %p4178 = pneg %p4177
      $region62: #{tpu_custom_call.1} parent=55 // pred_check_branch
        %4180 = sbr.rel (%p4178) target = $region64
      $region63: #{tpu_custom_call.1} parent=55 // pred_region
        %4181 = vst.msk [vmem:[%s468] sm:$0xff] %vm631, %v4113
        %4182 = vst.msk [vmem:[%s468 + $0x8] sm:$0xff] %vm631, %v4114
        %4183 = vst.msk [vmem:[%s468 + $0x10] sm:$0xff] %vm631, %v4115
        %4184 = vst.msk [vmem:[%s468 + $0x18] sm:$0xff] %vm631, %v4116
        %4185 = vst.msk [vmem:[%s468 + $0x20] sm:$0xff] %vm631, %v4117
        %4186 = vst.msk [vmem:[%s468 + $0x28] sm:$0xff] %vm631, %v4118
        %4187 = vst.msk [vmem:[%s468 + $0x30] sm:$0xff] %vm631, %v4119
        %4188 = vst.msk [vmem:[%s468 + $0x38] sm:$0xff] %vm631, %v4120
        %4189 = vst.msk [vmem:[%s468 + $0x40] sm:$0xff] %vm631, %v4121
        %4190 = vst.msk [vmem:[%s468 + $0x48] sm:$0xff] %vm631, %v4122
        %4191 = vst.msk [vmem:[%s468 + $0x50] sm:$0xff] %vm631, %v4123
        %4192 = vst.msk [vmem:[%s468 + $0x58] sm:$0xff] %vm631, %v4124
        %4193 = vst.msk [vmem:[%s468 + $0x60] sm:$0xff] %vm631, %v4125
        %4194 = vst.msk [vmem:[%s468 + $0x68] sm:$0xff] %vm631, %v4126
        %4195 = vst.msk [vmem:[%s468 + $0x70] sm:$0xff] %vm631, %v4127
        %4196 = vst.msk [vmem:[%s468 + $0x78] sm:$0xff] %vm631, %v4128
        %4197 = vst.msk [vmem:[%s468 + $0x80] sm:$0xff] %vm631, %v4129
        %4198 = vst.msk [vmem:[%s468 + $0x88] sm:$0xff] %vm631, %v4130
        %4199 = vst.msk [vmem:[%s468 + $0x90] sm:$0xff] %vm631, %v4131
        %4200 = vst.msk [vmem:[%s468 + $0x98] sm:$0xff] %vm631, %v4132
        %4201 = vst.msk [vmem:[%s468 + $0xa0] sm:$0xff] %vm631, %v4133
        %4202 = vst.msk [vmem:[%s468 + $0xa8] sm:$0xff] %vm631, %v4134
        %4203 = vst.msk [vmem:[%s468 + $0xb0] sm:$0xff] %vm631, %v4135
        %4204 = vst.msk [vmem:[%s468 + $0xb8] sm:$0xff] %vm631, %v4136
        %4205 = vst.msk [vmem:[%s468 + $0xc0] sm:$0xff] %vm631, %v4137
        %4206 = vst.msk [vmem:[%s468 + $0xc8] sm:$0xff] %vm631, %v4138
        %4207 = vst.msk [vmem:[%s468 + $0xd0] sm:$0xff] %vm631, %v4139
        %4208 = vst.msk [vmem:[%s468 + $0xd8] sm:$0xff] %vm631, %v4140
        %4209 = vst.msk [vmem:[%s468 + $0xe0] sm:$0xff] %vm631, %v4141
        %4210 = vst.msk [vmem:[%s468 + $0xe8] sm:$0xff] %vm631, %v4142
        %4211 = vst.msk [vmem:[%s468 + $0xf0] sm:$0xff] %vm631, %v4143
        %4212 = vst.msk [vmem:[%s468 + $0xf8] sm:$0xff] %vm631, %v4144
      $region64: #{tpu_custom_call.1} parent=55 // pred_fallthru
        _
      %p4213 = scmp.lt.s32.totalorder %s24, 1
      %s4214 = scalar_select %p4213, %s24, 1
      %s4215 = smul.addr %s4214, 32
      %s4216 = smul.addr %s4215, 8
      %s4217 = scalar_lea.vmem %s9, %s4216
      // Predicated region
      $region65: #{tpu_custom_call.1} parent=55 // pred_check
        %p4218 = pneg %p284
      $region66: #{tpu_custom_call.1} parent=55 // pred_check_branch
        %4220 = sbr.rel (%p4218) target = $region68
      $region67: #{tpu_custom_call.1} parent=55 // pred_region
        _
      $region68: #{tpu_custom_call.1} parent=55 // pred_fallthru
        _
    $region56: #{tpu_custom_call.1} parent=5 // pred_fallthru
      _
    %p4221 = scmp.le.s32.totalorder 2, %s15
    // Predicated region
    $region69: #{tpu_custom_call.1} parent=5 // pred_check
      %p4222 = pneg %p4221
    $region70: #{tpu_custom_call.1} parent=5 // pred_check_branch
      %4224 = sbr.rel (%p4222) target = $region72
    $region71: #{tpu_custom_call.1} parent=5 // pred_region
      %s4225 = ssub.s32 %s15, 2
      // Predicated region
      $region73: #{tpu_custom_call.1} parent=71 // pred_check
        %p4226 = pneg %p290
      $region74: #{tpu_custom_call.1} parent=71 // pred_check_branch
        %4228 = sbr.rel (%p4226) target = $region76
      $region75: #{tpu_custom_call.1} parent=71 // pred_region
        %p4229 = scmp.lt.s32.totalorder %s26, 1
        %s4230 = scalar_select %p4229, %s26, 1
        %s4231 = smul.addr %s4230, 32
        %s4232 = smul.addr %s4231, 8
        %s4233 = scalar_lea.vmem %s9, %s4232
      $region76: #{tpu_custom_call.1} parent=71 // pred_fallthru
        _
    $region72: #{tpu_custom_call.1} parent=5 // pred_fallthru
      _
  $region6: #{tpu_custom_call.1} parent=0 // loop_footer
    %s19 = sadd.s32 1, %s15
  $region7: #{tpu_custom_call.1} parent=0 // loop_footer_branch
    %14 = sbr.rel target = $region3
  $region8: #{tpu_custom_call.1} parent=0 // loop_exit
    _

</llo_original>
